<compile_context>
chip_gen: v7x
topology: tpu7x:2x2x1
jax: 0.10.0
libtpu: 0.0.40
codegen_flags: <defaults>
</compile_context>

<pallas_src>
import jax
import jax.numpy as jnp
import numpy as np
from jax import lax
from jax.experimental import pallas as pl
from jax.experimental.pallas import tpu as pltpu

SOS_TOKEN = 0
MAX_LENGTH = 8


def _decoder_kernel(emb_ref, wi_ref, wh_ref, bih_ref, bhh_ref,
                    wout_ref, bout_ref, h0_ref,
                    out_ref, hid_ref):
    """Full greedy decode in one invocation.

    emb_ref: (V, E)    wi_ref: (E, 3H)   wh_ref: (H, 3H)
    bih_ref/bhh_ref: (1, 3H)             wout_ref: (H, V)   bout_ref: (1, V)
    h0_ref: (B, H)
    out_ref: (MAX_LENGTH, B, V)          hid_ref: (B, H)
    """
    # ---- load weights / biases once (hoisted above the unrolled loop) ----
    emb = emb_ref[...]                                            # (V, E)
    wi = wi_ref[...]                                              # (E, 3H)
    wh = wh_ref[...]                                              # (H, 3H)
    bih = bih_ref[...]                                            # (1, 3H)
    bhh = bhh_ref[...]                                            # (1, 3H)
    wout = wout_ref[...]                                          # (H, V)
    bout = bout_ref[...]                                          # (1, V)

    h = h0_ref[...]                                               # (B, H)
    B, H = h.shape
    V = out_ref.shape[2]

    # Per-token input-gate activations precomputed once:
    #   gi for token t == row t of  relu(emb) @ Wi + b_ih          (V, 3H)
    emb_gi = jnp.dot(jnp.maximum(emb, 0.0), wi,
                     preferred_element_type=jnp.float32) + bih

    lane_ids = lax.broadcasted_iota(jnp.int32, (B, V), 1)         # (B, V), hoisted
    tok = jnp.full((B, 1), SOS_TOKEN, jnp.int32)                  # current token ids

    # ---- statically unrolled autoregressive loop (MAX_LENGTH = 8 tiny steps) ----
    for step in range(MAX_LENGTH):
        # gather of precomputed gi rows via one-hot matmul (MXU-friendly)
        onehot = (lane_ids == tok).astype(jnp.float32)            # (B, V)
        gi = jnp.dot(onehot, emb_gi,
                     preferred_element_type=jnp.float32)          # (B, 3H)

        # fused GRU cell (PyTorch gate packing: r, z, n)
        gh = jnp.dot(h, wh, preferred_element_type=jnp.float32) + bhh   # (B, 3H)
        r = jax.nn.sigmoid(gi[:, :H] + gh[:, :H])
        z = jax.nn.sigmoid(gi[:, H:2 * H] + gh[:, H:2 * H])
        n = jnp.tanh(gi[:, 2 * H:] + r * gh[:, 2 * H:])
        h = (1.0 - z) * n + z * h                                 # (B, H)

        # output projection + per-step log_softmax (== log_softmax of concat)
        logits = jnp.dot(h, wout, preferred_element_type=jnp.float32) + bout  # (B, V)
        m = jnp.max(logits, axis=-1, keepdims=True)
        lse = m + jnp.log(jnp.sum(jnp.exp(logits - m), axis=-1, keepdims=True))
        out_ref[step] = logits - lse                              # static index write

        # greedy next token: first index attaining the max (== torch topk(1))
        tok = jnp.min(jnp.where(logits == m, lane_ids, V),
                      axis=-1, keepdims=True).astype(jnp.int32)   # (B, 1)

    # final hidden state written exactly once
    hid_ref[...] = h


def decoder_rnn_forward(params, encoder_outputs, encoder_hidden):
    """Mirrors DecoderRNN.forward(encoder_outputs, encoder_hidden, target_tensor=None)."""
    # TODO(synk): teacher-forcing path (target_tensor is not None) not implemented;
    # this kernel covers the greedy-decode branch only.
    B = encoder_outputs.shape[0]
    V, E = params["emb"].shape
    H = encoder_hidden.shape[-1]
    h0 = encoder_hidden[0].astype(jnp.float32)                    # (B, H)

    # Pre-transpose so the kernel computes x @ W; PyTorch packs gates as (r, z, n).
    wi_all = params["w_ih"].T.astype(jnp.float32)                 # (E, 3H)
    wh_all = params["w_hh"].T.astype(jnp.float32)                 # (H, 3H)
    bih = params["b_ih"].reshape(1, 3 * H).astype(jnp.float32)
    bhh = params["b_hh"].reshape(1, 3 * H).astype(jnp.float32)
    wout = params["w_out"].T.astype(jnp.float32)                  # (H, V)
    bout = params["b_out"].reshape(1, V).astype(jnp.float32)

    vmem = pl.BlockSpec(memory_space=pltpu.MemorySpace.VMEM)

    dec_out, hid = pl.pallas_call(
        _decoder_kernel,
        out_shape=(
            jax.ShapeDtypeStruct((MAX_LENGTH, B, V), jnp.float32),
            jax.ShapeDtypeStruct((B, H), jnp.float32),
        ),
        in_specs=[vmem] * 8,
        out_specs=(vmem, vmem),
    )(params["emb"].astype(jnp.float32), wi_all, wh_all, bih, bhh, wout, bout, h0)

    decoder_outputs = jnp.transpose(dec_out, (1, 0, 2))           # (B, MAX_LENGTH, V)
    decoder_hidden = hid[None]                                    # (1, B, H)
    return decoder_outputs, decoder_hidden, None


def reference_forward(params, encoder_outputs, encoder_hidden):
    """Pure-JAX replica of the PyTorch forward (greedy path) for verification."""
    B = encoder_outputs.shape[0]
    H = encoder_hidden.shape[-1]
    h = encoder_hidden[0].astype(jnp.float32)
    tok = jnp.full((B,), SOS_TOKEN, jnp.int32)
    outs = []
    for _ in range(MAX_LENGTH):
        x = jnp.maximum(params["emb"][tok], 0.0)
        gi = x @ params["w_ih"].T + params["b_ih"]
        gh = h @ params["w_hh"].T + params["b_hh"]
        r = jax.nn.sigmoid(gi[:, :H] + gh[:, :H])
        z = jax.nn.sigmoid(gi[:, H:2 * H] + gh[:, H:2 * H])
        n = jnp.tanh(gi[:, 2 * H:] + r * gh[:, 2 * H:])
        h = (1.0 - z) * n + z * h
        logits = h @ params["w_out"].T + params["b_out"]
        outs.append(logits)
        tok = jnp.argmax(logits, axis=-1).astype(jnp.int32)
    out = jax.nn.log_softmax(jnp.stack(outs, axis=1), axis=-1)
    return out, h[None], None


def init_params(key, embedding_size, hidden_size, output_size):
    E, H, V = embedding_size, hidden_size, output_size
    ks = jax.random.split(key, 7)
    s = 1.0 / np.sqrt(H)
    return {
        "emb":   jax.random.normal(ks[0], (V, E), jnp.float32),
        "w_ih":  jax.random.uniform(ks[1], (3 * H, E), jnp.float32, -s, s),
        "w_hh":  jax.random.uniform(ks[2], (3 * H, H), jnp.float32, -s, s),
        "b_ih":  jax.random.uniform(ks[3], (3 * H,), jnp.float32, -s, s),
        "b_hh":  jax.random.uniform(ks[4], (3 * H,), jnp.float32, -s, s),
        "w_out": jax.random.uniform(ks[5], (V, H), jnp.float32, -s, s),
        "b_out": jax.random.uniform(ks[6], (V,), jnp.float32, -s, s),
    }


if __name__ == "__main__":
    B, SEQ, E, H, V = 2, 8, 16, 32, 32

    key = jax.random.PRNGKey(0)
    k_par, k_enc, k_hid = jax.random.split(key, 3)
    params = init_params(k_par, E, H, V)
    encoder_outputs = jax.random.normal(k_enc, (B, SEQ, E), jnp.float32)
    encoder_hidden = jax.random.normal(k_hid, (1, B, H), jnp.float32)

    dec_out, dec_hid, attn = decoder_rnn_forward(params, encoder_outputs, encoder_hidden)
    jax.block_until_ready((dec_out, dec_hid))

    ref_out, ref_hid, _ = reference_forward(params, encoder_outputs, encoder_hidden)
    assert dec_out.shape == (B, MAX_LENGTH, V)
    assert dec_hid.shape == (1, B, H)
    assert attn is None
    np.testing.assert_allclose(np.asarray(dec_out), np.asarray(ref_out), atol=2e-3, rtol=2e-3)
    np.testing.assert_allclose(np.asarray(dec_hid), np.asarray(ref_hid), atol=2e-3, rtol=2e-3)

    print("KERNEL_OK")
</pallas_src>

<mosaic_0001>
module attributes {stable_mosaic.version = 11 : i64} {
  func.func @_decoder_kernel(%arg0: memref<32x16xf32, #tpu.memory_space<vmem>>, %arg1: memref<16x96xf32, #tpu.memory_space<vmem>>, %arg2: memref<32x96xf32, #tpu.memory_space<vmem>>, %arg3: memref<1x96xf32, #tpu.memory_space<vmem>>, %arg4: memref<1x96xf32, #tpu.memory_space<vmem>>, %arg5: memref<32x32xf32, #tpu.memory_space<vmem>>, %arg6: memref<1x32xf32, #tpu.memory_space<vmem>>, %arg7: memref<2x32xf32, #tpu.memory_space<vmem>>, %arg8: memref<8x2x32xf32, #tpu.memory_space<vmem>>, %arg9: memref<2x32xf32, #tpu.memory_space<vmem>>) attributes {dimension_semantics = [], scalar_prefetch = 0 : i64, scratch_operands = 0 : i64, tpu.core_type = #tpu.core_type<tc>} {
    %c0 = arith.constant 0 : index
    %c0_0 = arith.constant 0 : index
    %0 = vector.load %arg0[%c0, %c0_0] : memref<32x16xf32, #tpu.memory_space<vmem>>, vector<32x16xf32>
    %c0_1 = arith.constant 0 : index
    %c0_2 = arith.constant 0 : index
    %1 = vector.load %arg1[%c0_1, %c0_2] : memref<16x96xf32, #tpu.memory_space<vmem>>, vector<16x96xf32>
    %c0_3 = arith.constant 0 : index
    %c0_4 = arith.constant 0 : index
    %2 = vector.load %arg2[%c0_3, %c0_4] : memref<32x96xf32, #tpu.memory_space<vmem>>, vector<32x96xf32>
    %c0_5 = arith.constant 0 : index
    %c0_6 = arith.constant 0 : index
    %3 = vector.load %arg3[%c0_5, %c0_6] : memref<1x96xf32, #tpu.memory_space<vmem>>, vector<1x96xf32>
    %c0_7 = arith.constant 0 : index
    %c0_8 = arith.constant 0 : index
    %4 = vector.load %arg4[%c0_7, %c0_8] : memref<1x96xf32, #tpu.memory_space<vmem>>, vector<1x96xf32>
    %c0_9 = arith.constant 0 : index
    %c0_10 = arith.constant 0 : index
    %5 = vector.load %arg5[%c0_9, %c0_10] : memref<32x32xf32, #tpu.memory_space<vmem>>, vector<32x32xf32>
    %c0_11 = arith.constant 0 : index
    %c0_12 = arith.constant 0 : index
    %6 = vector.load %arg6[%c0_11, %c0_12] : memref<1x32xf32, #tpu.memory_space<vmem>>, vector<1x32xf32>
    %c0_13 = arith.constant 0 : index
    %c0_14 = arith.constant 0 : index
    %7 = vector.load %arg7[%c0_13, %c0_14] : memref<2x32xf32, #tpu.memory_space<vmem>>, vector<2x32xf32>
    %cst = arith.constant 0.000000e+00 : f32
    %8 = vector.broadcast %cst : f32 to vector<32x16xf32>
    %9 = arith.maximumf %0, %8 : vector<32x16xf32>
    %cst_15 = arith.constant dense<0.000000e+00> : vector<32x96xf32>
    %10 = tpu.matmul %9, %1, %cst_15 {dimension_numbers = #tpu.dot_dimension_numbers<[1], [0], [0], [1], [0, 0, 1, 1], [], []>} : vector<32x16xf32>, vector<16x96xf32>, vector<32x96xf32> -> vector<32x96xf32>
    %11 = vector.broadcast %3 : vector<1x96xf32> to vector<32x96xf32>
    %12 = arith.addf %10, %11 : vector<32x96xf32>
    %13 = tpu.iota {dimensions = array<i32: 1>} : vector<2x32xi32>
    %c0_i32 = arith.constant 0 : i32
    %14 = vector.broadcast %c0_i32 : i32 to vector<2x1xi32>
    %15 = vector.broadcast %14 : vector<2x1xi32> to vector<2x32xi32>
    %16 = arith.cmpi eq, %13, %15 : vector<2x32xi32>
    %17 = arith.extui %16 : vector<2x32xi1> to vector<2x32xi32>
    %18 = arith.sitofp %17 : vector<2x32xi32> to vector<2x32xf32>
    %cst_16 = arith.constant dense<0.000000e+00> : vector<2x96xf32>
    %19 = tpu.matmul %18, %12, %cst_16 {dimension_numbers = #tpu.dot_dimension_numbers<[1], [0], [0], [1], [0, 0, 1, 1], [], []>} : vector<2x32xf32>, vector<32x96xf32>, vector<2x96xf32> -> vector<2x96xf32>
    %cst_17 = arith.constant dense<0.000000e+00> : vector<2x96xf32>
    %20 = tpu.matmul %7, %2, %cst_17 {dimension_numbers = #tpu.dot_dimension_numbers<[1], [0], [0], [1], [0, 0, 1, 1], [], []>} : vector<2x32xf32>, vector<32x96xf32>, vector<2x96xf32> -> vector<2x96xf32>
    %21 = vector.broadcast %4 : vector<1x96xf32> to vector<2x96xf32>
    %22 = arith.addf %20, %21 : vector<2x96xf32>
    %23 = vector.extract_strided_slice %19 {offsets = [0, 0], sizes = [2, 32], strides = [1, 1]} : vector<2x96xf32> to vector<2x32xf32>
    %24 = vector.extract_strided_slice %22 {offsets = [0, 0], sizes = [2, 32], strides = [1, 1]} : vector<2x96xf32> to vector<2x32xf32>
    %25 = arith.addf %23, %24 : vector<2x32xf32>
    %26 = arith.negf %25 : vector<2x32xf32>
    %27 = math.exp %26 : vector<2x32xf32>
    %cst_18 = arith.constant 1.000000e+00 : f32
    %28 = vector.broadcast %cst_18 : f32 to vector<2x32xf32>
    %29 = arith.addf %28, %27 : vector<2x32xf32>
    %30 = arith.divf %28, %29 : vector<2x32xf32>
    %31 = vector.extract_strided_slice %19 {offsets = [0, 32], sizes = [2, 32], strides = [1, 1]} : vector<2x96xf32> to vector<2x32xf32>
    %32 = vector.extract_strided_slice %22 {offsets = [0, 32], sizes = [2, 32], strides = [1, 1]} : vector<2x96xf32> to vector<2x32xf32>
    %33 = arith.addf %31, %32 : vector<2x32xf32>
    %34 = arith.negf %33 : vector<2x32xf32>
    %35 = math.exp %34 : vector<2x32xf32>
    %cst_19 = arith.constant 1.000000e+00 : f32
    %36 = vector.broadcast %cst_19 : f32 to vector<2x32xf32>
    %37 = arith.addf %36, %35 : vector<2x32xf32>
    %38 = arith.divf %36, %37 : vector<2x32xf32>
    %39 = vector.extract_strided_slice %19 {offsets = [0, 64], sizes = [2, 32], strides = [1, 1]} : vector<2x96xf32> to vector<2x32xf32>
    %40 = vector.extract_strided_slice %22 {offsets = [0, 64], sizes = [2, 32], strides = [1, 1]} : vector<2x96xf32> to vector<2x32xf32>
    %41 = arith.mulf %30, %40 : vector<2x32xf32>
    %42 = arith.addf %39, %41 : vector<2x32xf32>
    %43 = math.tanh %42 : vector<2x32xf32>
    %cst_20 = arith.constant 1.000000e+00 : f32
    %44 = vector.broadcast %cst_20 : f32 to vector<2x32xf32>
    %45 = arith.subf %44, %38 : vector<2x32xf32>
    %46 = arith.mulf %45, %43 : vector<2x32xf32>
    %47 = arith.mulf %38, %7 : vector<2x32xf32>
    %48 = arith.addf %46, %47 : vector<2x32xf32>
    %cst_21 = arith.constant dense<0.000000e+00> : vector<2x32xf32>
    %49 = tpu.matmul %48, %5, %cst_21 {dimension_numbers = #tpu.dot_dimension_numbers<[1], [0], [0], [1], [0, 0, 1, 1], [], []>} : vector<2x32xf32>, vector<32x32xf32>, vector<2x32xf32> -> vector<2x32xf32>
    %50 = vector.broadcast %6 : vector<1x32xf32> to vector<2x32xf32>
    %51 = arith.addf %49, %50 : vector<2x32xf32>
    %cst_22 = arith.constant dense<0xFF800000> : vector<2xf32>
    %52 = vector.multi_reduction <maximumf>, %51, %cst_22 [1] : vector<2x32xf32> to vector<2xf32>
    %53 = vector.shape_cast %52 : vector<2xf32> to vector<2x1xf32>
    %54 = vector.broadcast %53 : vector<2x1xf32> to vector<2x32xf32>
    %55 = arith.subf %51, %54 : vector<2x32xf32>
    %56 = math.exp %55 : vector<2x32xf32>
    %cst_23 = arith.constant dense<0.000000e+00> : vector<2xf32>
    %57 = vector.multi_reduction <add>, %56, %cst_23 [1] : vector<2x32xf32> to vector<2xf32>
    %58 = vector.shape_cast %57 : vector<2xf32> to vector<2x1xf32>
    %59 = math.log %58 : vector<2x1xf32>
    %60 = arith.addf %53, %59 : vector<2x1xf32>
    %61 = vector.broadcast %60 : vector<2x1xf32> to vector<2x32xf32>
    %62 = arith.subf %51, %61 : vector<2x32xf32>
    %c0_24 = arith.constant 0 : index
    %c0_25 = arith.constant 0 : index
    %c0_26 = arith.constant 0 : index
    %63 = vector.load %arg8[%c0_24, %c0_25, %c0_26] : memref<8x2x32xf32, #tpu.memory_space<vmem>>, vector<1x2x32xf32>
    %64 = vector.shape_cast %63 : vector<1x2x32xf32> to vector<2x32xf32>
    %65 = vector.shape_cast %62 : vector<2x32xf32> to vector<1x2x32xf32>
    tpu.vector_store %arg8[%c0_24, %c0_25, %c0_26], %65 {strides = array<i32>} : memref<8x2x32xf32, #tpu.memory_space<vmem>>, vector<1x2x32xf32>,
    %66 = vector.broadcast %53 : vector<2x1xf32> to vector<2x32xf32>
    %67 = arith.cmpf oeq, %51, %66 : vector<2x32xf32>
    %c32_i32 = arith.constant 32 : i32
    %68 = vector.broadcast %c32_i32 : i32 to vector<2x32xi32>
    %69 = arith.select %67, %13, %68 : vector<2x32xi1>, vector<2x32xi32>
    %cst_27 = arith.constant dense<2147483647> : vector<2xi32>
    %70 = vector.multi_reduction <minsi>, %69, %cst_27 [1] : vector<2x32xi32> to vector<2xi32>
    %71 = vector.shape_cast %70 : vector<2xi32> to vector<2x1xi32>
    %72 = vector.broadcast %71 : vector<2x1xi32> to vector<2x32xi32>
    %73 = arith.cmpi eq, %13, %72 : vector<2x32xi32>
    %74 = arith.extui %73 : vector<2x32xi1> to vector<2x32xi32>
    %75 = arith.sitofp %74 : vector<2x32xi32> to vector<2x32xf32>
    %cst_28 = arith.constant dense<0.000000e+00> : vector<2x96xf32>
    %76 = tpu.matmul %75, %12, %cst_28 {dimension_numbers = #tpu.dot_dimension_numbers<[1], [0], [0], [1], [0, 0, 1, 1], [], []>} : vector<2x32xf32>, vector<32x96xf32>, vector<2x96xf32> -> vector<2x96xf32>
    %cst_29 = arith.constant dense<0.000000e+00> : vector<2x96xf32>
    %77 = tpu.matmul %48, %2, %cst_29 {dimension_numbers = #tpu.dot_dimension_numbers<[1], [0], [0], [1], [0, 0, 1, 1], [], []>} : vector<2x32xf32>, vector<32x96xf32>, vector<2x96xf32> -> vector<2x96xf32>
    %78 = vector.broadcast %4 : vector<1x96xf32> to vector<2x96xf32>
    %79 = arith.addf %77, %78 : vector<2x96xf32>
    %80 = vector.extract_strided_slice %76 {offsets = [0, 0], sizes = [2, 32], strides = [1, 1]} : vector<2x96xf32> to vector<2x32xf32>
    %81 = vector.extract_strided_slice %79 {offsets = [0, 0], sizes = [2, 32], strides = [1, 1]} : vector<2x96xf32> to vector<2x32xf32>
    %82 = arith.addf %80, %81 : vector<2x32xf32>
    %83 = arith.negf %82 : vector<2x32xf32>
    %84 = math.exp %83 : vector<2x32xf32>
    %cst_30 = arith.constant 1.000000e+00 : f32
    %85 = vector.broadcast %cst_30 : f32 to vector<2x32xf32>
    %86 = arith.addf %85, %84 : vector<2x32xf32>
    %87 = arith.divf %85, %86 : vector<2x32xf32>
    %88 = vector.extract_strided_slice %76 {offsets = [0, 32], sizes = [2, 32], strides = [1, 1]} : vector<2x96xf32> to vector<2x32xf32>
    %89 = vector.extract_strided_slice %79 {offsets = [0, 32], sizes = [2, 32], strides = [1, 1]} : vector<2x96xf32> to vector<2x32xf32>
    %90 = arith.addf %88, %89 : vector<2x32xf32>
    %91 = arith.negf %90 : vector<2x32xf32>
    %92 = math.exp %91 : vector<2x32xf32>
    %cst_31 = arith.constant 1.000000e+00 : f32
    %93 = vector.broadcast %cst_31 : f32 to vector<2x32xf32>
    %94 = arith.addf %93, %92 : vector<2x32xf32>
    %95 = arith.divf %93, %94 : vector<2x32xf32>
    %96 = vector.extract_strided_slice %76 {offsets = [0, 64], sizes = [2, 32], strides = [1, 1]} : vector<2x96xf32> to vector<2x32xf32>
    %97 = vector.extract_strided_slice %79 {offsets = [0, 64], sizes = [2, 32], strides = [1, 1]} : vector<2x96xf32> to vector<2x32xf32>
    %98 = arith.mulf %87, %97 : vector<2x32xf32>
    %99 = arith.addf %96, %98 : vector<2x32xf32>
    %100 = math.tanh %99 : vector<2x32xf32>
    %cst_32 = arith.constant 1.000000e+00 : f32
    %101 = vector.broadcast %cst_32 : f32 to vector<2x32xf32>
    %102 = arith.subf %101, %95 : vector<2x32xf32>
    %103 = arith.mulf %102, %100 : vector<2x32xf32>
    %104 = arith.mulf %95, %48 : vector<2x32xf32>
    %105 = arith.addf %103, %104 : vector<2x32xf32>
    %cst_33 = arith.constant dense<0.000000e+00> : vector<2x32xf32>
    %106 = tpu.matmul %105, %5, %cst_33 {dimension_numbers = #tpu.dot_dimension_numbers<[1], [0], [0], [1], [0, 0, 1, 1], [], []>} : vector<2x32xf32>, vector<32x32xf32>, vector<2x32xf32> -> vector<2x32xf32>
    %107 = vector.broadcast %6 : vector<1x32xf32> to vector<2x32xf32>
    %108 = arith.addf %106, %107 : vector<2x32xf32>
    %cst_34 = arith.constant dense<0xFF800000> : vector<2xf32>
    %109 = vector.multi_reduction <maximumf>, %108, %cst_34 [1] : vector<2x32xf32> to vector<2xf32>
    %110 = vector.shape_cast %109 : vector<2xf32> to vector<2x1xf32>
    %111 = vector.broadcast %110 : vector<2x1xf32> to vector<2x32xf32>
    %112 = arith.subf %108, %111 : vector<2x32xf32>
    %113 = math.exp %112 : vector<2x32xf32>
    %cst_35 = arith.constant dense<0.000000e+00> : vector<2xf32>
    %114 = vector.multi_reduction <add>, %113, %cst_35 [1] : vector<2x32xf32> to vector<2xf32>
    %115 = vector.shape_cast %114 : vector<2xf32> to vector<2x1xf32>
    %116 = math.log %115 : vector<2x1xf32>
    %117 = arith.addf %110, %116 : vector<2x1xf32>
    %118 = vector.broadcast %117 : vector<2x1xf32> to vector<2x32xf32>
    %119 = arith.subf %108, %118 : vector<2x32xf32>
    %c1 = arith.constant 1 : index
    %c0_36 = arith.constant 0 : index
    %c0_37 = arith.constant 0 : index
    %120 = vector.load %arg8[%c1, %c0_36, %c0_37] : memref<8x2x32xf32, #tpu.memory_space<vmem>>, vector<1x2x32xf32>
    %121 = vector.shape_cast %120 : vector<1x2x32xf32> to vector<2x32xf32>
    %122 = vector.shape_cast %119 : vector<2x32xf32> to vector<1x2x32xf32>
    tpu.vector_store %arg8[%c1, %c0_36, %c0_37], %122 {strides = array<i32>} : memref<8x2x32xf32, #tpu.memory_space<vmem>>, vector<1x2x32xf32>,
    %123 = vector.broadcast %110 : vector<2x1xf32> to vector<2x32xf32>
    %124 = arith.cmpf oeq, %108, %123 : vector<2x32xf32>
    %c32_i32_38 = arith.constant 32 : i32
    %125 = vector.broadcast %c32_i32_38 : i32 to vector<2x32xi32>
    %126 = arith.select %124, %13, %125 : vector<2x32xi1>, vector<2x32xi32>
    %cst_39 = arith.constant dense<2147483647> : vector<2xi32>
    %127 = vector.multi_reduction <minsi>, %126, %cst_39 [1] : vector<2x32xi32> to vector<2xi32>
    %128 = vector.shape_cast %127 : vector<2xi32> to vector<2x1xi32>
    %129 = vector.broadcast %128 : vector<2x1xi32> to vector<2x32xi32>
    %130 = arith.cmpi eq, %13, %129 : vector<2x32xi32>
    %131 = arith.extui %130 : vector<2x32xi1> to vector<2x32xi32>
    %132 = arith.sitofp %131 : vector<2x32xi32> to vector<2x32xf32>
    %cst_40 = arith.constant dense<0.000000e+00> : vector<2x96xf32>
    %133 = tpu.matmul %132, %12, %cst_40 {dimension_numbers = #tpu.dot_dimension_numbers<[1], [0], [0], [1], [0, 0, 1, 1], [], []>} : vector<2x32xf32>, vector<32x96xf32>, vector<2x96xf32> -> vector<2x96xf32>
    %cst_41 = arith.constant dense<0.000000e+00> : vector<2x96xf32>
    %134 = tpu.matmul %105, %2, %cst_41 {dimension_numbers = #tpu.dot_dimension_numbers<[1], [0], [0], [1], [0, 0, 1, 1], [], []>} : vector<2x32xf32>, vector<32x96xf32>, vector<2x96xf32> -> vector<2x96xf32>
    %135 = vector.broadcast %4 : vector<1x96xf32> to vector<2x96xf32>
    %136 = arith.addf %134, %135 : vector<2x96xf32>
    %137 = vector.extract_strided_slice %133 {offsets = [0, 0], sizes = [2, 32], strides = [1, 1]} : vector<2x96xf32> to vector<2x32xf32>
    %138 = vector.extract_strided_slice %136 {offsets = [0, 0], sizes = [2, 32], strides = [1, 1]} : vector<2x96xf32> to vector<2x32xf32>
    %139 = arith.addf %137, %138 : vector<2x32xf32>
    %140 = arith.negf %139 : vector<2x32xf32>
    %141 = math.exp %140 : vector<2x32xf32>
    %cst_42 = arith.constant 1.000000e+00 : f32
    %142 = vector.broadcast %cst_42 : f32 to vector<2x32xf32>
    %143 = arith.addf %142, %141 : vector<2x32xf32>
    %144 = arith.divf %142, %143 : vector<2x32xf32>
    %145 = vector.extract_strided_slice %133 {offsets = [0, 32], sizes = [2, 32], strides = [1, 1]} : vector<2x96xf32> to vector<2x32xf32>
    %146 = vector.extract_strided_slice %136 {offsets = [0, 32], sizes = [2, 32], strides = [1, 1]} : vector<2x96xf32> to vector<2x32xf32>
    %147 = arith.addf %145, %146 : vector<2x32xf32>
    %148 = arith.negf %147 : vector<2x32xf32>
    %149 = math.exp %148 : vector<2x32xf32>
    %cst_43 = arith.constant 1.000000e+00 : f32
    %150 = vector.broadcast %cst_43 : f32 to vector<2x32xf32>
    %151 = arith.addf %150, %149 : vector<2x32xf32>
    %152 = arith.divf %150, %151 : vector<2x32xf32>
    %153 = vector.extract_strided_slice %133 {offsets = [0, 64], sizes = [2, 32], strides = [1, 1]} : vector<2x96xf32> to vector<2x32xf32>
    %154 = vector.extract_strided_slice %136 {offsets = [0, 64], sizes = [2, 32], strides = [1, 1]} : vector<2x96xf32> to vector<2x32xf32>
    %155 = arith.mulf %144, %154 : vector<2x32xf32>
    %156 = arith.addf %153, %155 : vector<2x32xf32>
    %157 = math.tanh %156 : vector<2x32xf32>
    %cst_44 = arith.constant 1.000000e+00 : f32
    %158 = vector.broadcast %cst_44 : f32 to vector<2x32xf32>
    %159 = arith.subf %158, %152 : vector<2x32xf32>
    %160 = arith.mulf %159, %157 : vector<2x32xf32>
    %161 = arith.mulf %152, %105 : vector<2x32xf32>
    %162 = arith.addf %160, %161 : vector<2x32xf32>
    %cst_45 = arith.constant dense<0.000000e+00> : vector<2x32xf32>
    %163 = tpu.matmul %162, %5, %cst_45 {dimension_numbers = #tpu.dot_dimension_numbers<[1], [0], [0], [1], [0, 0, 1, 1], [], []>} : vector<2x32xf32>, vector<32x32xf32>, vector<2x32xf32> -> vector<2x32xf32>
    %164 = vector.broadcast %6 : vector<1x32xf32> to vector<2x32xf32>
    %165 = arith.addf %163, %164 : vector<2x32xf32>
    %cst_46 = arith.constant dense<0xFF800000> : vector<2xf32>
    %166 = vector.multi_reduction <maximumf>, %165, %cst_46 [1] : vector<2x32xf32> to vector<2xf32>
    %167 = vector.shape_cast %166 : vector<2xf32> to vector<2x1xf32>
    %168 = vector.broadcast %167 : vector<2x1xf32> to vector<2x32xf32>
    %169 = arith.subf %165, %168 : vector<2x32xf32>
    %170 = math.exp %169 : vector<2x32xf32>
    %cst_47 = arith.constant dense<0.000000e+00> : vector<2xf32>
    %171 = vector.multi_reduction <add>, %170, %cst_47 [1] : vector<2x32xf32> to vector<2xf32>
    %172 = vector.shape_cast %171 : vector<2xf32> to vector<2x1xf32>
    %173 = math.log %172 : vector<2x1xf32>
    %174 = arith.addf %167, %173 : vector<2x1xf32>
    %175 = vector.broadcast %174 : vector<2x1xf32> to vector<2x32xf32>
    %176 = arith.subf %165, %175 : vector<2x32xf32>
    %c2 = arith.constant 2 : index
    %c0_48 = arith.constant 0 : index
    %c0_49 = arith.constant 0 : index
    %177 = vector.load %arg8[%c2, %c0_48, %c0_49] : memref<8x2x32xf32, #tpu.memory_space<vmem>>, vector<1x2x32xf32>
    %178 = vector.shape_cast %177 : vector<1x2x32xf32> to vector<2x32xf32>
    %179 = vector.shape_cast %176 : vector<2x32xf32> to vector<1x2x32xf32>
    tpu.vector_store %arg8[%c2, %c0_48, %c0_49], %179 {strides = array<i32>} : memref<8x2x32xf32, #tpu.memory_space<vmem>>, vector<1x2x32xf32>,
    %180 = vector.broadcast %167 : vector<2x1xf32> to vector<2x32xf32>
    %181 = arith.cmpf oeq, %165, %180 : vector<2x32xf32>
    %c32_i32_50 = arith.constant 32 : i32
    %182 = vector.broadcast %c32_i32_50 : i32 to vector<2x32xi32>
    %183 = arith.select %181, %13, %182 : vector<2x32xi1>, vector<2x32xi32>
    %cst_51 = arith.constant dense<2147483647> : vector<2xi32>
    %184 = vector.multi_reduction <minsi>, %183, %cst_51 [1] : vector<2x32xi32> to vector<2xi32>
    %185 = vector.shape_cast %184 : vector<2xi32> to vector<2x1xi32>
    %186 = vector.broadcast %185 : vector<2x1xi32> to vector<2x32xi32>
    %187 = arith.cmpi eq, %13, %186 : vector<2x32xi32>
    %188 = arith.extui %187 : vector<2x32xi1> to vector<2x32xi32>
    %189 = arith.sitofp %188 : vector<2x32xi32> to vector<2x32xf32>
    %cst_52 = arith.constant dense<0.000000e+00> : vector<2x96xf32>
    %190 = tpu.matmul %189, %12, %cst_52 {dimension_numbers = #tpu.dot_dimension_numbers<[1], [0], [0], [1], [0, 0, 1, 1], [], []>} : vector<2x32xf32>, vector<32x96xf32>, vector<2x96xf32> -> vector<2x96xf32>
    %cst_53 = arith.constant dense<0.000000e+00> : vector<2x96xf32>
    %191 = tpu.matmul %162, %2, %cst_53 {dimension_numbers = #tpu.dot_dimension_numbers<[1], [0], [0], [1], [0, 0, 1, 1], [], []>} : vector<2x32xf32>, vector<32x96xf32>, vector<2x96xf32> -> vector<2x96xf32>
    %192 = vector.broadcast %4 : vector<1x96xf32> to vector<2x96xf32>
    %193 = arith.addf %191, %192 : vector<2x96xf32>
    %194 = vector.extract_strided_slice %190 {offsets = [0, 0], sizes = [2, 32], strides = [1, 1]} : vector<2x96xf32> to vector<2x32xf32>
    %195 = vector.extract_strided_slice %193 {offsets = [0, 0], sizes = [2, 32], strides = [1, 1]} : vector<2x96xf32> to vector<2x32xf32>
    %196 = arith.addf %194, %195 : vector<2x32xf32>
    %197 = arith.negf %196 : vector<2x32xf32>
    %198 = math.exp %197 : vector<2x32xf32>
    %cst_54 = arith.constant 1.000000e+00 : f32
    %199 = vector.broadcast %cst_54 : f32 to vector<2x32xf32>
    %200 = arith.addf %199, %198 : vector<2x32xf32>
    %201 = arith.divf %199, %200 : vector<2x32xf32>
    %202 = vector.extract_strided_slice %190 {offsets = [0, 32], sizes = [2, 32], strides = [1, 1]} : vector<2x96xf32> to vector<2x32xf32>
    %203 = vector.extract_strided_slice %193 {offsets = [0, 32], sizes = [2, 32], strides = [1, 1]} : vector<2x96xf32> to vector<2x32xf32>
    %204 = arith.addf %202, %203 : vector<2x32xf32>
    %205 = arith.negf %204 : vector<2x32xf32>
    %206 = math.exp %205 : vector<2x32xf32>
    %cst_55 = arith.constant 1.000000e+00 : f32
    %207 = vector.broadcast %cst_55 : f32 to vector<2x32xf32>
    %208 = arith.addf %207, %206 : vector<2x32xf32>
    %209 = arith.divf %207, %208 : vector<2x32xf32>
    %210 = vector.extract_strided_slice %190 {offsets = [0, 64], sizes = [2, 32], strides = [1, 1]} : vector<2x96xf32> to vector<2x32xf32>
    %211 = vector.extract_strided_slice %193 {offsets = [0, 64], sizes = [2, 32], strides = [1, 1]} : vector<2x96xf32> to vector<2x32xf32>
    %212 = arith.mulf %201, %211 : vector<2x32xf32>
    %213 = arith.addf %210, %212 : vector<2x32xf32>
    %214 = math.tanh %213 : vector<2x32xf32>
    %cst_56 = arith.constant 1.000000e+00 : f32
    %215 = vector.broadcast %cst_56 : f32 to vector<2x32xf32>
    %216 = arith.subf %215, %209 : vector<2x32xf32>
    %217 = arith.mulf %216, %214 : vector<2x32xf32>
    %218 = arith.mulf %209, %162 : vector<2x32xf32>
    %219 = arith.addf %217, %218 : vector<2x32xf32>
    %cst_57 = arith.constant dense<0.000000e+00> : vector<2x32xf32>
    %220 = tpu.matmul %219, %5, %cst_57 {dimension_numbers = #tpu.dot_dimension_numbers<[1], [0], [0], [1], [0, 0, 1, 1], [], []>} : vector<2x32xf32>, vector<32x32xf32>, vector<2x32xf32> -> vector<2x32xf32>
    %221 = vector.broadcast %6 : vector<1x32xf32> to vector<2x32xf32>
    %222 = arith.addf %220, %221 : vector<2x32xf32>
    %cst_58 = arith.constant dense<0xFF800000> : vector<2xf32>
    %223 = vector.multi_reduction <maximumf>, %222, %cst_58 [1] : vector<2x32xf32> to vector<2xf32>
    %224 = vector.shape_cast %223 : vector<2xf32> to vector<2x1xf32>
    %225 = vector.broadcast %224 : vector<2x1xf32> to vector<2x32xf32>
    %226 = arith.subf %222, %225 : vector<2x32xf32>
    %227 = math.exp %226 : vector<2x32xf32>
    %cst_59 = arith.constant dense<0.000000e+00> : vector<2xf32>
    %228 = vector.multi_reduction <add>, %227, %cst_59 [1] : vector<2x32xf32> to vector<2xf32>
    %229 = vector.shape_cast %228 : vector<2xf32> to vector<2x1xf32>
    %230 = math.log %229 : vector<2x1xf32>
    %231 = arith.addf %224, %230 : vector<2x1xf32>
    %232 = vector.broadcast %231 : vector<2x1xf32> to vector<2x32xf32>
    %233 = arith.subf %222, %232 : vector<2x32xf32>
    %c3 = arith.constant 3 : index
    %c0_60 = arith.constant 0 : index
    %c0_61 = arith.constant 0 : index
    %234 = vector.load %arg8[%c3, %c0_60, %c0_61] : memref<8x2x32xf32, #tpu.memory_space<vmem>>, vector<1x2x32xf32>
    %235 = vector.shape_cast %234 : vector<1x2x32xf32> to vector<2x32xf32>
    %236 = vector.shape_cast %233 : vector<2x32xf32> to vector<1x2x32xf32>
    tpu.vector_store %arg8[%c3, %c0_60, %c0_61], %236 {strides = array<i32>} : memref<8x2x32xf32, #tpu.memory_space<vmem>>, vector<1x2x32xf32>,
    %237 = vector.broadcast %224 : vector<2x1xf32> to vector<2x32xf32>
    %238 = arith.cmpf oeq, %222, %237 : vector<2x32xf32>
    %c32_i32_62 = arith.constant 32 : i32
    %239 = vector.broadcast %c32_i32_62 : i32 to vector<2x32xi32>
    %240 = arith.select %238, %13, %239 : vector<2x32xi1>, vector<2x32xi32>
    %cst_63 = arith.constant dense<2147483647> : vector<2xi32>
    %241 = vector.multi_reduction <minsi>, %240, %cst_63 [1] : vector<2x32xi32> to vector<2xi32>
    %242 = vector.shape_cast %241 : vector<2xi32> to vector<2x1xi32>
    %243 = vector.broadcast %242 : vector<2x1xi32> to vector<2x32xi32>
    %244 = arith.cmpi eq, %13, %243 : vector<2x32xi32>
    %245 = arith.extui %244 : vector<2x32xi1> to vector<2x32xi32>
    %246 = arith.sitofp %245 : vector<2x32xi32> to vector<2x32xf32>
    %cst_64 = arith.constant dense<0.000000e+00> : vector<2x96xf32>
    %247 = tpu.matmul %246, %12, %cst_64 {dimension_numbers = #tpu.dot_dimension_numbers<[1], [0], [0], [1], [0, 0, 1, 1], [], []>} : vector<2x32xf32>, vector<32x96xf32>, vector<2x96xf32> -> vector<2x96xf32>
    %cst_65 = arith.constant dense<0.000000e+00> : vector<2x96xf32>
    %248 = tpu.matmul %219, %2, %cst_65 {dimension_numbers = #tpu.dot_dimension_numbers<[1], [0], [0], [1], [0, 0, 1, 1], [], []>} : vector<2x32xf32>, vector<32x96xf32>, vector<2x96xf32> -> vector<2x96xf32>
    %249 = vector.broadcast %4 : vector<1x96xf32> to vector<2x96xf32>
    %250 = arith.addf %248, %249 : vector<2x96xf32>
    %251 = vector.extract_strided_slice %247 {offsets = [0, 0], sizes = [2, 32], strides = [1, 1]} : vector<2x96xf32> to vector<2x32xf32>
    %252 = vector.extract_strided_slice %250 {offsets = [0, 0], sizes = [2, 32], strides = [1, 1]} : vector<2x96xf32> to vector<2x32xf32>
    %253 = arith.addf %251, %252 : vector<2x32xf32>
    %254 = arith.negf %253 : vector<2x32xf32>
    %255 = math.exp %254 : vector<2x32xf32>
    %cst_66 = arith.constant 1.000000e+00 : f32
    %256 = vector.broadcast %cst_66 : f32 to vector<2x32xf32>
    %257 = arith.addf %256, %255 : vector<2x32xf32>
    %258 = arith.divf %256, %257 : vector<2x32xf32>
    %259 = vector.extract_strided_slice %247 {offsets = [0, 32], sizes = [2, 32], strides = [1, 1]} : vector<2x96xf32> to vector<2x32xf32>
    %260 = vector.extract_strided_slice %250 {offsets = [0, 32], sizes = [2, 32], strides = [1, 1]} : vector<2x96xf32> to vector<2x32xf32>
    %261 = arith.addf %259, %260 : vector<2x32xf32>
    %262 = arith.negf %261 : vector<2x32xf32>
    %263 = math.exp %262 : vector<2x32xf32>
    %cst_67 = arith.constant 1.000000e+00 : f32
    %264 = vector.broadcast %cst_67 : f32 to vector<2x32xf32>
    %265 = arith.addf %264, %263 : vector<2x32xf32>
    %266 = arith.divf %264, %265 : vector<2x32xf32>
    %267 = vector.extract_strided_slice %247 {offsets = [0, 64], sizes = [2, 32], strides = [1, 1]} : vector<2x96xf32> to vector<2x32xf32>
    %268 = vector.extract_strided_slice %250 {offsets = [0, 64], sizes = [2, 32], strides = [1, 1]} : vector<2x96xf32> to vector<2x32xf32>
    %269 = arith.mulf %258, %268 : vector<2x32xf32>
    %270 = arith.addf %267, %269 : vector<2x32xf32>
    %271 = math.tanh %270 : vector<2x32xf32>
    %cst_68 = arith.constant 1.000000e+00 : f32
    %272 = vector.broadcast %cst_68 : f32 to vector<2x32xf32>
    %273 = arith.subf %272, %266 : vector<2x32xf32>
    %274 = arith.mulf %273, %271 : vector<2x32xf32>
    %275 = arith.mulf %266, %219 : vector<2x32xf32>
    %276 = arith.addf %274, %275 : vector<2x32xf32>
    %cst_69 = arith.constant dense<0.000000e+00> : vector<2x32xf32>
    %277 = tpu.matmul %276, %5, %cst_69 {dimension_numbers = #tpu.dot_dimension_numbers<[1], [0], [0], [1], [0, 0, 1, 1], [], []>} : vector<2x32xf32>, vector<32x32xf32>, vector<2x32xf32> -> vector<2x32xf32>
    %278 = vector.broadcast %6 : vector<1x32xf32> to vector<2x32xf32>
    %279 = arith.addf %277, %278 : vector<2x32xf32>
    %cst_70 = arith.constant dense<0xFF800000> : vector<2xf32>
    %280 = vector.multi_reduction <maximumf>, %279, %cst_70 [1] : vector<2x32xf32> to vector<2xf32>
    %281 = vector.shape_cast %280 : vector<2xf32> to vector<2x1xf32>
    %282 = vector.broadcast %281 : vector<2x1xf32> to vector<2x32xf32>
    %283 = arith.subf %279, %282 : vector<2x32xf32>
    %284 = math.exp %283 : vector<2x32xf32>
    %cst_71 = arith.constant dense<0.000000e+00> : vector<2xf32>
    %285 = vector.multi_reduction <add>, %284, %cst_71 [1] : vector<2x32xf32> to vector<2xf32>
    %286 = vector.shape_cast %285 : vector<2xf32> to vector<2x1xf32>
    %287 = math.log %286 : vector<2x1xf32>
    %288 = arith.addf %281, %287 : vector<2x1xf32>
    %289 = vector.broadcast %288 : vector<2x1xf32> to vector<2x32xf32>
    %290 = arith.subf %279, %289 : vector<2x32xf32>
    %c4 = arith.constant 4 : index
    %c0_72 = arith.constant 0 : index
    %c0_73 = arith.constant 0 : index
    %291 = vector.load %arg8[%c4, %c0_72, %c0_73] : memref<8x2x32xf32, #tpu.memory_space<vmem>>, vector<1x2x32xf32>
    %292 = vector.shape_cast %291 : vector<1x2x32xf32> to vector<2x32xf32>
    %293 = vector.shape_cast %290 : vector<2x32xf32> to vector<1x2x32xf32>
    tpu.vector_store %arg8[%c4, %c0_72, %c0_73], %293 {strides = array<i32>} : memref<8x2x32xf32, #tpu.memory_space<vmem>>, vector<1x2x32xf32>,
    %294 = vector.broadcast %281 : vector<2x1xf32> to vector<2x32xf32>
    %295 = arith.cmpf oeq, %279, %294 : vector<2x32xf32>
    %c32_i32_74 = arith.constant 32 : i32
    %296 = vector.broadcast %c32_i32_74 : i32 to vector<2x32xi32>
    %297 = arith.select %295, %13, %296 : vector<2x32xi1>, vector<2x32xi32>
    %cst_75 = arith.constant dense<2147483647> : vector<2xi32>
    %298 = vector.multi_reduction <minsi>, %297, %cst_75 [1] : vector<2x32xi32> to vector<2xi32>
    %299 = vector.shape_cast %298 : vector<2xi32> to vector<2x1xi32>
    %300 = vector.broadcast %299 : vector<2x1xi32> to vector<2x32xi32>
    %301 = arith.cmpi eq, %13, %300 : vector<2x32xi32>
    %302 = arith.extui %301 : vector<2x32xi1> to vector<2x32xi32>
    %303 = arith.sitofp %302 : vector<2x32xi32> to vector<2x32xf32>
    %cst_76 = arith.constant dense<0.000000e+00> : vector<2x96xf32>
    %304 = tpu.matmul %303, %12, %cst_76 {dimension_numbers = #tpu.dot_dimension_numbers<[1], [0], [0], [1], [0, 0, 1, 1], [], []>} : vector<2x32xf32>, vector<32x96xf32>, vector<2x96xf32> -> vector<2x96xf32>
    %cst_77 = arith.constant dense<0.000000e+00> : vector<2x96xf32>
    %305 = tpu.matmul %276, %2, %cst_77 {dimension_numbers = #tpu.dot_dimension_numbers<[1], [0], [0], [1], [0, 0, 1, 1], [], []>} : vector<2x32xf32>, vector<32x96xf32>, vector<2x96xf32> -> vector<2x96xf32>
    %306 = vector.broadcast %4 : vector<1x96xf32> to vector<2x96xf32>
    %307 = arith.addf %305, %306 : vector<2x96xf32>
    %308 = vector.extract_strided_slice %304 {offsets = [0, 0], sizes = [2, 32], strides = [1, 1]} : vector<2x96xf32> to vector<2x32xf32>
    %309 = vector.extract_strided_slice %307 {offsets = [0, 0], sizes = [2, 32], strides = [1, 1]} : vector<2x96xf32> to vector<2x32xf32>
    %310 = arith.addf %308, %309 : vector<2x32xf32>
    %311 = arith.negf %310 : vector<2x32xf32>
    %312 = math.exp %311 : vector<2x32xf32>
    %cst_78 = arith.constant 1.000000e+00 : f32
    %313 = vector.broadcast %cst_78 : f32 to vector<2x32xf32>
    %314 = arith.addf %313, %312 : vector<2x32xf32>
    %315 = arith.divf %313, %314 : vector<2x32xf32>
    %316 = vector.extract_strided_slice %304 {offsets = [0, 32], sizes = [2, 32], strides = [1, 1]} : vector<2x96xf32> to vector<2x32xf32>
    %317 = vector.extract_strided_slice %307 {offsets = [0, 32], sizes = [2, 32], strides = [1, 1]} : vector<2x96xf32> to vector<2x32xf32>
    %318 = arith.addf %316, %317 : vector<2x32xf32>
    %319 = arith.negf %318 : vector<2x32xf32>
    %320 = math.exp %319 : vector<2x32xf32>
    %cst_79 = arith.constant 1.000000e+00 : f32
    %321 = vector.broadcast %cst_79 : f32 to vector<2x32xf32>
    %322 = arith.addf %321, %320 : vector<2x32xf32>
    %323 = arith.divf %321, %322 : vector<2x32xf32>
    %324 = vector.extract_strided_slice %304 {offsets = [0, 64], sizes = [2, 32], strides = [1, 1]} : vector<2x96xf32> to vector<2x32xf32>
    %325 = vector.extract_strided_slice %307 {offsets = [0, 64], sizes = [2, 32], strides = [1, 1]} : vector<2x96xf32> to vector<2x32xf32>
    %326 = arith.mulf %315, %325 : vector<2x32xf32>
    %327 = arith.addf %324, %326 : vector<2x32xf32>
    %328 = math.tanh %327 : vector<2x32xf32>
    %cst_80 = arith.constant 1.000000e+00 : f32
    %329 = vector.broadcast %cst_80 : f32 to vector<2x32xf32>
    %330 = arith.subf %329, %323 : vector<2x32xf32>
    %331 = arith.mulf %330, %328 : vector<2x32xf32>
    %332 = arith.mulf %323, %276 : vector<2x32xf32>
    %333 = arith.addf %331, %332 : vector<2x32xf32>
    %cst_81 = arith.constant dense<0.000000e+00> : vector<2x32xf32>
    %334 = tpu.matmul %333, %5, %cst_81 {dimension_numbers = #tpu.dot_dimension_numbers<[1], [0], [0], [1], [0, 0, 1, 1], [], []>} : vector<2x32xf32>, vector<32x32xf32>, vector<2x32xf32> -> vector<2x32xf32>
    %335 = vector.broadcast %6 : vector<1x32xf32> to vector<2x32xf32>
    %336 = arith.addf %334, %335 : vector<2x32xf32>
    %cst_82 = arith.constant dense<0xFF800000> : vector<2xf32>
    %337 = vector.multi_reduction <maximumf>, %336, %cst_82 [1] : vector<2x32xf32> to vector<2xf32>
    %338 = vector.shape_cast %337 : vector<2xf32> to vector<2x1xf32>
    %339 = vector.broadcast %338 : vector<2x1xf32> to vector<2x32xf32>
    %340 = arith.subf %336, %339 : vector<2x32xf32>
    %341 = math.exp %340 : vector<2x32xf32>
    %cst_83 = arith.constant dense<0.000000e+00> : vector<2xf32>
    %342 = vector.multi_reduction <add>, %341, %cst_83 [1] : vector<2x32xf32> to vector<2xf32>
    %343 = vector.shape_cast %342 : vector<2xf32> to vector<2x1xf32>
    %344 = math.log %343 : vector<2x1xf32>
    %345 = arith.addf %338, %344 : vector<2x1xf32>
    %346 = vector.broadcast %345 : vector<2x1xf32> to vector<2x32xf32>
    %347 = arith.subf %336, %346 : vector<2x32xf32>
    %c5 = arith.constant 5 : index
    %c0_84 = arith.constant 0 : index
    %c0_85 = arith.constant 0 : index
    %348 = vector.load %arg8[%c5, %c0_84, %c0_85] : memref<8x2x32xf32, #tpu.memory_space<vmem>>, vector<1x2x32xf32>
    %349 = vector.shape_cast %348 : vector<1x2x32xf32> to vector<2x32xf32>
    %350 = vector.shape_cast %347 : vector<2x32xf32> to vector<1x2x32xf32>
    tpu.vector_store %arg8[%c5, %c0_84, %c0_85], %350 {strides = array<i32>} : memref<8x2x32xf32, #tpu.memory_space<vmem>>, vector<1x2x32xf32>,
    %351 = vector.broadcast %338 : vector<2x1xf32> to vector<2x32xf32>
    %352 = arith.cmpf oeq, %336, %351 : vector<2x32xf32>
    %c32_i32_86 = arith.constant 32 : i32
    %353 = vector.broadcast %c32_i32_86 : i32 to vector<2x32xi32>
    %354 = arith.select %352, %13, %353 : vector<2x32xi1>, vector<2x32xi32>
    %cst_87 = arith.constant dense<2147483647> : vector<2xi32>
    %355 = vector.multi_reduction <minsi>, %354, %cst_87 [1] : vector<2x32xi32> to vector<2xi32>
    %356 = vector.shape_cast %355 : vector<2xi32> to vector<2x1xi32>
    %357 = vector.broadcast %356 : vector<2x1xi32> to vector<2x32xi32>
    %358 = arith.cmpi eq, %13, %357 : vector<2x32xi32>
    %359 = arith.extui %358 : vector<2x32xi1> to vector<2x32xi32>
    %360 = arith.sitofp %359 : vector<2x32xi32> to vector<2x32xf32>
    %cst_88 = arith.constant dense<0.000000e+00> : vector<2x96xf32>
    %361 = tpu.matmul %360, %12, %cst_88 {dimension_numbers = #tpu.dot_dimension_numbers<[1], [0], [0], [1], [0, 0, 1, 1], [], []>} : vector<2x32xf32>, vector<32x96xf32>, vector<2x96xf32> -> vector<2x96xf32>
    %cst_89 = arith.constant dense<0.000000e+00> : vector<2x96xf32>
    %362 = tpu.matmul %333, %2, %cst_89 {dimension_numbers = #tpu.dot_dimension_numbers<[1], [0], [0], [1], [0, 0, 1, 1], [], []>} : vector<2x32xf32>, vector<32x96xf32>, vector<2x96xf32> -> vector<2x96xf32>
    %363 = vector.broadcast %4 : vector<1x96xf32> to vector<2x96xf32>
    %364 = arith.addf %362, %363 : vector<2x96xf32>
    %365 = vector.extract_strided_slice %361 {offsets = [0, 0], sizes = [2, 32], strides = [1, 1]} : vector<2x96xf32> to vector<2x32xf32>
    %366 = vector.extract_strided_slice %364 {offsets = [0, 0], sizes = [2, 32], strides = [1, 1]} : vector<2x96xf32> to vector<2x32xf32>
    %367 = arith.addf %365, %366 : vector<2x32xf32>
    %368 = arith.negf %367 : vector<2x32xf32>
    %369 = math.exp %368 : vector<2x32xf32>
    %cst_90 = arith.constant 1.000000e+00 : f32
    %370 = vector.broadcast %cst_90 : f32 to vector<2x32xf32>
    %371 = arith.addf %370, %369 : vector<2x32xf32>
    %372 = arith.divf %370, %371 : vector<2x32xf32>
    %373 = vector.extract_strided_slice %361 {offsets = [0, 32], sizes = [2, 32], strides = [1, 1]} : vector<2x96xf32> to vector<2x32xf32>
    %374 = vector.extract_strided_slice %364 {offsets = [0, 32], sizes = [2, 32], strides = [1, 1]} : vector<2x96xf32> to vector<2x32xf32>
    %375 = arith.addf %373, %374 : vector<2x32xf32>
    %376 = arith.negf %375 : vector<2x32xf32>
    %377 = math.exp %376 : vector<2x32xf32>
    %cst_91 = arith.constant 1.000000e+00 : f32
    %378 = vector.broadcast %cst_91 : f32 to vector<2x32xf32>
    %379 = arith.addf %378, %377 : vector<2x32xf32>
    %380 = arith.divf %378, %379 : vector<2x32xf32>
    %381 = vector.extract_strided_slice %361 {offsets = [0, 64], sizes = [2, 32], strides = [1, 1]} : vector<2x96xf32> to vector<2x32xf32>
    %382 = vector.extract_strided_slice %364 {offsets = [0, 64], sizes = [2, 32], strides = [1, 1]} : vector<2x96xf32> to vector<2x32xf32>
    %383 = arith.mulf %372, %382 : vector<2x32xf32>
    %384 = arith.addf %381, %383 : vector<2x32xf32>
    %385 = math.tanh %384 : vector<2x32xf32>
    %cst_92 = arith.constant 1.000000e+00 : f32
    %386 = vector.broadcast %cst_92 : f32 to vector<2x32xf32>
    %387 = arith.subf %386, %380 : vector<2x32xf32>
    %388 = arith.mulf %387, %385 : vector<2x32xf32>
    %389 = arith.mulf %380, %333 : vector<2x32xf32>
    %390 = arith.addf %388, %389 : vector<2x32xf32>
    %cst_93 = arith.constant dense<0.000000e+00> : vector<2x32xf32>
    %391 = tpu.matmul %390, %5, %cst_93 {dimension_numbers = #tpu.dot_dimension_numbers<[1], [0], [0], [1], [0, 0, 1, 1], [], []>} : vector<2x32xf32>, vector<32x32xf32>, vector<2x32xf32> -> vector<2x32xf32>
    %392 = vector.broadcast %6 : vector<1x32xf32> to vector<2x32xf32>
    %393 = arith.addf %391, %392 : vector<2x32xf32>
    %cst_94 = arith.constant dense<0xFF800000> : vector<2xf32>
    %394 = vector.multi_reduction <maximumf>, %393, %cst_94 [1] : vector<2x32xf32> to vector<2xf32>
    %395 = vector.shape_cast %394 : vector<2xf32> to vector<2x1xf32>
    %396 = vector.broadcast %395 : vector<2x1xf32> to vector<2x32xf32>
    %397 = arith.subf %393, %396 : vector<2x32xf32>
    %398 = math.exp %397 : vector<2x32xf32>
    %cst_95 = arith.constant dense<0.000000e+00> : vector<2xf32>
    %399 = vector.multi_reduction <add>, %398, %cst_95 [1] : vector<2x32xf32> to vector<2xf32>
    %400 = vector.shape_cast %399 : vector<2xf32> to vector<2x1xf32>
    %401 = math.log %400 : vector<2x1xf32>
    %402 = arith.addf %395, %401 : vector<2x1xf32>
    %403 = vector.broadcast %402 : vector<2x1xf32> to vector<2x32xf32>
    %404 = arith.subf %393, %403 : vector<2x32xf32>
    %c6 = arith.constant 6 : index
    %c0_96 = arith.constant 0 : index
    %c0_97 = arith.constant 0 : index
    %405 = vector.load %arg8[%c6, %c0_96, %c0_97] : memref<8x2x32xf32, #tpu.memory_space<vmem>>, vector<1x2x32xf32>
    %406 = vector.shape_cast %405 : vector<1x2x32xf32> to vector<2x32xf32>
    %407 = vector.shape_cast %404 : vector<2x32xf32> to vector<1x2x32xf32>
    tpu.vector_store %arg8[%c6, %c0_96, %c0_97], %407 {strides = array<i32>} : memref<8x2x32xf32, #tpu.memory_space<vmem>>, vector<1x2x32xf32>,
    %408 = vector.broadcast %395 : vector<2x1xf32> to vector<2x32xf32>
    %409 = arith.cmpf oeq, %393, %408 : vector<2x32xf32>
    %c32_i32_98 = arith.constant 32 : i32
    %410 = vector.broadcast %c32_i32_98 : i32 to vector<2x32xi32>
    %411 = arith.select %409, %13, %410 : vector<2x32xi1>, vector<2x32xi32>
    %cst_99 = arith.constant dense<2147483647> : vector<2xi32>
    %412 = vector.multi_reduction <minsi>, %411, %cst_99 [1] : vector<2x32xi32> to vector<2xi32>
    %413 = vector.shape_cast %412 : vector<2xi32> to vector<2x1xi32>
    %414 = vector.broadcast %413 : vector<2x1xi32> to vector<2x32xi32>
    %415 = arith.cmpi eq, %13, %414 : vector<2x32xi32>
    %416 = arith.extui %415 : vector<2x32xi1> to vector<2x32xi32>
    %417 = arith.sitofp %416 : vector<2x32xi32> to vector<2x32xf32>
    %cst_100 = arith.constant dense<0.000000e+00> : vector<2x96xf32>
    %418 = tpu.matmul %417, %12, %cst_100 {dimension_numbers = #tpu.dot_dimension_numbers<[1], [0], [0], [1], [0, 0, 1, 1], [], []>} : vector<2x32xf32>, vector<32x96xf32>, vector<2x96xf32> -> vector<2x96xf32>
    %cst_101 = arith.constant dense<0.000000e+00> : vector<2x96xf32>
    %419 = tpu.matmul %390, %2, %cst_101 {dimension_numbers = #tpu.dot_dimension_numbers<[1], [0], [0], [1], [0, 0, 1, 1], [], []>} : vector<2x32xf32>, vector<32x96xf32>, vector<2x96xf32> -> vector<2x96xf32>
    %420 = vector.broadcast %4 : vector<1x96xf32> to vector<2x96xf32>
    %421 = arith.addf %419, %420 : vector<2x96xf32>
    %422 = vector.extract_strided_slice %418 {offsets = [0, 0], sizes = [2, 32], strides = [1, 1]} : vector<2x96xf32> to vector<2x32xf32>
    %423 = vector.extract_strided_slice %421 {offsets = [0, 0], sizes = [2, 32], strides = [1, 1]} : vector<2x96xf32> to vector<2x32xf32>
    %424 = arith.addf %422, %423 : vector<2x32xf32>
    %425 = arith.negf %424 : vector<2x32xf32>
    %426 = math.exp %425 : vector<2x32xf32>
    %cst_102 = arith.constant 1.000000e+00 : f32
    %427 = vector.broadcast %cst_102 : f32 to vector<2x32xf32>
    %428 = arith.addf %427, %426 : vector<2x32xf32>
    %429 = arith.divf %427, %428 : vector<2x32xf32>
    %430 = vector.extract_strided_slice %418 {offsets = [0, 32], sizes = [2, 32], strides = [1, 1]} : vector<2x96xf32> to vector<2x32xf32>
    %431 = vector.extract_strided_slice %421 {offsets = [0, 32], sizes = [2, 32], strides = [1, 1]} : vector<2x96xf32> to vector<2x32xf32>
    %432 = arith.addf %430, %431 : vector<2x32xf32>
    %433 = arith.negf %432 : vector<2x32xf32>
    %434 = math.exp %433 : vector<2x32xf32>
    %cst_103 = arith.constant 1.000000e+00 : f32
    %435 = vector.broadcast %cst_103 : f32 to vector<2x32xf32>
    %436 = arith.addf %435, %434 : vector<2x32xf32>
    %437 = arith.divf %435, %436 : vector<2x32xf32>
    %438 = vector.extract_strided_slice %418 {offsets = [0, 64], sizes = [2, 32], strides = [1, 1]} : vector<2x96xf32> to vector<2x32xf32>
    %439 = vector.extract_strided_slice %421 {offsets = [0, 64], sizes = [2, 32], strides = [1, 1]} : vector<2x96xf32> to vector<2x32xf32>
    %440 = arith.mulf %429, %439 : vector<2x32xf32>
    %441 = arith.addf %438, %440 : vector<2x32xf32>
    %442 = math.tanh %441 : vector<2x32xf32>
    %cst_104 = arith.constant 1.000000e+00 : f32
    %443 = vector.broadcast %cst_104 : f32 to vector<2x32xf32>
    %444 = arith.subf %443, %437 : vector<2x32xf32>
    %445 = arith.mulf %444, %442 : vector<2x32xf32>
    %446 = arith.mulf %437, %390 : vector<2x32xf32>
    %447 = arith.addf %445, %446 : vector<2x32xf32>
    %cst_105 = arith.constant dense<0.000000e+00> : vector<2x32xf32>
    %448 = tpu.matmul %447, %5, %cst_105 {dimension_numbers = #tpu.dot_dimension_numbers<[1], [0], [0], [1], [0, 0, 1, 1], [], []>} : vector<2x32xf32>, vector<32x32xf32>, vector<2x32xf32> -> vector<2x32xf32>
    %449 = vector.broadcast %6 : vector<1x32xf32> to vector<2x32xf32>
    %450 = arith.addf %448, %449 : vector<2x32xf32>
    %cst_106 = arith.constant dense<0xFF800000> : vector<2xf32>
    %451 = vector.multi_reduction <maximumf>, %450, %cst_106 [1] : vector<2x32xf32> to vector<2xf32>
    %452 = vector.shape_cast %451 : vector<2xf32> to vector<2x1xf32>
    %453 = vector.broadcast %452 : vector<2x1xf32> to vector<2x32xf32>
    %454 = arith.subf %450, %453 : vector<2x32xf32>
    %455 = math.exp %454 : vector<2x32xf32>
    %cst_107 = arith.constant dense<0.000000e+00> : vector<2xf32>
    %456 = vector.multi_reduction <add>, %455, %cst_107 [1] : vector<2x32xf32> to vector<2xf32>
    %457 = vector.shape_cast %456 : vector<2xf32> to vector<2x1xf32>
    %458 = math.log %457 : vector<2x1xf32>
    %459 = arith.addf %452, %458 : vector<2x1xf32>
    %460 = vector.broadcast %459 : vector<2x1xf32> to vector<2x32xf32>
    %461 = arith.subf %450, %460 : vector<2x32xf32>
    %c7 = arith.constant 7 : index
    %c0_108 = arith.constant 0 : index
    %c0_109 = arith.constant 0 : index
    %462 = vector.load %arg8[%c7, %c0_108, %c0_109] : memref<8x2x32xf32, #tpu.memory_space<vmem>>, vector<1x2x32xf32>
    %463 = vector.shape_cast %462 : vector<1x2x32xf32> to vector<2x32xf32>
    %464 = vector.shape_cast %461 : vector<2x32xf32> to vector<1x2x32xf32>
    tpu.vector_store %arg8[%c7, %c0_108, %c0_109], %464 {strides = array<i32>} : memref<8x2x32xf32, #tpu.memory_space<vmem>>, vector<1x2x32xf32>,
    %c0_110 = arith.constant 0 : index
    %c0_111 = arith.constant 0 : index
    %465 = vector.load %arg9[%c0_110, %c0_111] : memref<2x32xf32, #tpu.memory_space<vmem>>, vector<2x32xf32>
    tpu.vector_store %arg9[%c0_110, %c0_111], %447 {strides = array<i32>} : memref<2x32xf32, #tpu.memory_space<vmem>>, vector<2x32xf32>,
    return
  }
}

</mosaic_0001>

<llo_original>
// kernel: tpu_custom_call.1
$region0: #{tpu_custom_call.1}
  #allocation0 [shape = 'u32[]', space=smem, size = 0x4, offset = 0x4, fixed_abs, tag = 'smem constant byte address 0x4 - core index']
  #allocation1 [shape = 'u32[144,128]{1,0:T(1,128)}', space=vmem, size = 0x12000, scoped, tag = 'internal scratch']
  %s0 = inlined_call_operand.vmem [shape: f32[32,16], index: 0, kind: input, shape index: {}]
  %s1 = inlined_call_operand.hbm [shape: f32[16,96], index: 1, kind: input, shape index: {}]
  %s2 = inlined_call_operand.vmem [shape: f32[32,96], index: 2, kind: input, shape index: {}]
  %s3 = inlined_call_operand.hbm [shape: f32[1,96], index: 3, kind: input, shape index: {}]
  %s4 = inlined_call_operand.hbm [shape: f32[1,96], index: 4, kind: input, shape index: {}]
  %s5 = inlined_call_operand.vmem [shape: f32[32,32], index: 5, kind: input, shape index: {}]
  %s6 = inlined_call_operand.vmem [shape: f32[1,32], index: 6, kind: input, shape index: {}]
  %s7 = inlined_call_operand.vmem [shape: f32[2,32], index: 7, kind: input, shape index: {}]
  %s8 = inlined_call_operand.hbm [shape: f32[8,2,32], index: 8, kind: output, shape index: {0}]
  %s9 = inlined_call_operand.hbm [shape: f32[2,32], index: 9, kind: output, shape index: {1}]
  %10 = xla_tuple %s8, %s9
  %s11 = sld [smem:[#allocation0]]
  $region62: #{tpu_custom_call.1} parent=0
    _
  %s13 = ssub.s32 1, %s11
  %s14 = scalar_select 0, %s13, %s11
  $region1: #{tpu_custom_call.1} parent=0
    #allocation2 [shape = 'u8[8192]{0}', space=vmem, size = 0x2000, scoped, tag = 'input window, operand 1, single buffered']
    #allocation3 [shape = 's32[1]{0}', space=sflag, size = 0x4, scoped, tag = 'scoped memory for tpu_custom_call.1']
    #allocation4 [shape = 's32[1]{0}', space=sflag, size = 0x4, scoped, tag = 'scoped memory for tpu_custom_call.1']
    #allocation5 [shape = 'u8[512]{0}', space=vmem, size = 0x400, scoped, tag = 'input window, operand 3, single buffered']
    #allocation6 [shape = 's32[1]{0}', space=sflag, size = 0x4, scoped, tag = 'scoped memory for tpu_custom_call.1']
    #allocation7 [shape = 'u8[512]{0}', space=vmem, size = 0x400, scoped, tag = 'input window, operand 4, single buffered']
    #allocation8 [shape = 'u8[8192]{0}', space=vmem, size = 0x2000, scoped, tag = 'output window, operand 0, single buffered']
    #allocation9 [shape = 'u8[1024]{0}', space=vmem, size = 0x400, scoped, tag = 'output window, operand 1, single buffered']
    #allocation10 [shape = 's32[1]{0}', space=sflag, size = 0x4, scoped, tag = 'scoped memory for tpu_custom_call.1']
    %15 = vsyncpa [#allocation3], 0
    %16 = vsyncpa [#allocation6], 0
    %17 = vsyncpa [#allocation4], 0
    %18 = vsyncpa [#allocation10], 0
    // Predicated region
    $region2: #{tpu_custom_call.1} parent=1 // pred_check
      _
    $region3: #{tpu_custom_call.1} parent=1 // pred_check_branch
      %20 = sbr.rel (0) target = $region5
    $region4: #{tpu_custom_call.1} parent=1 // pred_region
      _
    $region5: #{tpu_custom_call.1} parent=1 // pred_fallthru
      _
    // Predicated region
    $region6: #{tpu_custom_call.1} parent=1 // pred_check
      _
    $region7: #{tpu_custom_call.1} parent=1 // pred_check_branch
      %22 = sbr.rel (0) target = $region9
    $region8: #{tpu_custom_call.1} parent=1 // pred_region
      %s24 = ssub.s32 256, 256
      %25 = vsyncadd [#allocation3], %s24
      %s26 = sshll.u32 [#allocation2], 4
      %s27 = int_to_ptr.vmem [resolvable:$true] %s26
      %32 = dma.hbm_to_vmem [thread:$0]  %s1, 256, %s27, [#allocation3], 128, 128, 8
    $region9: #{tpu_custom_call.1} parent=1 // pred_fallthru
      _
    // Predicated region
    $region10: #{tpu_custom_call.1} parent=1 // pred_check
      _
    $region11: #{tpu_custom_call.1} parent=1 // pred_check_branch
      %34 = sbr.rel (0) target = $region13
    $region12: #{tpu_custom_call.1} parent=1 // pred_region
      _
    $region13: #{tpu_custom_call.1} parent=1 // pred_fallthru
      _
    // Predicated region
    $region14: #{tpu_custom_call.1} parent=1 // pred_check
      _
    $region15: #{tpu_custom_call.1} parent=1 // pred_check_branch
      %36 = sbr.rel (0) target = $region17
    $region16: #{tpu_custom_call.1} parent=1 // pred_region
      %s38 = ssub.s32 16, 16
      %39 = vsyncadd [#allocation6], %s38
      %s41 = sshll.u32 [#allocation5], 4
      %s42 = int_to_ptr.vmem [resolvable:$true] %s41
      %44 = dma.hbm_to_vmem [thread:$0]  %s3, 16, %s42, [#allocation6]
    $region17: #{tpu_custom_call.1} parent=1 // pred_fallthru
      _
    // Predicated region
    $region18: #{tpu_custom_call.1} parent=1 // pred_check
      _
    $region19: #{tpu_custom_call.1} parent=1 // pred_check_branch
      %46 = sbr.rel (0) target = $region21
    $region20: #{tpu_custom_call.1} parent=1 // pred_region
      %s48 = ssub.s32 16, 16
      %49 = vsyncadd [#allocation6], %s48
      %s51 = sshll.u32 [#allocation7], 4
      %s52 = int_to_ptr.vmem [resolvable:$true] %s51
      %54 = dma.hbm_to_vmem [thread:$0]  %s4, 16, %s52, [#allocation6]
    $region21: #{tpu_custom_call.1} parent=1 // pred_fallthru
      _
    // Predicated region
    $region22: #{tpu_custom_call.1} parent=1 // pred_check
      _
    $region23: #{tpu_custom_call.1} parent=1 // pred_check_branch
      %56 = sbr.rel (0) target = $region25
    $region24: #{tpu_custom_call.1} parent=1 // pred_region
      _
    $region25: #{tpu_custom_call.1} parent=1 // pred_fallthru
      _
    // Predicated region
    $region26: #{tpu_custom_call.1} parent=1 // pred_check
      _
    $region27: #{tpu_custom_call.1} parent=1 // pred_check_branch
      %58 = sbr.rel (0) target = $region29
    $region28: #{tpu_custom_call.1} parent=1 // pred_region
      _
    $region29: #{tpu_custom_call.1} parent=1 // pred_fallthru
      _
    // Predicated region
    $region30: #{tpu_custom_call.1} parent=1 // pred_check
      _
    $region31: #{tpu_custom_call.1} parent=1 // pred_check_branch
      %60 = sbr.rel (0) target = $region33
    $region32: #{tpu_custom_call.1} parent=1 // pred_region
      _
    $region33: #{tpu_custom_call.1} parent=1 // pred_fallthru
      _
    // Predicated region
    $region34: #{tpu_custom_call.1} parent=1 // pred_check
      _
    $region35: #{tpu_custom_call.1} parent=1 // pred_check_branch
      %62 = sbr.rel (0) target = $region37
    $region36: #{tpu_custom_call.1} parent=1 // pred_region
      %63 = dma.done [#allocation3], 256
    $region37: #{tpu_custom_call.1} parent=1 // pred_fallthru
      _
    // Predicated region
    $region38: #{tpu_custom_call.1} parent=1 // pred_check
      _
    $region39: #{tpu_custom_call.1} parent=1 // pred_check_branch
      %65 = sbr.rel (0) target = $region41
    $region40: #{tpu_custom_call.1} parent=1 // pred_region
      %66 = dma.done [#allocation6], 16
    $region41: #{tpu_custom_call.1} parent=1 // pred_fallthru
      _
    // Predicated region
    $region42: #{tpu_custom_call.1} parent=1 // pred_check
      _
    $region43: #{tpu_custom_call.1} parent=1 // pred_check_branch
      %68 = sbr.rel (0) target = $region45
    $region44: #{tpu_custom_call.1} parent=1 // pred_region
      %69 = dma.done [#allocation6], 16
    $region45: #{tpu_custom_call.1} parent=1 // pred_fallthru
      _
    %v70 = vld [vmem:[%s0] sm:$0xff]
    %v71 = vld [vmem:[%s0 + $0x8] sm:$0xff]
    %v72 = vld [vmem:[%s0 + $0x10] sm:$0xff]
    %v73 = vld [vmem:[%s0 + $0x18] sm:$0xff]
    %v74 = vld [vmem:[#allocation2] sm:$0xff]
    %v75 = vld [vmem:[#allocation2 + $0x8] sm:$0xff]
    %v76 = vld [vmem:[%s2] sm:$0xff]
    %v77 = vld [vmem:[%s2 + $0x8] sm:$0xff]
    %v78 = vld [vmem:[%s2 + $0x10] sm:$0xff]
    %v79 = vld [vmem:[%s2 + $0x18] sm:$0xff]
    %v80 = vld [vmem:[#allocation5] sm:$0x1]
    %v81 = vld [vmem:[#allocation7] sm:$0x1]
    %v82 = vld [vmem:[%s5] sm:$0xff]
    %v83 = vld [vmem:[%s5 + $0x8] sm:$0xff]
    %v84 = vld [vmem:[%s5 + $0x10] sm:$0xff]
    %v85 = vld [vmem:[%s5 + $0x18] sm:$0xff]
    %v86 = vld [vmem:[%s6] sm:$0x1]
    %v87 = vld [vmem:[%s7] sm:$0x3]
    %v88 = vmax.f32 %v70, 0.0
    %v89 = vmax.f32 %v71, 0.0
    %v90 = vmax.f32 %v72, 0.0
    %v91 = vmax.f32 %v73, 0.0
    %v93 = vlaneseq
    %v94 = vshrl.u32 %v93, 7
    %v95 = vsub.s32 0, %v94
    %v96 = vrot.slane %v80, %v95
    %vm98 = vcmask 130048
    %v100 = vsel %vm98, %v88, 0
    %v103 = vsel %vm98, %v89, 0
    %v106 = vsel %vm98, %v90, 0
    %v109 = vsel %vm98, %v91, 0
    %111 = vmatprep.subr.mxu0 0.0
    %112 = vmatpush1.msra.mxu0 %v74
    %113 = vmatprep.subr.mxu0 0.0
    %114 = vmatpush1.msra.mxu0 %v75
    %115 = vmatprep.subr.mxu0 0.0
    %116 = vmatpush1.msra.mxu0 0.0
    %117 = vmatprep.subr.mxu0 0.0
    %118 = vmatpush1.msra.mxu0 0.0
    %119 = vmatprep.subr.mxu0 0.0
    %120 = vmatpush1.msra.mxu0 0.0
    %121 = vmatprep.subr.mxu0 0.0
    %122 = vmatpush1.msra.mxu0 0.0
    %123 = vmatprep.subr.mxu0 0.0
    %124 = vmatpush1.msra.mxu0 0.0
    %125 = vmatprep.subr.mxu0 0.0
    %126 = vmatpush1.msra.mxu0 0.0
    %127 = vmatprep.subr.mxu0 0.0
    %128 = vmatpush1.msra.mxu0 0.0
    %129 = vmatprep.subr.mxu0 0.0
    %130 = vmatpush1.msra.mxu0 0.0
    %131 = vmatprep.subr.mxu0 0.0
    %132 = vmatpush1.msra.mxu0 0.0
    %133 = vmatprep.subr.mxu0 0.0
    %134 = vmatpush1.msra.mxu0 0.0
    %135 = vmatprep.subr.mxu0 0.0
    %136 = vmatpush1.msra.mxu0 0.0
    %137 = vmatprep.subr.mxu0 0.0
    %138 = vmatpush1.msra.mxu0 0.0
    %139 = vmatprep.subr.mxu0 0.0
    %140 = vmatpush1.msra.mxu0 0.0
    %141 = vmatprep.subr.mxu0 0.0
    %142 = vmatpush1.msra.mxu0 0.0
    %143 = vmatprep.subr.mxu0 0.0
    %144 = vmatpush1.msra.mxu0 0.0
    %145 = vmatprep.subr.mxu0 0.0
    %146 = vmatpush1.msra.mxu0 0.0
    %147 = vmatprep.subr.mxu0 0.0
    %148 = vmatpush1.msra.mxu0 0.0
    %149 = vmatprep.subr.mxu0 0.0
    %150 = vmatpush1.msra.mxu0 0.0
    %151 = vmatprep.subr.mxu0 0.0
    %152 = vmatpush1.msra.mxu0 0.0
    %153 = vmatprep.subr.mxu0 0.0
    %154 = vmatpush1.msra.mxu0 0.0
    %155 = vmatprep.subr.mxu0 0.0
    %156 = vmatpush1.msra.mxu0 0.0
    %157 = vmatprep.subr.mxu0 0.0
    %158 = vmatpush1.msra.mxu0 0.0
    %159 = vmatprep.subr.mxu0 0.0
    %160 = vmatpush1.msra.mxu0 0.0
    %161 = vmatprep.subr.mxu0 0.0
    %162 = vmatpush1.msra.mxu0 0.0
    %163 = vmatprep.subr.mxu0 0.0
    %164 = vmatpush1.msra.mxu0 0.0
    %165 = vmatprep.subr.mxu0 0.0
    %166 = vmatpush1.msra.mxu0 0.0
    %167 = vmatprep.subr.mxu0 0.0
    %168 = vmatpush1.msra.mxu0 0.0
    %169 = vmatprep.subr.mxu0 0.0
    %170 = vmatpush1.msra.mxu0 0.0
    %171 = vmatprep.subr.mxu0 0.0
    %172 = vmatpush1.msra.mxu0 0.0
    %173 = vmatprep.subr.mxu0 0.0
    %174 = vmatpush1.msra.mxu0 0.0
    %175 = vmatprep.mubr.f32.mxu0 0.0
    %176 = vmatmul.mubr.f32.gmra.mrb[0].mxu0 %v100
    %v177 = vpop.f32.mrb[0].mxu0
    %v178 = vadd.f32 %v96, %v177
    %v179 = vpop.f32.mrb[0].mxu0
    %180 = vmatprep.mubr.f32.mxu0 0.0
    %181 = vmatmul.mubr.f32.gmra.mrb[0].mxu0 %v103
    %v182 = vpop.f32.mrb[0].mxu0
    %v183 = vadd.f32 %v96, %v182
    %v184 = vpop.f32.mrb[0].mxu0
    %185 = vmatprep.mubr.f32.mxu0 0.0
    %186 = vmatmul.mubr.f32.gmra.mrb[0].mxu0 %v106
    %v187 = vpop.f32.mrb[0].mxu0
    %v188 = vadd.f32 %v96, %v187
    %v189 = vpop.f32.mrb[0].mxu0
    %190 = vmatprep.mubr.f32.mxu0 0.0
    %191 = vmatmul.mubr.f32.gmra.mrb[0].mxu0 %v109
    %v192 = vpop.f32.mrb[0].mxu0
    %v193 = vadd.f32 %v96, %v192
    %v194 = vpop.f32.mrb[0].mxu0
    %195 = vdwg.mxu0
    %v196 = vlaneseq
    %v197 = vand.u32 %v196, 127
    %vm198 = vcmp.eq.s32.totalorder %v197, 0
    %v199 = vsel %vm198, 1, 0
    %v200 = vcvt.s32.f32 %v199
    %vm201 = vcmask 261120
    %v203 = vsel %vm201, %v200, 0
    %205 = vmatprep.subr.mxu0 0.0
    %206 = vmatpush1.msra.mxu0 %v178
    %207 = vmatprep.subr.mxu0 0.0
    %208 = vmatpush1.msra.mxu0 %v183
    %209 = vmatprep.subr.mxu0 0.0
    %210 = vmatpush1.msra.mxu0 %v188
    %211 = vmatprep.subr.mxu0 0.0
    %212 = vmatpush1.msra.mxu0 %v193
    %213 = vmatprep.subr.mxu0 0.0
    %214 = vmatpush1.msra.mxu0 0.0
    %215 = vmatprep.subr.mxu0 0.0
    %216 = vmatpush1.msra.mxu0 0.0
    %217 = vmatprep.subr.mxu0 0.0
    %218 = vmatpush1.msra.mxu0 0.0
    %219 = vmatprep.subr.mxu0 0.0
    %220 = vmatpush1.msra.mxu0 0.0
    %221 = vmatprep.subr.mxu0 0.0
    %222 = vmatpush1.msra.mxu0 0.0
    %223 = vmatprep.subr.mxu0 0.0
    %224 = vmatpush1.msra.mxu0 0.0
    %225 = vmatprep.subr.mxu0 0.0
    %226 = vmatpush1.msra.mxu0 0.0
    %227 = vmatprep.subr.mxu0 0.0
    %228 = vmatpush1.msra.mxu0 0.0
    %229 = vmatprep.subr.mxu0 0.0
    %230 = vmatpush1.msra.mxu0 0.0
    %231 = vmatprep.subr.mxu0 0.0
    %232 = vmatpush1.msra.mxu0 0.0
    %233 = vmatprep.subr.mxu0 0.0
    %234 = vmatpush1.msra.mxu0 0.0
    %235 = vmatprep.subr.mxu0 0.0
    %236 = vmatpush1.msra.mxu0 0.0
    %237 = vmatprep.subr.mxu0 0.0
    %238 = vmatpush1.msra.mxu0 0.0
    %239 = vmatprep.subr.mxu0 0.0
    %240 = vmatpush1.msra.mxu0 0.0
    %241 = vmatprep.subr.mxu0 0.0
    %242 = vmatpush1.msra.mxu0 0.0
    %243 = vmatprep.subr.mxu0 0.0
    %244 = vmatpush1.msra.mxu0 0.0
    %245 = vmatprep.subr.mxu0 0.0
    %246 = vmatpush1.msra.mxu0 0.0
    %247 = vmatprep.subr.mxu0 0.0
    %248 = vmatpush1.msra.mxu0 0.0
    %249 = vmatprep.subr.mxu0 0.0
    %250 = vmatpush1.msra.mxu0 0.0
    %251 = vmatprep.subr.mxu0 0.0
    %252 = vmatpush1.msra.mxu0 0.0
    %253 = vmatprep.subr.mxu0 0.0
    %254 = vmatpush1.msra.mxu0 0.0
    %255 = vmatprep.subr.mxu0 0.0
    %256 = vmatpush1.msra.mxu0 0.0
    %257 = vmatprep.subr.mxu0 0.0
    %258 = vmatpush1.msra.mxu0 0.0
    %259 = vmatprep.subr.mxu0 0.0
    %260 = vmatpush1.msra.mxu0 0.0
    %261 = vmatprep.subr.mxu0 0.0
    %262 = vmatpush1.msra.mxu0 0.0
    %263 = vmatprep.subr.mxu0 0.0
    %264 = vmatpush1.msra.mxu0 0.0
    %265 = vmatprep.subr.mxu0 0.0
    %266 = vmatpush1.msra.mxu0 0.0
    %267 = vmatprep.subr.mxu0 0.0
    %268 = vmatpush1.msra.mxu0 0.0
    %269 = vmatprep.mubr.f32.mxu0 0.0
    %270 = vmatmul.mubr.f32.gmra.mrb[0].mxu0 %v203
    %v271 = vpop.f32.mrb[0].mxu0
    %v272 = vadd.f32 0.0, %v271
    %v273 = vpop.f32.mrb[0].mxu0
    %274 = vdwg.mxu0
    %v276 = vlaneseq
    %v277 = vshrl.u32 %v276, 7
    %v278 = vsub.s32 0, %v277
    %v279 = vrot.slane %v81, %v278
    %v282 = vsel %vm201, %v87, 0
    %284 = vmatprep.subr.mxu0 0.0
    %285 = vmatpush1.msra.mxu0 %v76
    %286 = vmatprep.subr.mxu0 0.0
    %287 = vmatpush1.msra.mxu0 %v77
    %288 = vmatprep.subr.mxu0 0.0
    %289 = vmatpush1.msra.mxu0 %v78
    %290 = vmatprep.subr.mxu0 0.0
    %291 = vmatpush1.msra.mxu0 %v79
    %292 = vmatprep.subr.mxu0 0.0
    %293 = vmatpush1.msra.mxu0 0.0
    %294 = vmatprep.subr.mxu0 0.0
    %295 = vmatpush1.msra.mxu0 0.0
    %296 = vmatprep.subr.mxu0 0.0
    %297 = vmatpush1.msra.mxu0 0.0
    %298 = vmatprep.subr.mxu0 0.0
    %299 = vmatpush1.msra.mxu0 0.0
    %300 = vmatprep.subr.mxu0 0.0
    %301 = vmatpush1.msra.mxu0 0.0
    %302 = vmatprep.subr.mxu0 0.0
    %303 = vmatpush1.msra.mxu0 0.0
    %304 = vmatprep.subr.mxu0 0.0
    %305 = vmatpush1.msra.mxu0 0.0
    %306 = vmatprep.subr.mxu0 0.0
    %307 = vmatpush1.msra.mxu0 0.0
    %308 = vmatprep.subr.mxu0 0.0
    %309 = vmatpush1.msra.mxu0 0.0
    %310 = vmatprep.subr.mxu0 0.0
    %311 = vmatpush1.msra.mxu0 0.0
    %312 = vmatprep.subr.mxu0 0.0
    %313 = vmatpush1.msra.mxu0 0.0
    %314 = vmatprep.subr.mxu0 0.0
    %315 = vmatpush1.msra.mxu0 0.0
    %316 = vmatprep.subr.mxu0 0.0
    %317 = vmatpush1.msra.mxu0 0.0
    %318 = vmatprep.subr.mxu0 0.0
    %319 = vmatpush1.msra.mxu0 0.0
    %320 = vmatprep.subr.mxu0 0.0
    %321 = vmatpush1.msra.mxu0 0.0
    %322 = vmatprep.subr.mxu0 0.0
    %323 = vmatpush1.msra.mxu0 0.0
    %324 = vmatprep.subr.mxu0 0.0
    %325 = vmatpush1.msra.mxu0 0.0
    %326 = vmatprep.subr.mxu0 0.0
    %327 = vmatpush1.msra.mxu0 0.0
    %328 = vmatprep.subr.mxu0 0.0
    %329 = vmatpush1.msra.mxu0 0.0
    %330 = vmatprep.subr.mxu0 0.0
    %331 = vmatpush1.msra.mxu0 0.0
    %332 = vmatprep.subr.mxu0 0.0
    %333 = vmatpush1.msra.mxu0 0.0
    %334 = vmatprep.subr.mxu0 0.0
    %335 = vmatpush1.msra.mxu0 0.0
    %336 = vmatprep.subr.mxu0 0.0
    %337 = vmatpush1.msra.mxu0 0.0
    %338 = vmatprep.subr.mxu0 0.0
    %339 = vmatpush1.msra.mxu0 0.0
    %340 = vmatprep.subr.mxu0 0.0
    %341 = vmatpush1.msra.mxu0 0.0
    %342 = vmatprep.subr.mxu0 0.0
    %343 = vmatpush1.msra.mxu0 0.0
    %344 = vmatprep.subr.mxu0 0.0
    %345 = vmatpush1.msra.mxu0 0.0
    %346 = vmatprep.subr.mxu0 0.0
    %347 = vmatpush1.msra.mxu0 0.0
    %348 = vmatprep.mubr.f32.mxu0 0.0
    %349 = vmatmul.mubr.f32.gmra.mrb[0].mxu0 %v282
    %v350 = vpop.f32.mrb[0].mxu0
    %v351 = vadd.f32 %v279, %v350
    %v352 = vpop.f32.mrb[0].mxu0
    %353 = vdwg.mxu0
    %v354 = vadd.f32 %v272, %v351
    %v355 = vxor.u32 %v354, 2147483648
    %v356 = vmul.f32 %v355, 1.442695
    %v357 = vpow.pop %v356
    %v358 = vadd.f32 %v357, 1.0
    %v359 = vrcp.pop %v358
    %v360 = vmul.f32 1.0, %v359
    %362 = vrot.lane.b32.xlu0 %v351, 64
    %v363 = vpop.permute.xlu0 %362
    %v365 = vmul.f32 %v360, %v363
    %367 = vrot.lane.b32.xlu0 %v365, 64
    %v368 = vpop.permute.xlu0 %367
    %v370 = vadd.f32 %v272, %v368
    %v371 = vtanh.pop %v370
    %v372 = vsub.f32 1.0, %v360
    %374 = vrot.lane.b32.xlu0 %v371, 96
    %v375 = vpop.permute.xlu0 %374
    %v377 = vmul.f32 %v372, %v375
    %378 = vrot.lane.b32.xlu0 %v87, 32
    %v379 = vpop.permute.xlu0 %378
    %v381 = vmul.f32 %v360, %v379
    %v382 = vadd.f32 %v377, %v381
    %v384 = vlaneseq
    %v385 = vshrl.u32 %v384, 7
    %v386 = vsub.s32 0, %v385
    %v387 = vrot.slane %v86, %v386
    %390 = vrot.lane.b32.xlu0 %v382, 96
    %v391 = vpop.permute.xlu0 %390
    %v392 = vsel %vm201, %v391, 0
    %394 = vmatprep.subr.mxu0 0.0
    %395 = vmatpush1.msra.mxu0 %v82
    %396 = vmatprep.subr.mxu0 0.0
    %397 = vmatpush1.msra.mxu0 %v83
    %398 = vmatprep.subr.mxu0 0.0
    %399 = vmatpush1.msra.mxu0 %v84
    %400 = vmatprep.subr.mxu0 0.0
    %401 = vmatpush1.msra.mxu0 %v85
    %402 = vmatprep.subr.mxu0 0.0
    %403 = vmatpush1.msra.mxu0 0.0
    %404 = vmatprep.subr.mxu0 0.0
    %405 = vmatpush1.msra.mxu0 0.0
    %406 = vmatprep.subr.mxu0 0.0
    %407 = vmatpush1.msra.mxu0 0.0
    %408 = vmatprep.subr.mxu0 0.0
    %409 = vmatpush1.msra.mxu0 0.0
    %410 = vmatprep.subr.mxu0 0.0
    %411 = vmatpush1.msra.mxu0 0.0
    %412 = vmatprep.subr.mxu0 0.0
    %413 = vmatpush1.msra.mxu0 0.0
    %414 = vmatprep.subr.mxu0 0.0
    %415 = vmatpush1.msra.mxu0 0.0
    %416 = vmatprep.subr.mxu0 0.0
    %417 = vmatpush1.msra.mxu0 0.0
    %418 = vmatprep.subr.mxu0 0.0
    %419 = vmatpush1.msra.mxu0 0.0
    %420 = vmatprep.subr.mxu0 0.0
    %421 = vmatpush1.msra.mxu0 0.0
    %422 = vmatprep.subr.mxu0 0.0
    %423 = vmatpush1.msra.mxu0 0.0
    %424 = vmatprep.subr.mxu0 0.0
    %425 = vmatpush1.msra.mxu0 0.0
    %426 = vmatprep.subr.mxu0 0.0
    %427 = vmatpush1.msra.mxu0 0.0
    %428 = vmatprep.subr.mxu0 0.0
    %429 = vmatpush1.msra.mxu0 0.0
    %430 = vmatprep.subr.mxu0 0.0
    %431 = vmatpush1.msra.mxu0 0.0
    %432 = vmatprep.subr.mxu0 0.0
    %433 = vmatpush1.msra.mxu0 0.0
    %434 = vmatprep.subr.mxu0 0.0
    %435 = vmatpush1.msra.mxu0 0.0
    %436 = vmatprep.subr.mxu0 0.0
    %437 = vmatpush1.msra.mxu0 0.0
    %438 = vmatprep.subr.mxu0 0.0
    %439 = vmatpush1.msra.mxu0 0.0
    %440 = vmatprep.subr.mxu0 0.0
    %441 = vmatpush1.msra.mxu0 0.0
    %442 = vmatprep.subr.mxu0 0.0
    %443 = vmatpush1.msra.mxu0 0.0
    %444 = vmatprep.subr.mxu0 0.0
    %445 = vmatpush1.msra.mxu0 0.0
    %446 = vmatprep.subr.mxu0 0.0
    %447 = vmatpush1.msra.mxu0 0.0
    %448 = vmatprep.subr.mxu0 0.0
    %449 = vmatpush1.msra.mxu0 0.0
    %450 = vmatprep.subr.mxu0 0.0
    %451 = vmatpush1.msra.mxu0 0.0
    %452 = vmatprep.subr.mxu0 0.0
    %453 = vmatpush1.msra.mxu0 0.0
    %454 = vmatprep.subr.mxu0 0.0
    %455 = vmatpush1.msra.mxu0 0.0
    %456 = vmatprep.subr.mxu0 0.0
    %457 = vmatpush1.msra.mxu0 0.0
    %458 = vmatprep.mubr.f32.mxu0 0.0
    %459 = vmatmul.mubr.f32.gmra.mrb[0].mxu0 %v392
    %v460 = vpop.f32.mrb[0].mxu0
    %v461 = vadd.f32 %v387, %v460
    %v462 = vpop.f32.mrb[0].mxu0
    %463 = vdwg.mxu0
    %vm464 = vcmask 254976
    %v465 = vsel %vm464, %v461, -inf
    %466 = vmax.xlane.f32.xlu0 %v465
    %v467 = vpop.xlane.xlu0 %466
    %v468 = vsub.f32 %v461, %v467
    %v469 = vmul.f32 %v468, 1.442695
    %v470 = vpow.pop %v469
    %v471 = vsel %vm464, %v470, 0.0
    %472 = vadd.xlane.f32.xlu0 %v471
    %v473 = vpop.xlane.xlu0 %472
    %v474 = vlog2.pop %v473
    %v475 = vmul.f32 %v474, 0.6931472
    %v476 = vadd.f32 %v467, %v475
    %v477 = vsub.f32 %v461, %v476
    %478 = vst.msk [vmem:[#allocation8] sm:$0x3] %vm464, %v477
    %vm479 = vcmp.eq.f32.partialorder %v461, %v467
    %v480 = vsel %vm479, %v197, 32
    %v481 = vsel %vm464, %v480, 2147483647
    %v482 = vand.u32 %v481, 65535
    %v483 = vshra.s32 %v481, 16
    %v484 = vcvt.s32.f32 %v482
    %v485 = vcvt.s32.f32 %v483
    %486 = vmin.xlane.f32.xlu0 %v485
    %v487 = vpop.xlane.xlu0 %486
    %vm488 = vcmp.eq.f32.partialorder %v485, %v487
    %v489 = vsel %vm488, %v484, inf
    %490 = vmin.xlane.f32.xlu0 %v489
    %v491 = vpop.xlane.xlu0 %490
    %v492 = vcvt.f32.s32 %v491
    %v493 = vcvt.f32.s32 %v487
    %v494 = vshll.u32 %v493, 16
    %v495 = vadd.s32 %v494, %v492
    %vm496 = vcmp.eq.s32.totalorder %v197, %v495
    %v497 = vsel %vm496, 1, 0
    %v498 = vcvt.s32.f32 %v497
    %v500 = vsel %vm201, %v498, 0
    %502 = vmatprep.subr.mxu0 0.0
    %503 = vmatpush1.msra.mxu0 %v178
    %504 = vmatprep.subr.mxu0 0.0
    %505 = vmatpush1.msra.mxu0 %v183
    %506 = vmatprep.subr.mxu0 0.0
    %507 = vmatpush1.msra.mxu0 %v188
    %508 = vmatprep.subr.mxu0 0.0
    %509 = vmatpush1.msra.mxu0 %v193
    %510 = vmatprep.subr.mxu0 0.0
    %511 = vmatpush1.msra.mxu0 0.0
    %512 = vmatprep.subr.mxu0 0.0
    %513 = vmatpush1.msra.mxu0 0.0
    %514 = vmatprep.subr.mxu0 0.0
    %515 = vmatpush1.msra.mxu0 0.0
    %516 = vmatprep.subr.mxu0 0.0
    %517 = vmatpush1.msra.mxu0 0.0
    %518 = vmatprep.subr.mxu0 0.0
    %519 = vmatpush1.msra.mxu0 0.0
    %520 = vmatprep.subr.mxu0 0.0
    %521 = vmatpush1.msra.mxu0 0.0
    %522 = vmatprep.subr.mxu0 0.0
    %523 = vmatpush1.msra.mxu0 0.0
    %524 = vmatprep.subr.mxu0 0.0
    %525 = vmatpush1.msra.mxu0 0.0
    %526 = vmatprep.subr.mxu0 0.0
    %527 = vmatpush1.msra.mxu0 0.0
    %528 = vmatprep.subr.mxu0 0.0
    %529 = vmatpush1.msra.mxu0 0.0
    %530 = vmatprep.subr.mxu0 0.0
    %531 = vmatpush1.msra.mxu0 0.0
    %532 = vmatprep.subr.mxu0 0.0
    %533 = vmatpush1.msra.mxu0 0.0
    %534 = vmatprep.subr.mxu0 0.0
    %535 = vmatpush1.msra.mxu0 0.0
    %536 = vmatprep.subr.mxu0 0.0
    %537 = vmatpush1.msra.mxu0 0.0
    %538 = vmatprep.subr.mxu0 0.0
    %539 = vmatpush1.msra.mxu0 0.0
    %540 = vmatprep.subr.mxu0 0.0
    %541 = vmatpush1.msra.mxu0 0.0
    %542 = vmatprep.subr.mxu0 0.0
    %543 = vmatpush1.msra.mxu0 0.0
    %544 = vmatprep.subr.mxu0 0.0
    %545 = vmatpush1.msra.mxu0 0.0
    %546 = vmatprep.subr.mxu0 0.0
    %547 = vmatpush1.msra.mxu0 0.0
    %548 = vmatprep.subr.mxu0 0.0
    %549 = vmatpush1.msra.mxu0 0.0
    %550 = vmatprep.subr.mxu0 0.0
    %551 = vmatpush1.msra.mxu0 0.0
    %552 = vmatprep.subr.mxu0 0.0
    %553 = vmatpush1.msra.mxu0 0.0
    %554 = vmatprep.subr.mxu0 0.0
    %555 = vmatpush1.msra.mxu0 0.0
    %556 = vmatprep.subr.mxu0 0.0
    %557 = vmatpush1.msra.mxu0 0.0
    %558 = vmatprep.subr.mxu0 0.0
    %559 = vmatpush1.msra.mxu0 0.0
    %560 = vmatprep.subr.mxu0 0.0
    %561 = vmatpush1.msra.mxu0 0.0
    %562 = vmatprep.subr.mxu0 0.0
    %563 = vmatpush1.msra.mxu0 0.0
    %564 = vmatprep.subr.mxu0 0.0
    %565 = vmatpush1.msra.mxu0 0.0
    %566 = vmatprep.mubr.f32.mxu0 0.0
    %567 = vmatmul.mubr.f32.gmra.mrb[0].mxu0 %v500
    %v568 = vpop.f32.mrb[0].mxu0
    %v569 = vadd.f32 0.0, %v568
    %v570 = vpop.f32.mrb[0].mxu0
    %571 = vdwg.mxu0
    %572 = vmatprep.subr.mxu0 0.0
    %573 = vmatpush1.msra.mxu0 %v76
    %574 = vmatprep.subr.mxu0 0.0
    %575 = vmatpush1.msra.mxu0 %v77
    %576 = vmatprep.subr.mxu0 0.0
    %577 = vmatpush1.msra.mxu0 %v78
    %578 = vmatprep.subr.mxu0 0.0
    %579 = vmatpush1.msra.mxu0 %v79
    %580 = vmatprep.subr.mxu0 0.0
    %581 = vmatpush1.msra.mxu0 0.0
    %582 = vmatprep.subr.mxu0 0.0
    %583 = vmatpush1.msra.mxu0 0.0
    %584 = vmatprep.subr.mxu0 0.0
    %585 = vmatpush1.msra.mxu0 0.0
    %586 = vmatprep.subr.mxu0 0.0
    %587 = vmatpush1.msra.mxu0 0.0
    %588 = vmatprep.subr.mxu0 0.0
    %589 = vmatpush1.msra.mxu0 0.0
    %590 = vmatprep.subr.mxu0 0.0
    %591 = vmatpush1.msra.mxu0 0.0
    %592 = vmatprep.subr.mxu0 0.0
    %593 = vmatpush1.msra.mxu0 0.0
    %594 = vmatprep.subr.mxu0 0.0
    %595 = vmatpush1.msra.mxu0 0.0
    %596 = vmatprep.subr.mxu0 0.0
    %597 = vmatpush1.msra.mxu0 0.0
    %598 = vmatprep.subr.mxu0 0.0
    %599 = vmatpush1.msra.mxu0 0.0
    %600 = vmatprep.subr.mxu0 0.0
    %601 = vmatpush1.msra.mxu0 0.0
    %602 = vmatprep.subr.mxu0 0.0
    %603 = vmatpush1.msra.mxu0 0.0
    %604 = vmatprep.subr.mxu0 0.0
    %605 = vmatpush1.msra.mxu0 0.0
    %606 = vmatprep.subr.mxu0 0.0
    %607 = vmatpush1.msra.mxu0 0.0
    %608 = vmatprep.subr.mxu0 0.0
    %609 = vmatpush1.msra.mxu0 0.0
    %610 = vmatprep.subr.mxu0 0.0
    %611 = vmatpush1.msra.mxu0 0.0
    %612 = vmatprep.subr.mxu0 0.0
    %613 = vmatpush1.msra.mxu0 0.0
    %614 = vmatprep.subr.mxu0 0.0
    %615 = vmatpush1.msra.mxu0 0.0
    %616 = vmatprep.subr.mxu0 0.0
    %617 = vmatpush1.msra.mxu0 0.0
    %618 = vmatprep.subr.mxu0 0.0
    %619 = vmatpush1.msra.mxu0 0.0
    %620 = vmatprep.subr.mxu0 0.0
    %621 = vmatpush1.msra.mxu0 0.0
    %622 = vmatprep.subr.mxu0 0.0
    %623 = vmatpush1.msra.mxu0 0.0
    %624 = vmatprep.subr.mxu0 0.0
    %625 = vmatpush1.msra.mxu0 0.0
    %626 = vmatprep.subr.mxu0 0.0
    %627 = vmatpush1.msra.mxu0 0.0
    %628 = vmatprep.subr.mxu0 0.0
    %629 = vmatpush1.msra.mxu0 0.0
    %630 = vmatprep.subr.mxu0 0.0
    %631 = vmatpush1.msra.mxu0 0.0
    %632 = vmatprep.subr.mxu0 0.0
    %633 = vmatpush1.msra.mxu0 0.0
    %634 = vmatprep.subr.mxu0 0.0
    %635 = vmatpush1.msra.mxu0 0.0
    %636 = vmatprep.mubr.f32.mxu0 0.0
    %637 = vmatmul.mubr.f32.gmra.mrb[0].mxu0 %v392
    %v638 = vpop.f32.mrb[0].mxu0
    %v639 = vadd.f32 %v279, %v638
    %v640 = vpop.f32.mrb[0].mxu0
    %641 = vdwg.mxu0
    %v642 = vadd.f32 %v569, %v639
    %v643 = vxor.u32 %v642, 2147483648
    %v644 = vmul.f32 %v643, 1.442695
    %v645 = vpow.pop %v644
    %v646 = vadd.f32 %v645, 1.0
    %v647 = vrcp.pop %v646
    %v648 = vmul.f32 1.0, %v647
    %650 = vrot.lane.b32.xlu0 %v639, 64
    %v651 = vpop.permute.xlu0 %650
    %v653 = vmul.f32 %v648, %v651
    %655 = vrot.lane.b32.xlu0 %v653, 64
    %v656 = vpop.permute.xlu0 %655
    %v658 = vadd.f32 %v569, %v656
    %v659 = vtanh.pop %v658
    %v660 = vsub.f32 1.0, %v648
    %662 = vrot.lane.b32.xlu0 %v659, 96
    %v663 = vpop.permute.xlu0 %662
    %v665 = vmul.f32 %v660, %v663
    %v666 = vmul.f32 %v648, %v382
    %v667 = vadd.f32 %v665, %v666
    %669 = vrot.lane.b32.xlu0 %v667, 96
    %v670 = vpop.permute.xlu0 %669
    %v671 = vsel %vm201, %v670, 0
    %673 = vmatprep.subr.mxu0 0.0
    %674 = vmatpush1.msra.mxu0 %v82
    %675 = vmatprep.subr.mxu0 0.0
    %676 = vmatpush1.msra.mxu0 %v83
    %677 = vmatprep.subr.mxu0 0.0
    %678 = vmatpush1.msra.mxu0 %v84
    %679 = vmatprep.subr.mxu0 0.0
    %680 = vmatpush1.msra.mxu0 %v85
    %681 = vmatprep.subr.mxu0 0.0
    %682 = vmatpush1.msra.mxu0 0.0
    %683 = vmatprep.subr.mxu0 0.0
    %684 = vmatpush1.msra.mxu0 0.0
    %685 = vmatprep.subr.mxu0 0.0
    %686 = vmatpush1.msra.mxu0 0.0
    %687 = vmatprep.subr.mxu0 0.0
    %688 = vmatpush1.msra.mxu0 0.0
    %689 = vmatprep.subr.mxu0 0.0
    %690 = vmatpush1.msra.mxu0 0.0
    %691 = vmatprep.subr.mxu0 0.0
    %692 = vmatpush1.msra.mxu0 0.0
    %693 = vmatprep.subr.mxu0 0.0
    %694 = vmatpush1.msra.mxu0 0.0
    %695 = vmatprep.subr.mxu0 0.0
    %696 = vmatpush1.msra.mxu0 0.0
    %697 = vmatprep.subr.mxu0 0.0
    %698 = vmatpush1.msra.mxu0 0.0
    %699 = vmatprep.subr.mxu0 0.0
    %700 = vmatpush1.msra.mxu0 0.0
    %701 = vmatprep.subr.mxu0 0.0
    %702 = vmatpush1.msra.mxu0 0.0
    %703 = vmatprep.subr.mxu0 0.0
    %704 = vmatpush1.msra.mxu0 0.0
    %705 = vmatprep.subr.mxu0 0.0
    %706 = vmatpush1.msra.mxu0 0.0
    %707 = vmatprep.subr.mxu0 0.0
    %708 = vmatpush1.msra.mxu0 0.0
    %709 = vmatprep.subr.mxu0 0.0
    %710 = vmatpush1.msra.mxu0 0.0
    %711 = vmatprep.subr.mxu0 0.0
    %712 = vmatpush1.msra.mxu0 0.0
    %713 = vmatprep.subr.mxu0 0.0
    %714 = vmatpush1.msra.mxu0 0.0
    %715 = vmatprep.subr.mxu0 0.0
    %716 = vmatpush1.msra.mxu0 0.0
    %717 = vmatprep.subr.mxu0 0.0
    %718 = vmatpush1.msra.mxu0 0.0
    %719 = vmatprep.subr.mxu0 0.0
    %720 = vmatpush1.msra.mxu0 0.0
    %721 = vmatprep.subr.mxu0 0.0
    %722 = vmatpush1.msra.mxu0 0.0
    %723 = vmatprep.subr.mxu0 0.0
    %724 = vmatpush1.msra.mxu0 0.0
    %725 = vmatprep.subr.mxu0 0.0
    %726 = vmatpush1.msra.mxu0 0.0
    %727 = vmatprep.subr.mxu0 0.0
    %728 = vmatpush1.msra.mxu0 0.0
    %729 = vmatprep.subr.mxu0 0.0
    %730 = vmatpush1.msra.mxu0 0.0
    %731 = vmatprep.subr.mxu0 0.0
    %732 = vmatpush1.msra.mxu0 0.0
    %733 = vmatprep.subr.mxu0 0.0
    %734 = vmatpush1.msra.mxu0 0.0
    %735 = vmatprep.subr.mxu0 0.0
    %736 = vmatpush1.msra.mxu0 0.0
    %737 = vmatprep.mubr.f32.mxu0 0.0
    %738 = vmatmul.mubr.f32.gmra.mrb[0].mxu0 %v671
    %v739 = vpop.f32.mrb[0].mxu0
    %v740 = vadd.f32 %v387, %v739
    %v741 = vpop.f32.mrb[0].mxu0
    %742 = vdwg.mxu0
    %v743 = vsel %vm464, %v740, -inf
    %744 = vmax.xlane.f32.xlu0 %v743
    %v745 = vpop.xlane.xlu0 %744
    %v746 = vsub.f32 %v740, %v745
    %v747 = vmul.f32 %v746, 1.442695
    %v748 = vpow.pop %v747
    %v749 = vsel %vm464, %v748, 0.0
    %750 = vadd.xlane.f32.xlu0 %v749
    %v751 = vpop.xlane.xlu0 %750
    %v752 = vlog2.pop %v751
    %v753 = vmul.f32 %v752, 0.6931472
    %v754 = vadd.f32 %v745, %v753
    %v755 = vsub.f32 %v740, %v754
    %s756 = scalar_lea.vmem [#allocation8], 2
    %757 = vst.msk [vmem:[%s756] sm:$0x3] %vm464, %v755
    %vm758 = vcmp.eq.f32.partialorder %v740, %v745
    %v759 = vsel %vm758, %v197, 32
    %v760 = vsel %vm464, %v759, 2147483647
    %v761 = vand.u32 %v760, 65535
    %v762 = vshra.s32 %v760, 16
    %v763 = vcvt.s32.f32 %v761
    %v764 = vcvt.s32.f32 %v762
    %765 = vmin.xlane.f32.xlu0 %v764
    %v766 = vpop.xlane.xlu0 %765
    %vm767 = vcmp.eq.f32.partialorder %v764, %v766
    %v768 = vsel %vm767, %v763, inf
    %769 = vmin.xlane.f32.xlu0 %v768
    %v770 = vpop.xlane.xlu0 %769
    %v771 = vcvt.f32.s32 %v770
    %v772 = vcvt.f32.s32 %v766
    %v773 = vshll.u32 %v772, 16
    %v774 = vadd.s32 %v773, %v771
    %vm775 = vcmp.eq.s32.totalorder %v197, %v774
    %v776 = vsel %vm775, 1, 0
    %v777 = vcvt.s32.f32 %v776
    %v779 = vsel %vm201, %v777, 0
    %781 = vmatprep.subr.mxu0 0.0
    %782 = vmatpush1.msra.mxu0 %v178
    %783 = vmatprep.subr.mxu0 0.0
    %784 = vmatpush1.msra.mxu0 %v183
    %785 = vmatprep.subr.mxu0 0.0
    %786 = vmatpush1.msra.mxu0 %v188
    %787 = vmatprep.subr.mxu0 0.0
    %788 = vmatpush1.msra.mxu0 %v193
    %789 = vmatprep.subr.mxu0 0.0
    %790 = vmatpush1.msra.mxu0 0.0
    %791 = vmatprep.subr.mxu0 0.0
    %792 = vmatpush1.msra.mxu0 0.0
    %793 = vmatprep.subr.mxu0 0.0
    %794 = vmatpush1.msra.mxu0 0.0
    %795 = vmatprep.subr.mxu0 0.0
    %796 = vmatpush1.msra.mxu0 0.0
    %797 = vmatprep.subr.mxu0 0.0
    %798 = vmatpush1.msra.mxu0 0.0
    %799 = vmatprep.subr.mxu0 0.0
    %800 = vmatpush1.msra.mxu0 0.0
    %801 = vmatprep.subr.mxu0 0.0
    %802 = vmatpush1.msra.mxu0 0.0
    %803 = vmatprep.subr.mxu0 0.0
    %804 = vmatpush1.msra.mxu0 0.0
    %805 = vmatprep.subr.mxu0 0.0
    %806 = vmatpush1.msra.mxu0 0.0
    %807 = vmatprep.subr.mxu0 0.0
    %808 = vmatpush1.msra.mxu0 0.0
    %809 = vmatprep.subr.mxu0 0.0
    %810 = vmatpush1.msra.mxu0 0.0
    %811 = vmatprep.subr.mxu0 0.0
    %812 = vmatpush1.msra.mxu0 0.0
    %813 = vmatprep.subr.mxu0 0.0
    %814 = vmatpush1.msra.mxu0 0.0
    %815 = vmatprep.subr.mxu0 0.0
    %816 = vmatpush1.msra.mxu0 0.0
    %817 = vmatprep.subr.mxu0 0.0
    %818 = vmatpush1.msra.mxu0 0.0
    %819 = vmatprep.subr.mxu0 0.0
    %820 = vmatpush1.msra.mxu0 0.0
    %821 = vmatprep.subr.mxu0 0.0
    %822 = vmatpush1.msra.mxu0 0.0
    %823 = vmatprep.subr.mxu0 0.0
    %824 = vmatpush1.msra.mxu0 0.0
    %825 = vmatprep.subr.mxu0 0.0
    %826 = vmatpush1.msra.mxu0 0.0
    %827 = vmatprep.subr.mxu0 0.0
    %828 = vmatpush1.msra.mxu0 0.0
    %829 = vmatprep.subr.mxu0 0.0
    %830 = vmatpush1.msra.mxu0 0.0
    %831 = vmatprep.subr.mxu0 0.0
    %832 = vmatpush1.msra.mxu0 0.0
    %833 = vmatprep.subr.mxu0 0.0
    %834 = vmatpush1.msra.mxu0 0.0
    %835 = vmatprep.subr.mxu0 0.0
    %836 = vmatpush1.msra.mxu0 0.0
    %837 = vmatprep.subr.mxu0 0.0
    %838 = vmatpush1.msra.mxu0 0.0
    %839 = vmatprep.subr.mxu0 0.0
    %840 = vmatpush1.msra.mxu0 0.0
    %841 = vmatprep.subr.mxu0 0.0
    %842 = vmatpush1.msra.mxu0 0.0
    %843 = vmatprep.subr.mxu0 0.0
    %844 = vmatpush1.msra.mxu0 0.0
    %845 = vmatprep.mubr.f32.mxu0 0.0
    %846 = vmatmul.mubr.f32.gmra.mrb[0].mxu0 %v779
    %v847 = vpop.f32.mrb[0].mxu0
    %v848 = vadd.f32 0.0, %v847
    %v849 = vpop.f32.mrb[0].mxu0
    %850 = vdwg.mxu0
    %851 = vmatprep.subr.mxu0 0.0
    %852 = vmatpush1.msra.mxu0 %v76
    %853 = vmatprep.subr.mxu0 0.0
    %854 = vmatpush1.msra.mxu0 %v77
    %855 = vmatprep.subr.mxu0 0.0
    %856 = vmatpush1.msra.mxu0 %v78
    %857 = vmatprep.subr.mxu0 0.0
    %858 = vmatpush1.msra.mxu0 %v79
    %859 = vmatprep.subr.mxu0 0.0
    %860 = vmatpush1.msra.mxu0 0.0
    %861 = vmatprep.subr.mxu0 0.0
    %862 = vmatpush1.msra.mxu0 0.0
    %863 = vmatprep.subr.mxu0 0.0
    %864 = vmatpush1.msra.mxu0 0.0
    %865 = vmatprep.subr.mxu0 0.0
    %866 = vmatpush1.msra.mxu0 0.0
    %867 = vmatprep.subr.mxu0 0.0
    %868 = vmatpush1.msra.mxu0 0.0
    %869 = vmatprep.subr.mxu0 0.0
    %870 = vmatpush1.msra.mxu0 0.0
    %871 = vmatprep.subr.mxu0 0.0
    %872 = vmatpush1.msra.mxu0 0.0
    %873 = vmatprep.subr.mxu0 0.0
    %874 = vmatpush1.msra.mxu0 0.0
    %875 = vmatprep.subr.mxu0 0.0
    %876 = vmatpush1.msra.mxu0 0.0
    %877 = vmatprep.subr.mxu0 0.0
    %878 = vmatpush1.msra.mxu0 0.0
    %879 = vmatprep.subr.mxu0 0.0
    %880 = vmatpush1.msra.mxu0 0.0
    %881 = vmatprep.subr.mxu0 0.0
    %882 = vmatpush1.msra.mxu0 0.0
    %883 = vmatprep.subr.mxu0 0.0
    %884 = vmatpush1.msra.mxu0 0.0
    %885 = vmatprep.subr.mxu0 0.0
    %886 = vmatpush1.msra.mxu0 0.0
    %887 = vmatprep.subr.mxu0 0.0
    %888 = vmatpush1.msra.mxu0 0.0
    %889 = vmatprep.subr.mxu0 0.0
    %890 = vmatpush1.msra.mxu0 0.0
    %891 = vmatprep.subr.mxu0 0.0
    %892 = vmatpush1.msra.mxu0 0.0
    %893 = vmatprep.subr.mxu0 0.0
    %894 = vmatpush1.msra.mxu0 0.0
    %895 = vmatprep.subr.mxu0 0.0
    %896 = vmatpush1.msra.mxu0 0.0
    %897 = vmatprep.subr.mxu0 0.0
    %898 = vmatpush1.msra.mxu0 0.0
    %899 = vmatprep.subr.mxu0 0.0
    %900 = vmatpush1.msra.mxu0 0.0
    %901 = vmatprep.subr.mxu0 0.0
    %902 = vmatpush1.msra.mxu0 0.0
    %903 = vmatprep.subr.mxu0 0.0
    %904 = vmatpush1.msra.mxu0 0.0
    %905 = vmatprep.subr.mxu0 0.0
    %906 = vmatpush1.msra.mxu0 0.0
    %907 = vmatprep.subr.mxu0 0.0
    %908 = vmatpush1.msra.mxu0 0.0
    %909 = vmatprep.subr.mxu0 0.0
    %910 = vmatpush1.msra.mxu0 0.0
    %911 = vmatprep.subr.mxu0 0.0
    %912 = vmatpush1.msra.mxu0 0.0
    %913 = vmatprep.subr.mxu0 0.0
    %914 = vmatpush1.msra.mxu0 0.0
    %915 = vmatprep.mubr.f32.mxu0 0.0
    %916 = vmatmul.mubr.f32.gmra.mrb[0].mxu0 %v671
    %v917 = vpop.f32.mrb[0].mxu0
    %v918 = vadd.f32 %v279, %v917
    %v919 = vpop.f32.mrb[0].mxu0
    %920 = vdwg.mxu0
    %v921 = vadd.f32 %v848, %v918
    %v922 = vxor.u32 %v921, 2147483648
    %v923 = vmul.f32 %v922, 1.442695
    %v924 = vpow.pop %v923
    %v925 = vadd.f32 %v924, 1.0
    %v926 = vrcp.pop %v925
    %v927 = vmul.f32 1.0, %v926
    %929 = vrot.lane.b32.xlu0 %v918, 64
    %v930 = vpop.permute.xlu0 %929
    %v932 = vmul.f32 %v927, %v930
    %934 = vrot.lane.b32.xlu0 %v932, 64
    %v935 = vpop.permute.xlu0 %934
    %v937 = vadd.f32 %v848, %v935
    %v938 = vtanh.pop %v937
    %v939 = vsub.f32 1.0, %v927
    %941 = vrot.lane.b32.xlu0 %v938, 96
    %v942 = vpop.permute.xlu0 %941
    %v944 = vmul.f32 %v939, %v942
    %v945 = vmul.f32 %v927, %v667
    %v946 = vadd.f32 %v944, %v945
    %948 = vrot.lane.b32.xlu0 %v946, 96
    %v949 = vpop.permute.xlu0 %948
    %v950 = vsel %vm201, %v949, 0
    %952 = vmatprep.subr.mxu0 0.0
    %953 = vmatpush1.msra.mxu0 %v82
    %954 = vmatprep.subr.mxu0 0.0
    %955 = vmatpush1.msra.mxu0 %v83
    %956 = vmatprep.subr.mxu0 0.0
    %957 = vmatpush1.msra.mxu0 %v84
    %958 = vmatprep.subr.mxu0 0.0
    %959 = vmatpush1.msra.mxu0 %v85
    %960 = vmatprep.subr.mxu0 0.0
    %961 = vmatpush1.msra.mxu0 0.0
    %962 = vmatprep.subr.mxu0 0.0
    %963 = vmatpush1.msra.mxu0 0.0
    %964 = vmatprep.subr.mxu0 0.0
    %965 = vmatpush1.msra.mxu0 0.0
    %966 = vmatprep.subr.mxu0 0.0
    %967 = vmatpush1.msra.mxu0 0.0
    %968 = vmatprep.subr.mxu0 0.0
    %969 = vmatpush1.msra.mxu0 0.0
    %970 = vmatprep.subr.mxu0 0.0
    %971 = vmatpush1.msra.mxu0 0.0
    %972 = vmatprep.subr.mxu0 0.0
    %973 = vmatpush1.msra.mxu0 0.0
    %974 = vmatprep.subr.mxu0 0.0
    %975 = vmatpush1.msra.mxu0 0.0
    %976 = vmatprep.subr.mxu0 0.0
    %977 = vmatpush1.msra.mxu0 0.0
    %978 = vmatprep.subr.mxu0 0.0
    %979 = vmatpush1.msra.mxu0 0.0
    %980 = vmatprep.subr.mxu0 0.0
    %981 = vmatpush1.msra.mxu0 0.0
    %982 = vmatprep.subr.mxu0 0.0
    %983 = vmatpush1.msra.mxu0 0.0
    %984 = vmatprep.subr.mxu0 0.0
    %985 = vmatpush1.msra.mxu0 0.0
    %986 = vmatprep.subr.mxu0 0.0
    %987 = vmatpush1.msra.mxu0 0.0
    %988 = vmatprep.subr.mxu0 0.0
    %989 = vmatpush1.msra.mxu0 0.0
    %990 = vmatprep.subr.mxu0 0.0
    %991 = vmatpush1.msra.mxu0 0.0
    %992 = vmatprep.subr.mxu0 0.0
    %993 = vmatpush1.msra.mxu0 0.0
    %994 = vmatprep.subr.mxu0 0.0
    %995 = vmatpush1.msra.mxu0 0.0
    %996 = vmatprep.subr.mxu0 0.0
    %997 = vmatpush1.msra.mxu0 0.0
    %998 = vmatprep.subr.mxu0 0.0
    %999 = vmatpush1.msra.mxu0 0.0
    %1000 = vmatprep.subr.mxu0 0.0
    %1001 = vmatpush1.msra.mxu0 0.0
    %1002 = vmatprep.subr.mxu0 0.0
    %1003 = vmatpush1.msra.mxu0 0.0
    %1004 = vmatprep.subr.mxu0 0.0
    %1005 = vmatpush1.msra.mxu0 0.0
    %1006 = vmatprep.subr.mxu0 0.0
    %1007 = vmatpush1.msra.mxu0 0.0
    %1008 = vmatprep.subr.mxu0 0.0
    %1009 = vmatpush1.msra.mxu0 0.0
    %1010 = vmatprep.subr.mxu0 0.0
    %1011 = vmatpush1.msra.mxu0 0.0
    %1012 = vmatprep.subr.mxu0 0.0
    %1013 = vmatpush1.msra.mxu0 0.0
    %1014 = vmatprep.subr.mxu0 0.0
    %1015 = vmatpush1.msra.mxu0 0.0
    %1016 = vmatprep.mubr.f32.mxu0 0.0
    %1017 = vmatmul.mubr.f32.gmra.mrb[0].mxu0 %v950
    %v1018 = vpop.f32.mrb[0].mxu0
    %v1019 = vadd.f32 %v387, %v1018
    %v1020 = vpop.f32.mrb[0].mxu0
    %1021 = vdwg.mxu0
    %v1022 = vsel %vm464, %v1019, -inf
    %1023 = vmax.xlane.f32.xlu0 %v1022
    %v1024 = vpop.xlane.xlu0 %1023
    %v1025 = vsub.f32 %v1019, %v1024
    %v1026 = vmul.f32 %v1025, 1.442695
    %v1027 = vpow.pop %v1026
    %v1028 = vsel %vm464, %v1027, 0.0
    %1029 = vadd.xlane.f32.xlu0 %v1028
    %v1030 = vpop.xlane.xlu0 %1029
    %v1031 = vlog2.pop %v1030
    %v1032 = vmul.f32 %v1031, 0.6931472
    %v1033 = vadd.f32 %v1024, %v1032
    %v1034 = vsub.f32 %v1019, %v1033
    %s1035 = scalar_lea.vmem [#allocation8], 4
    %1036 = vst.msk [vmem:[%s1035] sm:$0x3] %vm464, %v1034
    %vm1037 = vcmp.eq.f32.partialorder %v1019, %v1024
    %v1038 = vsel %vm1037, %v197, 32
    %v1039 = vsel %vm464, %v1038, 2147483647
    %v1040 = vand.u32 %v1039, 65535
    %v1041 = vshra.s32 %v1039, 16
    %v1042 = vcvt.s32.f32 %v1040
    %v1043 = vcvt.s32.f32 %v1041
    %1044 = vmin.xlane.f32.xlu0 %v1043
    %v1045 = vpop.xlane.xlu0 %1044
    %vm1046 = vcmp.eq.f32.partialorder %v1043, %v1045
    %v1047 = vsel %vm1046, %v1042, inf
    %1048 = vmin.xlane.f32.xlu0 %v1047
    %v1049 = vpop.xlane.xlu0 %1048
    %v1050 = vcvt.f32.s32 %v1049
    %v1051 = vcvt.f32.s32 %v1045
    %v1052 = vshll.u32 %v1051, 16
    %v1053 = vadd.s32 %v1052, %v1050
    %vm1054 = vcmp.eq.s32.totalorder %v197, %v1053
    %v1055 = vsel %vm1054, 1, 0
    %v1056 = vcvt.s32.f32 %v1055
    %v1058 = vsel %vm201, %v1056, 0
    %1060 = vmatprep.subr.mxu0 0.0
    %1061 = vmatpush1.msra.mxu0 %v178
    %1062 = vmatprep.subr.mxu0 0.0
    %1063 = vmatpush1.msra.mxu0 %v183
    %1064 = vmatprep.subr.mxu0 0.0
    %1065 = vmatpush1.msra.mxu0 %v188
    %1066 = vmatprep.subr.mxu0 0.0
    %1067 = vmatpush1.msra.mxu0 %v193
    %1068 = vmatprep.subr.mxu0 0.0
    %1069 = vmatpush1.msra.mxu0 0.0
    %1070 = vmatprep.subr.mxu0 0.0
    %1071 = vmatpush1.msra.mxu0 0.0
    %1072 = vmatprep.subr.mxu0 0.0
    %1073 = vmatpush1.msra.mxu0 0.0
    %1074 = vmatprep.subr.mxu0 0.0
    %1075 = vmatpush1.msra.mxu0 0.0
    %1076 = vmatprep.subr.mxu0 0.0
    %1077 = vmatpush1.msra.mxu0 0.0
    %1078 = vmatprep.subr.mxu0 0.0
    %1079 = vmatpush1.msra.mxu0 0.0
    %1080 = vmatprep.subr.mxu0 0.0
    %1081 = vmatpush1.msra.mxu0 0.0
    %1082 = vmatprep.subr.mxu0 0.0
    %1083 = vmatpush1.msra.mxu0 0.0
    %1084 = vmatprep.subr.mxu0 0.0
    %1085 = vmatpush1.msra.mxu0 0.0
    %1086 = vmatprep.subr.mxu0 0.0
    %1087 = vmatpush1.msra.mxu0 0.0
    %1088 = vmatprep.subr.mxu0 0.0
    %1089 = vmatpush1.msra.mxu0 0.0
    %1090 = vmatprep.subr.mxu0 0.0
    %1091 = vmatpush1.msra.mxu0 0.0
    %1092 = vmatprep.subr.mxu0 0.0
    %1093 = vmatpush1.msra.mxu0 0.0
    %1094 = vmatprep.subr.mxu0 0.0
    %1095 = vmatpush1.msra.mxu0 0.0
    %1096 = vmatprep.subr.mxu0 0.0
    %1097 = vmatpush1.msra.mxu0 0.0
    %1098 = vmatprep.subr.mxu0 0.0
    %1099 = vmatpush1.msra.mxu0 0.0
    %1100 = vmatprep.subr.mxu0 0.0
    %1101 = vmatpush1.msra.mxu0 0.0
    %1102 = vmatprep.subr.mxu0 0.0
    %1103 = vmatpush1.msra.mxu0 0.0
    %1104 = vmatprep.subr.mxu0 0.0
    %1105 = vmatpush1.msra.mxu0 0.0
    %1106 = vmatprep.subr.mxu0 0.0
    %1107 = vmatpush1.msra.mxu0 0.0
    %1108 = vmatprep.subr.mxu0 0.0
    %1109 = vmatpush1.msra.mxu0 0.0
    %1110 = vmatprep.subr.mxu0 0.0
    %1111 = vmatpush1.msra.mxu0 0.0
    %1112 = vmatprep.subr.mxu0 0.0
    %1113 = vmatpush1.msra.mxu0 0.0
    %1114 = vmatprep.subr.mxu0 0.0
    %1115 = vmatpush1.msra.mxu0 0.0
    %1116 = vmatprep.subr.mxu0 0.0
    %1117 = vmatpush1.msra.mxu0 0.0
    %1118 = vmatprep.subr.mxu0 0.0
    %1119 = vmatpush1.msra.mxu0 0.0
    %1120 = vmatprep.subr.mxu0 0.0
    %1121 = vmatpush1.msra.mxu0 0.0
    %1122 = vmatprep.subr.mxu0 0.0
    %1123 = vmatpush1.msra.mxu0 0.0
    %1124 = vmatprep.mubr.f32.mxu0 0.0
    %1125 = vmatmul.mubr.f32.gmra.mrb[0].mxu0 %v1058
    %v1126 = vpop.f32.mrb[0].mxu0
    %v1127 = vadd.f32 0.0, %v1126
    %v1128 = vpop.f32.mrb[0].mxu0
    %1129 = vdwg.mxu0
    %1130 = vmatprep.subr.mxu0 0.0
    %1131 = vmatpush1.msra.mxu0 %v76
    %1132 = vmatprep.subr.mxu0 0.0
    %1133 = vmatpush1.msra.mxu0 %v77
    %1134 = vmatprep.subr.mxu0 0.0
    %1135 = vmatpush1.msra.mxu0 %v78
    %1136 = vmatprep.subr.mxu0 0.0
    %1137 = vmatpush1.msra.mxu0 %v79
    %1138 = vmatprep.subr.mxu0 0.0
    %1139 = vmatpush1.msra.mxu0 0.0
    %1140 = vmatprep.subr.mxu0 0.0
    %1141 = vmatpush1.msra.mxu0 0.0
    %1142 = vmatprep.subr.mxu0 0.0
    %1143 = vmatpush1.msra.mxu0 0.0
    %1144 = vmatprep.subr.mxu0 0.0
    %1145 = vmatpush1.msra.mxu0 0.0
    %1146 = vmatprep.subr.mxu0 0.0
    %1147 = vmatpush1.msra.mxu0 0.0
    %1148 = vmatprep.subr.mxu0 0.0
    %1149 = vmatpush1.msra.mxu0 0.0
    %1150 = vmatprep.subr.mxu0 0.0
    %1151 = vmatpush1.msra.mxu0 0.0
    %1152 = vmatprep.subr.mxu0 0.0
    %1153 = vmatpush1.msra.mxu0 0.0
    %1154 = vmatprep.subr.mxu0 0.0
    %1155 = vmatpush1.msra.mxu0 0.0
    %1156 = vmatprep.subr.mxu0 0.0
    %1157 = vmatpush1.msra.mxu0 0.0
    %1158 = vmatprep.subr.mxu0 0.0
    %1159 = vmatpush1.msra.mxu0 0.0
    %1160 = vmatprep.subr.mxu0 0.0
    %1161 = vmatpush1.msra.mxu0 0.0
    %1162 = vmatprep.subr.mxu0 0.0
    %1163 = vmatpush1.msra.mxu0 0.0
    %1164 = vmatprep.subr.mxu0 0.0
    %1165 = vmatpush1.msra.mxu0 0.0
    %1166 = vmatprep.subr.mxu0 0.0
    %1167 = vmatpush1.msra.mxu0 0.0
    %1168 = vmatprep.subr.mxu0 0.0
    %1169 = vmatpush1.msra.mxu0 0.0
    %1170 = vmatprep.subr.mxu0 0.0
    %1171 = vmatpush1.msra.mxu0 0.0
    %1172 = vmatprep.subr.mxu0 0.0
    %1173 = vmatpush1.msra.mxu0 0.0
    %1174 = vmatprep.subr.mxu0 0.0
    %1175 = vmatpush1.msra.mxu0 0.0
    %1176 = vmatprep.subr.mxu0 0.0
    %1177 = vmatpush1.msra.mxu0 0.0
    %1178 = vmatprep.subr.mxu0 0.0
    %1179 = vmatpush1.msra.mxu0 0.0
    %1180 = vmatprep.subr.mxu0 0.0
    %1181 = vmatpush1.msra.mxu0 0.0
    %1182 = vmatprep.subr.mxu0 0.0
    %1183 = vmatpush1.msra.mxu0 0.0
    %1184 = vmatprep.subr.mxu0 0.0
    %1185 = vmatpush1.msra.mxu0 0.0
    %1186 = vmatprep.subr.mxu0 0.0
    %1187 = vmatpush1.msra.mxu0 0.0
    %1188 = vmatprep.subr.mxu0 0.0
    %1189 = vmatpush1.msra.mxu0 0.0
    %1190 = vmatprep.subr.mxu0 0.0
    %1191 = vmatpush1.msra.mxu0 0.0
    %1192 = vmatprep.subr.mxu0 0.0
    %1193 = vmatpush1.msra.mxu0 0.0
    %1194 = vmatprep.mubr.f32.mxu0 0.0
    %1195 = vmatmul.mubr.f32.gmra.mrb[0].mxu0 %v950
    %v1196 = vpop.f32.mrb[0].mxu0
    %v1197 = vadd.f32 %v279, %v1196
    %v1198 = vpop.f32.mrb[0].mxu0
    %1199 = vdwg.mxu0
    %v1200 = vadd.f32 %v1127, %v1197
    %v1201 = vxor.u32 %v1200, 2147483648
    %v1202 = vmul.f32 %v1201, 1.442695
    %v1203 = vpow.pop %v1202
    %v1204 = vadd.f32 %v1203, 1.0
    %v1205 = vrcp.pop %v1204
    %v1206 = vmul.f32 1.0, %v1205
    %1208 = vrot.lane.b32.xlu0 %v1197, 64
    %v1209 = vpop.permute.xlu0 %1208
    %v1211 = vmul.f32 %v1206, %v1209
    %1213 = vrot.lane.b32.xlu0 %v1211, 64
    %v1214 = vpop.permute.xlu0 %1213
    %v1216 = vadd.f32 %v1127, %v1214
    %v1217 = vtanh.pop %v1216
    %v1218 = vsub.f32 1.0, %v1206
    %1220 = vrot.lane.b32.xlu0 %v1217, 96
    %v1221 = vpop.permute.xlu0 %1220
    %v1223 = vmul.f32 %v1218, %v1221
    %v1224 = vmul.f32 %v1206, %v946
    %v1225 = vadd.f32 %v1223, %v1224
    %1227 = vrot.lane.b32.xlu0 %v1225, 96
    %v1228 = vpop.permute.xlu0 %1227
    %v1229 = vsel %vm201, %v1228, 0
    %1231 = vmatprep.subr.mxu0 0.0
    %1232 = vmatpush1.msra.mxu0 %v82
    %1233 = vmatprep.subr.mxu0 0.0
    %1234 = vmatpush1.msra.mxu0 %v83
    %1235 = vmatprep.subr.mxu0 0.0
    %1236 = vmatpush1.msra.mxu0 %v84
    %1237 = vmatprep.subr.mxu0 0.0
    %1238 = vmatpush1.msra.mxu0 %v85
    %1239 = vmatprep.subr.mxu0 0.0
    %1240 = vmatpush1.msra.mxu0 0.0
    %1241 = vmatprep.subr.mxu0 0.0
    %1242 = vmatpush1.msra.mxu0 0.0
    %1243 = vmatprep.subr.mxu0 0.0
    %1244 = vmatpush1.msra.mxu0 0.0
    %1245 = vmatprep.subr.mxu0 0.0
    %1246 = vmatpush1.msra.mxu0 0.0
    %1247 = vmatprep.subr.mxu0 0.0
    %1248 = vmatpush1.msra.mxu0 0.0
    %1249 = vmatprep.subr.mxu0 0.0
    %1250 = vmatpush1.msra.mxu0 0.0
    %1251 = vmatprep.subr.mxu0 0.0
    %1252 = vmatpush1.msra.mxu0 0.0
    %1253 = vmatprep.subr.mxu0 0.0
    %1254 = vmatpush1.msra.mxu0 0.0
    %1255 = vmatprep.subr.mxu0 0.0
    %1256 = vmatpush1.msra.mxu0 0.0
    %1257 = vmatprep.subr.mxu0 0.0
    %1258 = vmatpush1.msra.mxu0 0.0
    %1259 = vmatprep.subr.mxu0 0.0
    %1260 = vmatpush1.msra.mxu0 0.0
    %1261 = vmatprep.subr.mxu0 0.0
    %1262 = vmatpush1.msra.mxu0 0.0
    %1263 = vmatprep.subr.mxu0 0.0
    %1264 = vmatpush1.msra.mxu0 0.0
    %1265 = vmatprep.subr.mxu0 0.0
    %1266 = vmatpush1.msra.mxu0 0.0
    %1267 = vmatprep.subr.mxu0 0.0
    %1268 = vmatpush1.msra.mxu0 0.0
    %1269 = vmatprep.subr.mxu0 0.0
    %1270 = vmatpush1.msra.mxu0 0.0
    %1271 = vmatprep.subr.mxu0 0.0
    %1272 = vmatpush1.msra.mxu0 0.0
    %1273 = vmatprep.subr.mxu0 0.0
    %1274 = vmatpush1.msra.mxu0 0.0
    %1275 = vmatprep.subr.mxu0 0.0
    %1276 = vmatpush1.msra.mxu0 0.0
    %1277 = vmatprep.subr.mxu0 0.0
    %1278 = vmatpush1.msra.mxu0 0.0
    %1279 = vmatprep.subr.mxu0 0.0
    %1280 = vmatpush1.msra.mxu0 0.0
    %1281 = vmatprep.subr.mxu0 0.0
    %1282 = vmatpush1.msra.mxu0 0.0
    %1283 = vmatprep.subr.mxu0 0.0
    %1284 = vmatpush1.msra.mxu0 0.0
    %1285 = vmatprep.subr.mxu0 0.0
    %1286 = vmatpush1.msra.mxu0 0.0
    %1287 = vmatprep.subr.mxu0 0.0
    %1288 = vmatpush1.msra.mxu0 0.0
    %1289 = vmatprep.subr.mxu0 0.0
    %1290 = vmatpush1.msra.mxu0 0.0
    %1291 = vmatprep.subr.mxu0 0.0
    %1292 = vmatpush1.msra.mxu0 0.0
    %1293 = vmatprep.subr.mxu0 0.0
    %1294 = vmatpush1.msra.mxu0 0.0
    %1295 = vmatprep.mubr.f32.mxu0 0.0
    %1296 = vmatmul.mubr.f32.gmra.mrb[0].mxu0 %v1229
    %v1297 = vpop.f32.mrb[0].mxu0
    %v1298 = vadd.f32 %v387, %v1297
    %v1299 = vpop.f32.mrb[0].mxu0
    %1300 = vdwg.mxu0
    %v1301 = vsel %vm464, %v1298, -inf
    %1302 = vmax.xlane.f32.xlu0 %v1301
    %v1303 = vpop.xlane.xlu0 %1302
    %v1304 = vsub.f32 %v1298, %v1303
    %v1305 = vmul.f32 %v1304, 1.442695
    %v1306 = vpow.pop %v1305
    %v1307 = vsel %vm464, %v1306, 0.0
    %1308 = vadd.xlane.f32.xlu0 %v1307
    %v1309 = vpop.xlane.xlu0 %1308
    %v1310 = vlog2.pop %v1309
    %v1311 = vmul.f32 %v1310, 0.6931472
    %v1312 = vadd.f32 %v1303, %v1311
    %v1313 = vsub.f32 %v1298, %v1312
    %s1314 = scalar_lea.vmem [#allocation8], 6
    %1315 = vst.msk [vmem:[%s1314] sm:$0x3] %vm464, %v1313
    %vm1316 = vcmp.eq.f32.partialorder %v1298, %v1303
    %v1317 = vsel %vm1316, %v197, 32
    %v1318 = vsel %vm464, %v1317, 2147483647
    %v1319 = vand.u32 %v1318, 65535
    %v1320 = vshra.s32 %v1318, 16
    %v1321 = vcvt.s32.f32 %v1319
    %v1322 = vcvt.s32.f32 %v1320
    %1323 = vmin.xlane.f32.xlu0 %v1322
    %v1324 = vpop.xlane.xlu0 %1323
    %vm1325 = vcmp.eq.f32.partialorder %v1322, %v1324
    %v1326 = vsel %vm1325, %v1321, inf
    %1327 = vmin.xlane.f32.xlu0 %v1326
    %v1328 = vpop.xlane.xlu0 %1327
    %v1329 = vcvt.f32.s32 %v1328
    %v1330 = vcvt.f32.s32 %v1324
    %v1331 = vshll.u32 %v1330, 16
    %v1332 = vadd.s32 %v1331, %v1329
    %vm1333 = vcmp.eq.s32.totalorder %v197, %v1332
    %v1334 = vsel %vm1333, 1, 0
    %v1335 = vcvt.s32.f32 %v1334
    %v1337 = vsel %vm201, %v1335, 0
    %1339 = vmatprep.subr.mxu0 0.0
    %1340 = vmatpush1.msra.mxu0 %v178
    %1341 = vmatprep.subr.mxu0 0.0
    %1342 = vmatpush1.msra.mxu0 %v183
    %1343 = vmatprep.subr.mxu0 0.0
    %1344 = vmatpush1.msra.mxu0 %v188
    %1345 = vmatprep.subr.mxu0 0.0
    %1346 = vmatpush1.msra.mxu0 %v193
    %1347 = vmatprep.subr.mxu0 0.0
    %1348 = vmatpush1.msra.mxu0 0.0
    %1349 = vmatprep.subr.mxu0 0.0
    %1350 = vmatpush1.msra.mxu0 0.0
    %1351 = vmatprep.subr.mxu0 0.0
    %1352 = vmatpush1.msra.mxu0 0.0
    %1353 = vmatprep.subr.mxu0 0.0
    %1354 = vmatpush1.msra.mxu0 0.0
    %1355 = vmatprep.subr.mxu0 0.0
    %1356 = vmatpush1.msra.mxu0 0.0
    %1357 = vmatprep.subr.mxu0 0.0
    %1358 = vmatpush1.msra.mxu0 0.0
    %1359 = vmatprep.subr.mxu0 0.0
    %1360 = vmatpush1.msra.mxu0 0.0
    %1361 = vmatprep.subr.mxu0 0.0
    %1362 = vmatpush1.msra.mxu0 0.0
    %1363 = vmatprep.subr.mxu0 0.0
    %1364 = vmatpush1.msra.mxu0 0.0
    %1365 = vmatprep.subr.mxu0 0.0
    %1366 = vmatpush1.msra.mxu0 0.0
    %1367 = vmatprep.subr.mxu0 0.0
    %1368 = vmatpush1.msra.mxu0 0.0
    %1369 = vmatprep.subr.mxu0 0.0
    %1370 = vmatpush1.msra.mxu0 0.0
    %1371 = vmatprep.subr.mxu0 0.0
    %1372 = vmatpush1.msra.mxu0 0.0
    %1373 = vmatprep.subr.mxu0 0.0
    %1374 = vmatpush1.msra.mxu0 0.0
    %1375 = vmatprep.subr.mxu0 0.0
    %1376 = vmatpush1.msra.mxu0 0.0
    %1377 = vmatprep.subr.mxu0 0.0
    %1378 = vmatpush1.msra.mxu0 0.0
    %1379 = vmatprep.subr.mxu0 0.0
    %1380 = vmatpush1.msra.mxu0 0.0
    %1381 = vmatprep.subr.mxu0 0.0
    %1382 = vmatpush1.msra.mxu0 0.0
    %1383 = vmatprep.subr.mxu0 0.0
    %1384 = vmatpush1.msra.mxu0 0.0
    %1385 = vmatprep.subr.mxu0 0.0
    %1386 = vmatpush1.msra.mxu0 0.0
    %1387 = vmatprep.subr.mxu0 0.0
    %1388 = vmatpush1.msra.mxu0 0.0
    %1389 = vmatprep.subr.mxu0 0.0
    %1390 = vmatpush1.msra.mxu0 0.0
    %1391 = vmatprep.subr.mxu0 0.0
    %1392 = vmatpush1.msra.mxu0 0.0
    %1393 = vmatprep.subr.mxu0 0.0
    %1394 = vmatpush1.msra.mxu0 0.0
    %1395 = vmatprep.subr.mxu0 0.0
    %1396 = vmatpush1.msra.mxu0 0.0
    %1397 = vmatprep.subr.mxu0 0.0
    %1398 = vmatpush1.msra.mxu0 0.0
    %1399 = vmatprep.subr.mxu0 0.0
    %1400 = vmatpush1.msra.mxu0 0.0
    %1401 = vmatprep.subr.mxu0 0.0
    %1402 = vmatpush1.msra.mxu0 0.0
    %1403 = vmatprep.mubr.f32.mxu0 0.0
    %1404 = vmatmul.mubr.f32.gmra.mrb[0].mxu0 %v1337
    %v1405 = vpop.f32.mrb[0].mxu0
    %v1406 = vadd.f32 0.0, %v1405
    %v1407 = vpop.f32.mrb[0].mxu0
    %1408 = vdwg.mxu0
    %1409 = vmatprep.subr.mxu0 0.0
    %1410 = vmatpush1.msra.mxu0 %v76
    %1411 = vmatprep.subr.mxu0 0.0
    %1412 = vmatpush1.msra.mxu0 %v77
    %1413 = vmatprep.subr.mxu0 0.0
    %1414 = vmatpush1.msra.mxu0 %v78
    %1415 = vmatprep.subr.mxu0 0.0
    %1416 = vmatpush1.msra.mxu0 %v79
    %1417 = vmatprep.subr.mxu0 0.0
    %1418 = vmatpush1.msra.mxu0 0.0
    %1419 = vmatprep.subr.mxu0 0.0
    %1420 = vmatpush1.msra.mxu0 0.0
    %1421 = vmatprep.subr.mxu0 0.0
    %1422 = vmatpush1.msra.mxu0 0.0
    %1423 = vmatprep.subr.mxu0 0.0
    %1424 = vmatpush1.msra.mxu0 0.0
    %1425 = vmatprep.subr.mxu0 0.0
    %1426 = vmatpush1.msra.mxu0 0.0
    %1427 = vmatprep.subr.mxu0 0.0
    %1428 = vmatpush1.msra.mxu0 0.0
    %1429 = vmatprep.subr.mxu0 0.0
    %1430 = vmatpush1.msra.mxu0 0.0
    %1431 = vmatprep.subr.mxu0 0.0
    %1432 = vmatpush1.msra.mxu0 0.0
    %1433 = vmatprep.subr.mxu0 0.0
    %1434 = vmatpush1.msra.mxu0 0.0
    %1435 = vmatprep.subr.mxu0 0.0
    %1436 = vmatpush1.msra.mxu0 0.0
    %1437 = vmatprep.subr.mxu0 0.0
    %1438 = vmatpush1.msra.mxu0 0.0
    %1439 = vmatprep.subr.mxu0 0.0
    %1440 = vmatpush1.msra.mxu0 0.0
    %1441 = vmatprep.subr.mxu0 0.0
    %1442 = vmatpush1.msra.mxu0 0.0
    %1443 = vmatprep.subr.mxu0 0.0
    %1444 = vmatpush1.msra.mxu0 0.0
    %1445 = vmatprep.subr.mxu0 0.0
    %1446 = vmatpush1.msra.mxu0 0.0
    %1447 = vmatprep.subr.mxu0 0.0
    %1448 = vmatpush1.msra.mxu0 0.0
    %1449 = vmatprep.subr.mxu0 0.0
    %1450 = vmatpush1.msra.mxu0 0.0
    %1451 = vmatprep.subr.mxu0 0.0
    %1452 = vmatpush1.msra.mxu0 0.0
    %1453 = vmatprep.subr.mxu0 0.0
    %1454 = vmatpush1.msra.mxu0 0.0
    %1455 = vmatprep.subr.mxu0 0.0
    %1456 = vmatpush1.msra.mxu0 0.0
    %1457 = vmatprep.subr.mxu0 0.0
    %1458 = vmatpush1.msra.mxu0 0.0
    %1459 = vmatprep.subr.mxu0 0.0
    %1460 = vmatpush1.msra.mxu0 0.0
    %1461 = vmatprep.subr.mxu0 0.0
    %1462 = vmatpush1.msra.mxu0 0.0
    %1463 = vmatprep.subr.mxu0 0.0
    %1464 = vmatpush1.msra.mxu0 0.0
    %1465 = vmatprep.subr.mxu0 0.0
    %1466 = vmatpush1.msra.mxu0 0.0
    %1467 = vmatprep.subr.mxu0 0.0
    %1468 = vmatpush1.msra.mxu0 0.0
    %1469 = vmatprep.subr.mxu0 0.0
    %1470 = vmatpush1.msra.mxu0 0.0
    %1471 = vmatprep.subr.mxu0 0.0
    %1472 = vmatpush1.msra.mxu0 0.0
    %1473 = vmatprep.mubr.f32.mxu0 0.0
    %1474 = vmatmul.mubr.f32.gmra.mrb[0].mxu0 %v1229
    %v1475 = vpop.f32.mrb[0].mxu0
    %v1476 = vadd.f32 %v279, %v1475
    %v1477 = vpop.f32.mrb[0].mxu0
    %1478 = vdwg.mxu0
    %v1479 = vadd.f32 %v1406, %v1476
    %v1480 = vxor.u32 %v1479, 2147483648
    %v1481 = vmul.f32 %v1480, 1.442695
    %v1482 = vpow.pop %v1481
    %v1483 = vadd.f32 %v1482, 1.0
    %v1484 = vrcp.pop %v1483
    %v1485 = vmul.f32 1.0, %v1484
    %1487 = vrot.lane.b32.xlu0 %v1476, 64
    %v1488 = vpop.permute.xlu0 %1487
    %v1490 = vmul.f32 %v1485, %v1488
    %1492 = vrot.lane.b32.xlu0 %v1490, 64
    %v1493 = vpop.permute.xlu0 %1492
    %v1495 = vadd.f32 %v1406, %v1493
    %v1496 = vtanh.pop %v1495
    %v1497 = vsub.f32 1.0, %v1485
    %1499 = vrot.lane.b32.xlu0 %v1496, 96
    %v1500 = vpop.permute.xlu0 %1499
    %v1502 = vmul.f32 %v1497, %v1500
    %v1503 = vmul.f32 %v1485, %v1225
    %v1504 = vadd.f32 %v1502, %v1503
    %1506 = vrot.lane.b32.xlu0 %v1504, 96
    %v1507 = vpop.permute.xlu0 %1506
    %v1508 = vsel %vm201, %v1507, 0
    %1510 = vmatprep.subr.mxu0 0.0
    %1511 = vmatpush1.msra.mxu0 %v82
    %1512 = vmatprep.subr.mxu0 0.0
    %1513 = vmatpush1.msra.mxu0 %v83
    %1514 = vmatprep.subr.mxu0 0.0
    %1515 = vmatpush1.msra.mxu0 %v84
    %1516 = vmatprep.subr.mxu0 0.0
    %1517 = vmatpush1.msra.mxu0 %v85
    %1518 = vmatprep.subr.mxu0 0.0
    %1519 = vmatpush1.msra.mxu0 0.0
    %1520 = vmatprep.subr.mxu0 0.0
    %1521 = vmatpush1.msra.mxu0 0.0
    %1522 = vmatprep.subr.mxu0 0.0
    %1523 = vmatpush1.msra.mxu0 0.0
    %1524 = vmatprep.subr.mxu0 0.0
    %1525 = vmatpush1.msra.mxu0 0.0
    %1526 = vmatprep.subr.mxu0 0.0
    %1527 = vmatpush1.msra.mxu0 0.0
    %1528 = vmatprep.subr.mxu0 0.0
    %1529 = vmatpush1.msra.mxu0 0.0
    %1530 = vmatprep.subr.mxu0 0.0
    %1531 = vmatpush1.msra.mxu0 0.0
    %1532 = vmatprep.subr.mxu0 0.0
    %1533 = vmatpush1.msra.mxu0 0.0
    %1534 = vmatprep.subr.mxu0 0.0
    %1535 = vmatpush1.msra.mxu0 0.0
    %1536 = vmatprep.subr.mxu0 0.0
    %1537 = vmatpush1.msra.mxu0 0.0
    %1538 = vmatprep.subr.mxu0 0.0
    %1539 = vmatpush1.msra.mxu0 0.0
    %1540 = vmatprep.subr.mxu0 0.0
    %1541 = vmatpush1.msra.mxu0 0.0
    %1542 = vmatprep.subr.mxu0 0.0
    %1543 = vmatpush1.msra.mxu0 0.0
    %1544 = vmatprep.subr.mxu0 0.0
    %1545 = vmatpush1.msra.mxu0 0.0
    %1546 = vmatprep.subr.mxu0 0.0
    %1547 = vmatpush1.msra.mxu0 0.0
    %1548 = vmatprep.subr.mxu0 0.0
    %1549 = vmatpush1.msra.mxu0 0.0
    %1550 = vmatprep.subr.mxu0 0.0
    %1551 = vmatpush1.msra.mxu0 0.0
    %1552 = vmatprep.subr.mxu0 0.0
    %1553 = vmatpush1.msra.mxu0 0.0
    %1554 = vmatprep.subr.mxu0 0.0
    %1555 = vmatpush1.msra.mxu0 0.0
    %1556 = vmatprep.subr.mxu0 0.0
    %1557 = vmatpush1.msra.mxu0 0.0
    %1558 = vmatprep.subr.mxu0 0.0
    %1559 = vmatpush1.msra.mxu0 0.0
    %1560 = vmatprep.subr.mxu0 0.0
    %1561 = vmatpush1.msra.mxu0 0.0
    %1562 = vmatprep.subr.mxu0 0.0
    %1563 = vmatpush1.msra.mxu0 0.0
    %1564 = vmatprep.subr.mxu0 0.0
    %1565 = vmatpush1.msra.mxu0 0.0
    %1566 = vmatprep.subr.mxu0 0.0
    %1567 = vmatpush1.msra.mxu0 0.0
    %1568 = vmatprep.subr.mxu0 0.0
    %1569 = vmatpush1.msra.mxu0 0.0
    %1570 = vmatprep.subr.mxu0 0.0
    %1571 = vmatpush1.msra.mxu0 0.0
    %1572 = vmatprep.subr.mxu0 0.0
    %1573 = vmatpush1.msra.mxu0 0.0
    %1574 = vmatprep.mubr.f32.mxu0 0.0
    %1575 = vmatmul.mubr.f32.gmra.mrb[0].mxu0 %v1508
    %v1576 = vpop.f32.mrb[0].mxu0
    %v1577 = vadd.f32 %v387, %v1576
    %v1578 = vpop.f32.mrb[0].mxu0
    %1579 = vdwg.mxu0
    %v1580 = vsel %vm464, %v1577, -inf
    %1581 = vmax.xlane.f32.xlu0 %v1580
    %v1582 = vpop.xlane.xlu0 %1581
    %v1583 = vsub.f32 %v1577, %v1582
    %v1584 = vmul.f32 %v1583, 1.442695
    %v1585 = vpow.pop %v1584
    %v1586 = vsel %vm464, %v1585, 0.0
    %1587 = vadd.xlane.f32.xlu0 %v1586
    %v1588 = vpop.xlane.xlu0 %1587
    %v1589 = vlog2.pop %v1588
    %v1590 = vmul.f32 %v1589, 0.6931472
    %v1591 = vadd.f32 %v1582, %v1590
    %v1592 = vsub.f32 %v1577, %v1591
    %s1593 = scalar_lea.vmem [#allocation8], 8
    %1594 = vst.msk [vmem:[%s1593] sm:$0x3] %vm464, %v1592
    %vm1595 = vcmp.eq.f32.partialorder %v1577, %v1582
    %v1596 = vsel %vm1595, %v197, 32
    %v1597 = vsel %vm464, %v1596, 2147483647
    %v1598 = vand.u32 %v1597, 65535
    %v1599 = vshra.s32 %v1597, 16
    %v1600 = vcvt.s32.f32 %v1598
    %v1601 = vcvt.s32.f32 %v1599
    %1602 = vmin.xlane.f32.xlu0 %v1601
    %v1603 = vpop.xlane.xlu0 %1602
    %vm1604 = vcmp.eq.f32.partialorder %v1601, %v1603
    %v1605 = vsel %vm1604, %v1600, inf
    %1606 = vmin.xlane.f32.xlu0 %v1605
    %v1607 = vpop.xlane.xlu0 %1606
    %v1608 = vcvt.f32.s32 %v1607
    %v1609 = vcvt.f32.s32 %v1603
    %v1610 = vshll.u32 %v1609, 16
    %v1611 = vadd.s32 %v1610, %v1608
    %vm1612 = vcmp.eq.s32.totalorder %v197, %v1611
    %v1613 = vsel %vm1612, 1, 0
    %v1614 = vcvt.s32.f32 %v1613
    %v1616 = vsel %vm201, %v1614, 0
    %1618 = vmatprep.subr.mxu0 0.0
    %1619 = vmatpush1.msra.mxu0 %v178
    %1620 = vmatprep.subr.mxu0 0.0
    %1621 = vmatpush1.msra.mxu0 %v183
    %1622 = vmatprep.subr.mxu0 0.0
    %1623 = vmatpush1.msra.mxu0 %v188
    %1624 = vmatprep.subr.mxu0 0.0
    %1625 = vmatpush1.msra.mxu0 %v193
    %1626 = vmatprep.subr.mxu0 0.0
    %1627 = vmatpush1.msra.mxu0 0.0
    %1628 = vmatprep.subr.mxu0 0.0
    %1629 = vmatpush1.msra.mxu0 0.0
    %1630 = vmatprep.subr.mxu0 0.0
    %1631 = vmatpush1.msra.mxu0 0.0
    %1632 = vmatprep.subr.mxu0 0.0
    %1633 = vmatpush1.msra.mxu0 0.0
    %1634 = vmatprep.subr.mxu0 0.0
    %1635 = vmatpush1.msra.mxu0 0.0
    %1636 = vmatprep.subr.mxu0 0.0
    %1637 = vmatpush1.msra.mxu0 0.0
    %1638 = vmatprep.subr.mxu0 0.0
    %1639 = vmatpush1.msra.mxu0 0.0
    %1640 = vmatprep.subr.mxu0 0.0
    %1641 = vmatpush1.msra.mxu0 0.0
    %1642 = vmatprep.subr.mxu0 0.0
    %1643 = vmatpush1.msra.mxu0 0.0
    %1644 = vmatprep.subr.mxu0 0.0
    %1645 = vmatpush1.msra.mxu0 0.0
    %1646 = vmatprep.subr.mxu0 0.0
    %1647 = vmatpush1.msra.mxu0 0.0
    %1648 = vmatprep.subr.mxu0 0.0
    %1649 = vmatpush1.msra.mxu0 0.0
    %1650 = vmatprep.subr.mxu0 0.0
    %1651 = vmatpush1.msra.mxu0 0.0
    %1652 = vmatprep.subr.mxu0 0.0
    %1653 = vmatpush1.msra.mxu0 0.0
    %1654 = vmatprep.subr.mxu0 0.0
    %1655 = vmatpush1.msra.mxu0 0.0
    %1656 = vmatprep.subr.mxu0 0.0
    %1657 = vmatpush1.msra.mxu0 0.0
    %1658 = vmatprep.subr.mxu0 0.0
    %1659 = vmatpush1.msra.mxu0 0.0
    %1660 = vmatprep.subr.mxu0 0.0
    %1661 = vmatpush1.msra.mxu0 0.0
    %1662 = vmatprep.subr.mxu0 0.0
    %1663 = vmatpush1.msra.mxu0 0.0
    %1664 = vmatprep.subr.mxu0 0.0
    %1665 = vmatpush1.msra.mxu0 0.0
    %1666 = vmatprep.subr.mxu0 0.0
    %1667 = vmatpush1.msra.mxu0 0.0
    %1668 = vmatprep.subr.mxu0 0.0
    %1669 = vmatpush1.msra.mxu0 0.0
    %1670 = vmatprep.subr.mxu0 0.0
    %1671 = vmatpush1.msra.mxu0 0.0
    %1672 = vmatprep.subr.mxu0 0.0
    %1673 = vmatpush1.msra.mxu0 0.0
    %1674 = vmatprep.subr.mxu0 0.0
    %1675 = vmatpush1.msra.mxu0 0.0
    %1676 = vmatprep.subr.mxu0 0.0
    %1677 = vmatpush1.msra.mxu0 0.0
    %1678 = vmatprep.subr.mxu0 0.0
    %1679 = vmatpush1.msra.mxu0 0.0
    %1680 = vmatprep.subr.mxu0 0.0
    %1681 = vmatpush1.msra.mxu0 0.0
    %1682 = vmatprep.mubr.f32.mxu0 0.0
    %1683 = vmatmul.mubr.f32.gmra.mrb[0].mxu0 %v1616
    %v1684 = vpop.f32.mrb[0].mxu0
    %v1685 = vadd.f32 0.0, %v1684
    %v1686 = vpop.f32.mrb[0].mxu0
    %1687 = vdwg.mxu0
    %1688 = vmatprep.subr.mxu0 0.0
    %1689 = vmatpush1.msra.mxu0 %v76
    %1690 = vmatprep.subr.mxu0 0.0
    %1691 = vmatpush1.msra.mxu0 %v77
    %1692 = vmatprep.subr.mxu0 0.0
    %1693 = vmatpush1.msra.mxu0 %v78
    %1694 = vmatprep.subr.mxu0 0.0
    %1695 = vmatpush1.msra.mxu0 %v79
    %1696 = vmatprep.subr.mxu0 0.0
    %1697 = vmatpush1.msra.mxu0 0.0
    %1698 = vmatprep.subr.mxu0 0.0
    %1699 = vmatpush1.msra.mxu0 0.0
    %1700 = vmatprep.subr.mxu0 0.0
    %1701 = vmatpush1.msra.mxu0 0.0
    %1702 = vmatprep.subr.mxu0 0.0
    %1703 = vmatpush1.msra.mxu0 0.0
    %1704 = vmatprep.subr.mxu0 0.0
    %1705 = vmatpush1.msra.mxu0 0.0
    %1706 = vmatprep.subr.mxu0 0.0
    %1707 = vmatpush1.msra.mxu0 0.0
    %1708 = vmatprep.subr.mxu0 0.0
    %1709 = vmatpush1.msra.mxu0 0.0
    %1710 = vmatprep.subr.mxu0 0.0
    %1711 = vmatpush1.msra.mxu0 0.0
    %1712 = vmatprep.subr.mxu0 0.0
    %1713 = vmatpush1.msra.mxu0 0.0
    %1714 = vmatprep.subr.mxu0 0.0
    %1715 = vmatpush1.msra.mxu0 0.0
    %1716 = vmatprep.subr.mxu0 0.0
    %1717 = vmatpush1.msra.mxu0 0.0
    %1718 = vmatprep.subr.mxu0 0.0
    %1719 = vmatpush1.msra.mxu0 0.0
    %1720 = vmatprep.subr.mxu0 0.0
    %1721 = vmatpush1.msra.mxu0 0.0
    %1722 = vmatprep.subr.mxu0 0.0
    %1723 = vmatpush1.msra.mxu0 0.0
    %1724 = vmatprep.subr.mxu0 0.0
    %1725 = vmatpush1.msra.mxu0 0.0
    %1726 = vmatprep.subr.mxu0 0.0
    %1727 = vmatpush1.msra.mxu0 0.0
    %1728 = vmatprep.subr.mxu0 0.0
    %1729 = vmatpush1.msra.mxu0 0.0
    %1730 = vmatprep.subr.mxu0 0.0
    %1731 = vmatpush1.msra.mxu0 0.0
    %1732 = vmatprep.subr.mxu0 0.0
    %1733 = vmatpush1.msra.mxu0 0.0
    %1734 = vmatprep.subr.mxu0 0.0
    %1735 = vmatpush1.msra.mxu0 0.0
    %1736 = vmatprep.subr.mxu0 0.0
    %1737 = vmatpush1.msra.mxu0 0.0
    %1738 = vmatprep.subr.mxu0 0.0
    %1739 = vmatpush1.msra.mxu0 0.0
    %1740 = vmatprep.subr.mxu0 0.0
    %1741 = vmatpush1.msra.mxu0 0.0
    %1742 = vmatprep.subr.mxu0 0.0
    %1743 = vmatpush1.msra.mxu0 0.0
    %1744 = vmatprep.subr.mxu0 0.0
    %1745 = vmatpush1.msra.mxu0 0.0
    %1746 = vmatprep.subr.mxu0 0.0
    %1747 = vmatpush1.msra.mxu0 0.0
    %1748 = vmatprep.subr.mxu0 0.0
    %1749 = vmatpush1.msra.mxu0 0.0
    %1750 = vmatprep.subr.mxu0 0.0
    %1751 = vmatpush1.msra.mxu0 0.0
    %1752 = vmatprep.mubr.f32.mxu0 0.0
    %1753 = vmatmul.mubr.f32.gmra.mrb[0].mxu0 %v1508
    %v1754 = vpop.f32.mrb[0].mxu0
    %v1755 = vadd.f32 %v279, %v1754
    %v1756 = vpop.f32.mrb[0].mxu0
    %1757 = vdwg.mxu0
    %v1758 = vadd.f32 %v1685, %v1755
    %v1759 = vxor.u32 %v1758, 2147483648
    %v1760 = vmul.f32 %v1759, 1.442695
    %v1761 = vpow.pop %v1760
    %v1762 = vadd.f32 %v1761, 1.0
    %v1763 = vrcp.pop %v1762
    %v1764 = vmul.f32 1.0, %v1763
    %1766 = vrot.lane.b32.xlu0 %v1755, 64
    %v1767 = vpop.permute.xlu0 %1766
    %v1769 = vmul.f32 %v1764, %v1767
    %1771 = vrot.lane.b32.xlu0 %v1769, 64
    %v1772 = vpop.permute.xlu0 %1771
    %v1774 = vadd.f32 %v1685, %v1772
    %v1775 = vtanh.pop %v1774
    %v1776 = vsub.f32 1.0, %v1764
    %1778 = vrot.lane.b32.xlu0 %v1775, 96
    %v1779 = vpop.permute.xlu0 %1778
    %v1781 = vmul.f32 %v1776, %v1779
    %v1782 = vmul.f32 %v1764, %v1504
    %v1783 = vadd.f32 %v1781, %v1782
    %1785 = vrot.lane.b32.xlu0 %v1783, 96
    %v1786 = vpop.permute.xlu0 %1785
    %v1787 = vsel %vm201, %v1786, 0
    %1789 = vmatprep.subr.mxu0 0.0
    %1790 = vmatpush1.msra.mxu0 %v82
    %1791 = vmatprep.subr.mxu0 0.0
    %1792 = vmatpush1.msra.mxu0 %v83
    %1793 = vmatprep.subr.mxu0 0.0
    %1794 = vmatpush1.msra.mxu0 %v84
    %1795 = vmatprep.subr.mxu0 0.0
    %1796 = vmatpush1.msra.mxu0 %v85
    %1797 = vmatprep.subr.mxu0 0.0
    %1798 = vmatpush1.msra.mxu0 0.0
    %1799 = vmatprep.subr.mxu0 0.0
    %1800 = vmatpush1.msra.mxu0 0.0
    %1801 = vmatprep.subr.mxu0 0.0
    %1802 = vmatpush1.msra.mxu0 0.0
    %1803 = vmatprep.subr.mxu0 0.0
    %1804 = vmatpush1.msra.mxu0 0.0
    %1805 = vmatprep.subr.mxu0 0.0
    %1806 = vmatpush1.msra.mxu0 0.0
    %1807 = vmatprep.subr.mxu0 0.0
    %1808 = vmatpush1.msra.mxu0 0.0
    %1809 = vmatprep.subr.mxu0 0.0
    %1810 = vmatpush1.msra.mxu0 0.0
    %1811 = vmatprep.subr.mxu0 0.0
    %1812 = vmatpush1.msra.mxu0 0.0
    %1813 = vmatprep.subr.mxu0 0.0
    %1814 = vmatpush1.msra.mxu0 0.0
    %1815 = vmatprep.subr.mxu0 0.0
    %1816 = vmatpush1.msra.mxu0 0.0
    %1817 = vmatprep.subr.mxu0 0.0
    %1818 = vmatpush1.msra.mxu0 0.0
    %1819 = vmatprep.subr.mxu0 0.0
    %1820 = vmatpush1.msra.mxu0 0.0
    %1821 = vmatprep.subr.mxu0 0.0
    %1822 = vmatpush1.msra.mxu0 0.0
    %1823 = vmatprep.subr.mxu0 0.0
    %1824 = vmatpush1.msra.mxu0 0.0
    %1825 = vmatprep.subr.mxu0 0.0
    %1826 = vmatpush1.msra.mxu0 0.0
    %1827 = vmatprep.subr.mxu0 0.0
    %1828 = vmatpush1.msra.mxu0 0.0
    %1829 = vmatprep.subr.mxu0 0.0
    %1830 = vmatpush1.msra.mxu0 0.0
    %1831 = vmatprep.subr.mxu0 0.0
    %1832 = vmatpush1.msra.mxu0 0.0
    %1833 = vmatprep.subr.mxu0 0.0
    %1834 = vmatpush1.msra.mxu0 0.0
    %1835 = vmatprep.subr.mxu0 0.0
    %1836 = vmatpush1.msra.mxu0 0.0
    %1837 = vmatprep.subr.mxu0 0.0
    %1838 = vmatpush1.msra.mxu0 0.0
    %1839 = vmatprep.subr.mxu0 0.0
    %1840 = vmatpush1.msra.mxu0 0.0
    %1841 = vmatprep.subr.mxu0 0.0
    %1842 = vmatpush1.msra.mxu0 0.0
    %1843 = vmatprep.subr.mxu0 0.0
    %1844 = vmatpush1.msra.mxu0 0.0
    %1845 = vmatprep.subr.mxu0 0.0
    %1846 = vmatpush1.msra.mxu0 0.0
    %1847 = vmatprep.subr.mxu0 0.0
    %1848 = vmatpush1.msra.mxu0 0.0
    %1849 = vmatprep.subr.mxu0 0.0
    %1850 = vmatpush1.msra.mxu0 0.0
    %1851 = vmatprep.subr.mxu0 0.0
    %1852 = vmatpush1.msra.mxu0 0.0
    %1853 = vmatprep.mubr.f32.mxu0 0.0
    %1854 = vmatmul.mubr.f32.gmra.mrb[0].mxu0 %v1787
    %v1855 = vpop.f32.mrb[0].mxu0
    %v1856 = vadd.f32 %v387, %v1855
    %v1857 = vpop.f32.mrb[0].mxu0
    %1858 = vdwg.mxu0
    %v1859 = vsel %vm464, %v1856, -inf
    %1860 = vmax.xlane.f32.xlu0 %v1859
    %v1861 = vpop.xlane.xlu0 %1860
    %v1862 = vsub.f32 %v1856, %v1861
    %v1863 = vmul.f32 %v1862, 1.442695
    %v1864 = vpow.pop %v1863
    %v1865 = vsel %vm464, %v1864, 0.0
    %1866 = vadd.xlane.f32.xlu0 %v1865
    %v1867 = vpop.xlane.xlu0 %1866
    %v1868 = vlog2.pop %v1867
    %v1869 = vmul.f32 %v1868, 0.6931472
    %v1870 = vadd.f32 %v1861, %v1869
    %v1871 = vsub.f32 %v1856, %v1870
    %s1872 = scalar_lea.vmem [#allocation8], 10
    %1873 = vst.msk [vmem:[%s1872] sm:$0x3] %vm464, %v1871
    %vm1874 = vcmp.eq.f32.partialorder %v1856, %v1861
    %v1875 = vsel %vm1874, %v197, 32
    %v1876 = vsel %vm464, %v1875, 2147483647
    %v1877 = vand.u32 %v1876, 65535
    %v1878 = vshra.s32 %v1876, 16
    %v1879 = vcvt.s32.f32 %v1877
    %v1880 = vcvt.s32.f32 %v1878
    %1881 = vmin.xlane.f32.xlu0 %v1880
    %v1882 = vpop.xlane.xlu0 %1881
    %vm1883 = vcmp.eq.f32.partialorder %v1880, %v1882
    %v1884 = vsel %vm1883, %v1879, inf
    %1885 = vmin.xlane.f32.xlu0 %v1884
    %v1886 = vpop.xlane.xlu0 %1885
    %v1887 = vcvt.f32.s32 %v1886
    %v1888 = vcvt.f32.s32 %v1882
    %v1889 = vshll.u32 %v1888, 16
    %v1890 = vadd.s32 %v1889, %v1887
    %vm1891 = vcmp.eq.s32.totalorder %v197, %v1890
    %v1892 = vsel %vm1891, 1, 0
    %v1893 = vcvt.s32.f32 %v1892
    %v1895 = vsel %vm201, %v1893, 0
    %1897 = vmatprep.subr.mxu0 0.0
    %1898 = vmatpush1.msra.mxu0 %v178
    %1899 = vmatprep.subr.mxu0 0.0
    %1900 = vmatpush1.msra.mxu0 %v183
    %1901 = vmatprep.subr.mxu0 0.0
    %1902 = vmatpush1.msra.mxu0 %v188
    %1903 = vmatprep.subr.mxu0 0.0
    %1904 = vmatpush1.msra.mxu0 %v193
    %1905 = vmatprep.subr.mxu0 0.0
    %1906 = vmatpush1.msra.mxu0 0.0
    %1907 = vmatprep.subr.mxu0 0.0
    %1908 = vmatpush1.msra.mxu0 0.0
    %1909 = vmatprep.subr.mxu0 0.0
    %1910 = vmatpush1.msra.mxu0 0.0
    %1911 = vmatprep.subr.mxu0 0.0
    %1912 = vmatpush1.msra.mxu0 0.0
    %1913 = vmatprep.subr.mxu0 0.0
    %1914 = vmatpush1.msra.mxu0 0.0
    %1915 = vmatprep.subr.mxu0 0.0
    %1916 = vmatpush1.msra.mxu0 0.0
    %1917 = vmatprep.subr.mxu0 0.0
    %1918 = vmatpush1.msra.mxu0 0.0
    %1919 = vmatprep.subr.mxu0 0.0
    %1920 = vmatpush1.msra.mxu0 0.0
    %1921 = vmatprep.subr.mxu0 0.0
    %1922 = vmatpush1.msra.mxu0 0.0
    %1923 = vmatprep.subr.mxu0 0.0
    %1924 = vmatpush1.msra.mxu0 0.0
    %1925 = vmatprep.subr.mxu0 0.0
    %1926 = vmatpush1.msra.mxu0 0.0
    %1927 = vmatprep.subr.mxu0 0.0
    %1928 = vmatpush1.msra.mxu0 0.0
    %1929 = vmatprep.subr.mxu0 0.0
    %1930 = vmatpush1.msra.mxu0 0.0
    %1931 = vmatprep.subr.mxu0 0.0
    %1932 = vmatpush1.msra.mxu0 0.0
    %1933 = vmatprep.subr.mxu0 0.0
    %1934 = vmatpush1.msra.mxu0 0.0
    %1935 = vmatprep.subr.mxu0 0.0
    %1936 = vmatpush1.msra.mxu0 0.0
    %1937 = vmatprep.subr.mxu0 0.0
    %1938 = vmatpush1.msra.mxu0 0.0
    %1939 = vmatprep.subr.mxu0 0.0
    %1940 = vmatpush1.msra.mxu0 0.0
    %1941 = vmatprep.subr.mxu0 0.0
    %1942 = vmatpush1.msra.mxu0 0.0
    %1943 = vmatprep.subr.mxu0 0.0
    %1944 = vmatpush1.msra.mxu0 0.0
    %1945 = vmatprep.subr.mxu0 0.0
    %1946 = vmatpush1.msra.mxu0 0.0
    %1947 = vmatprep.subr.mxu0 0.0
    %1948 = vmatpush1.msra.mxu0 0.0
    %1949 = vmatprep.subr.mxu0 0.0
    %1950 = vmatpush1.msra.mxu0 0.0
    %1951 = vmatprep.subr.mxu0 0.0
    %1952 = vmatpush1.msra.mxu0 0.0
    %1953 = vmatprep.subr.mxu0 0.0
    %1954 = vmatpush1.msra.mxu0 0.0
    %1955 = vmatprep.subr.mxu0 0.0
    %1956 = vmatpush1.msra.mxu0 0.0
    %1957 = vmatprep.subr.mxu0 0.0
    %1958 = vmatpush1.msra.mxu0 0.0
    %1959 = vmatprep.subr.mxu0 0.0
    %1960 = vmatpush1.msra.mxu0 0.0
    %1961 = vmatprep.mubr.f32.mxu0 0.0
    %1962 = vmatmul.mubr.f32.gmra.mrb[0].mxu0 %v1895
    %v1963 = vpop.f32.mrb[0].mxu0
    %v1964 = vadd.f32 0.0, %v1963
    %v1965 = vpop.f32.mrb[0].mxu0
    %1966 = vdwg.mxu0
    %1967 = vmatprep.subr.mxu0 0.0
    %1968 = vmatpush1.msra.mxu0 %v76
    %1969 = vmatprep.subr.mxu0 0.0
    %1970 = vmatpush1.msra.mxu0 %v77
    %1971 = vmatprep.subr.mxu0 0.0
    %1972 = vmatpush1.msra.mxu0 %v78
    %1973 = vmatprep.subr.mxu0 0.0
    %1974 = vmatpush1.msra.mxu0 %v79
    %1975 = vmatprep.subr.mxu0 0.0
    %1976 = vmatpush1.msra.mxu0 0.0
    %1977 = vmatprep.subr.mxu0 0.0
    %1978 = vmatpush1.msra.mxu0 0.0
    %1979 = vmatprep.subr.mxu0 0.0
    %1980 = vmatpush1.msra.mxu0 0.0
    %1981 = vmatprep.subr.mxu0 0.0
    %1982 = vmatpush1.msra.mxu0 0.0
    %1983 = vmatprep.subr.mxu0 0.0
    %1984 = vmatpush1.msra.mxu0 0.0
    %1985 = vmatprep.subr.mxu0 0.0
    %1986 = vmatpush1.msra.mxu0 0.0
    %1987 = vmatprep.subr.mxu0 0.0
    %1988 = vmatpush1.msra.mxu0 0.0
    %1989 = vmatprep.subr.mxu0 0.0
    %1990 = vmatpush1.msra.mxu0 0.0
    %1991 = vmatprep.subr.mxu0 0.0
    %1992 = vmatpush1.msra.mxu0 0.0
    %1993 = vmatprep.subr.mxu0 0.0
    %1994 = vmatpush1.msra.mxu0 0.0
    %1995 = vmatprep.subr.mxu0 0.0
    %1996 = vmatpush1.msra.mxu0 0.0
    %1997 = vmatprep.subr.mxu0 0.0
    %1998 = vmatpush1.msra.mxu0 0.0
    %1999 = vmatprep.subr.mxu0 0.0
    %2000 = vmatpush1.msra.mxu0 0.0
    %2001 = vmatprep.subr.mxu0 0.0
    %2002 = vmatpush1.msra.mxu0 0.0
    %2003 = vmatprep.subr.mxu0 0.0
    %2004 = vmatpush1.msra.mxu0 0.0
    %2005 = vmatprep.subr.mxu0 0.0
    %2006 = vmatpush1.msra.mxu0 0.0
    %2007 = vmatprep.subr.mxu0 0.0
    %2008 = vmatpush1.msra.mxu0 0.0
    %2009 = vmatprep.subr.mxu0 0.0
    %2010 = vmatpush1.msra.mxu0 0.0
    %2011 = vmatprep.subr.mxu0 0.0
    %2012 = vmatpush1.msra.mxu0 0.0
    %2013 = vmatprep.subr.mxu0 0.0
    %2014 = vmatpush1.msra.mxu0 0.0
    %2015 = vmatprep.subr.mxu0 0.0
    %2016 = vmatpush1.msra.mxu0 0.0
    %2017 = vmatprep.subr.mxu0 0.0
    %2018 = vmatpush1.msra.mxu0 0.0
    %2019 = vmatprep.subr.mxu0 0.0
    %2020 = vmatpush1.msra.mxu0 0.0
    %2021 = vmatprep.subr.mxu0 0.0
    %2022 = vmatpush1.msra.mxu0 0.0
    %2023 = vmatprep.subr.mxu0 0.0
    %2024 = vmatpush1.msra.mxu0 0.0
    %2025 = vmatprep.subr.mxu0 0.0
    %2026 = vmatpush1.msra.mxu0 0.0
    %2027 = vmatprep.subr.mxu0 0.0
    %2028 = vmatpush1.msra.mxu0 0.0
    %2029 = vmatprep.subr.mxu0 0.0
    %2030 = vmatpush1.msra.mxu0 0.0
    %2031 = vmatprep.mubr.f32.mxu0 0.0
    %2032 = vmatmul.mubr.f32.gmra.mrb[0].mxu0 %v1787
    %v2033 = vpop.f32.mrb[0].mxu0
    %v2034 = vadd.f32 %v279, %v2033
    %v2035 = vpop.f32.mrb[0].mxu0
    %2036 = vdwg.mxu0
    %v2037 = vadd.f32 %v1964, %v2034
    %v2038 = vxor.u32 %v2037, 2147483648
    %v2039 = vmul.f32 %v2038, 1.442695
    %v2040 = vpow.pop %v2039
    %v2041 = vadd.f32 %v2040, 1.0
    %v2042 = vrcp.pop %v2041
    %v2043 = vmul.f32 1.0, %v2042
    %2045 = vrot.lane.b32.xlu0 %v2034, 64
    %v2046 = vpop.permute.xlu0 %2045
    %v2048 = vmul.f32 %v2043, %v2046
    %2050 = vrot.lane.b32.xlu0 %v2048, 64
    %v2051 = vpop.permute.xlu0 %2050
    %v2053 = vadd.f32 %v1964, %v2051
    %v2054 = vtanh.pop %v2053
    %v2055 = vsub.f32 1.0, %v2043
    %2057 = vrot.lane.b32.xlu0 %v2054, 96
    %v2058 = vpop.permute.xlu0 %2057
    %v2060 = vmul.f32 %v2055, %v2058
    %v2061 = vmul.f32 %v2043, %v1783
    %v2062 = vadd.f32 %v2060, %v2061
    %2064 = vrot.lane.b32.xlu0 %v2062, 96
    %v2065 = vpop.permute.xlu0 %2064
    %v2066 = vsel %vm201, %v2065, 0
    %2068 = vmatprep.subr.mxu0 0.0
    %2069 = vmatpush1.msra.mxu0 %v82
    %2070 = vmatprep.subr.mxu0 0.0
    %2071 = vmatpush1.msra.mxu0 %v83
    %2072 = vmatprep.subr.mxu0 0.0
    %2073 = vmatpush1.msra.mxu0 %v84
    %2074 = vmatprep.subr.mxu0 0.0
    %2075 = vmatpush1.msra.mxu0 %v85
    %2076 = vmatprep.subr.mxu0 0.0
    %2077 = vmatpush1.msra.mxu0 0.0
    %2078 = vmatprep.subr.mxu0 0.0
    %2079 = vmatpush1.msra.mxu0 0.0
    %2080 = vmatprep.subr.mxu0 0.0
    %2081 = vmatpush1.msra.mxu0 0.0
    %2082 = vmatprep.subr.mxu0 0.0
    %2083 = vmatpush1.msra.mxu0 0.0
    %2084 = vmatprep.subr.mxu0 0.0
    %2085 = vmatpush1.msra.mxu0 0.0
    %2086 = vmatprep.subr.mxu0 0.0
    %2087 = vmatpush1.msra.mxu0 0.0
    %2088 = vmatprep.subr.mxu0 0.0
    %2089 = vmatpush1.msra.mxu0 0.0
    %2090 = vmatprep.subr.mxu0 0.0
    %2091 = vmatpush1.msra.mxu0 0.0
    %2092 = vmatprep.subr.mxu0 0.0
    %2093 = vmatpush1.msra.mxu0 0.0
    %2094 = vmatprep.subr.mxu0 0.0
    %2095 = vmatpush1.msra.mxu0 0.0
    %2096 = vmatprep.subr.mxu0 0.0
    %2097 = vmatpush1.msra.mxu0 0.0
    %2098 = vmatprep.subr.mxu0 0.0
    %2099 = vmatpush1.msra.mxu0 0.0
    %2100 = vmatprep.subr.mxu0 0.0
    %2101 = vmatpush1.msra.mxu0 0.0
    %2102 = vmatprep.subr.mxu0 0.0
    %2103 = vmatpush1.msra.mxu0 0.0
    %2104 = vmatprep.subr.mxu0 0.0
    %2105 = vmatpush1.msra.mxu0 0.0
    %2106 = vmatprep.subr.mxu0 0.0
    %2107 = vmatpush1.msra.mxu0 0.0
    %2108 = vmatprep.subr.mxu0 0.0
    %2109 = vmatpush1.msra.mxu0 0.0
    %2110 = vmatprep.subr.mxu0 0.0
    %2111 = vmatpush1.msra.mxu0 0.0
    %2112 = vmatprep.subr.mxu0 0.0
    %2113 = vmatpush1.msra.mxu0 0.0
    %2114 = vmatprep.subr.mxu0 0.0
    %2115 = vmatpush1.msra.mxu0 0.0
    %2116 = vmatprep.subr.mxu0 0.0
    %2117 = vmatpush1.msra.mxu0 0.0
    %2118 = vmatprep.subr.mxu0 0.0
    %2119 = vmatpush1.msra.mxu0 0.0
    %2120 = vmatprep.subr.mxu0 0.0
    %2121 = vmatpush1.msra.mxu0 0.0
    %2122 = vmatprep.subr.mxu0 0.0
    %2123 = vmatpush1.msra.mxu0 0.0
    %2124 = vmatprep.subr.mxu0 0.0
    %2125 = vmatpush1.msra.mxu0 0.0
    %2126 = vmatprep.subr.mxu0 0.0
    %2127 = vmatpush1.msra.mxu0 0.0
    %2128 = vmatprep.subr.mxu0 0.0
    %2129 = vmatpush1.msra.mxu0 0.0
    %2130 = vmatprep.subr.mxu0 0.0
    %2131 = vmatpush1.msra.mxu0 0.0
    %2132 = vmatprep.mubr.f32.mxu0 0.0
    %2133 = vmatmul.mubr.f32.gmra.mrb[0].mxu0 %v2066
    %v2134 = vpop.f32.mrb[0].mxu0
    %v2135 = vadd.f32 %v387, %v2134
    %v2136 = vpop.f32.mrb[0].mxu0
    %2137 = vdwg.mxu0
    %v2138 = vsel %vm464, %v2135, -inf
    %2139 = vmax.xlane.f32.xlu0 %v2138
    %v2140 = vpop.xlane.xlu0 %2139
    %v2141 = vsub.f32 %v2135, %v2140
    %v2142 = vmul.f32 %v2141, 1.442695
    %v2143 = vpow.pop %v2142
    %v2144 = vsel %vm464, %v2143, 0.0
    %2145 = vadd.xlane.f32.xlu0 %v2144
    %v2146 = vpop.xlane.xlu0 %2145
    %v2147 = vlog2.pop %v2146
    %v2148 = vmul.f32 %v2147, 0.6931472
    %v2149 = vadd.f32 %v2140, %v2148
    %v2150 = vsub.f32 %v2135, %v2149
    %s2151 = scalar_lea.vmem [#allocation8], 12
    %2152 = vst.msk [vmem:[%s2151] sm:$0x3] %vm464, %v2150
    %vm2153 = vcmp.eq.f32.partialorder %v2135, %v2140
    %v2154 = vsel %vm2153, %v197, 32
    %v2155 = vsel %vm464, %v2154, 2147483647
    %v2156 = vand.u32 %v2155, 65535
    %v2157 = vshra.s32 %v2155, 16
    %v2158 = vcvt.s32.f32 %v2156
    %v2159 = vcvt.s32.f32 %v2157
    %2160 = vmin.xlane.f32.xlu0 %v2159
    %v2161 = vpop.xlane.xlu0 %2160
    %vm2162 = vcmp.eq.f32.partialorder %v2159, %v2161
    %v2163 = vsel %vm2162, %v2158, inf
    %2164 = vmin.xlane.f32.xlu0 %v2163
    %v2165 = vpop.xlane.xlu0 %2164
    %v2166 = vcvt.f32.s32 %v2165
    %v2167 = vcvt.f32.s32 %v2161
    %v2168 = vshll.u32 %v2167, 16
    %v2169 = vadd.s32 %v2168, %v2166
    %vm2170 = vcmp.eq.s32.totalorder %v197, %v2169
    %v2171 = vsel %vm2170, 1, 0
    %v2172 = vcvt.s32.f32 %v2171
    %v2174 = vsel %vm201, %v2172, 0
    %2176 = vmatprep.subr.mxu0 0.0
    %2177 = vmatpush1.msra.mxu0 %v178
    %2178 = vmatprep.subr.mxu0 0.0
    %2179 = vmatpush1.msra.mxu0 %v183
    %2180 = vmatprep.subr.mxu0 0.0
    %2181 = vmatpush1.msra.mxu0 %v188
    %2182 = vmatprep.subr.mxu0 0.0
    %2183 = vmatpush1.msra.mxu0 %v193
    %2184 = vmatprep.subr.mxu0 0.0
    %2185 = vmatpush1.msra.mxu0 0.0
    %2186 = vmatprep.subr.mxu0 0.0
    %2187 = vmatpush1.msra.mxu0 0.0
    %2188 = vmatprep.subr.mxu0 0.0
    %2189 = vmatpush1.msra.mxu0 0.0
    %2190 = vmatprep.subr.mxu0 0.0
    %2191 = vmatpush1.msra.mxu0 0.0
    %2192 = vmatprep.subr.mxu0 0.0
    %2193 = vmatpush1.msra.mxu0 0.0
    %2194 = vmatprep.subr.mxu0 0.0
    %2195 = vmatpush1.msra.mxu0 0.0
    %2196 = vmatprep.subr.mxu0 0.0
    %2197 = vmatpush1.msra.mxu0 0.0
    %2198 = vmatprep.subr.mxu0 0.0
    %2199 = vmatpush1.msra.mxu0 0.0
    %2200 = vmatprep.subr.mxu0 0.0
    %2201 = vmatpush1.msra.mxu0 0.0
    %2202 = vmatprep.subr.mxu0 0.0
    %2203 = vmatpush1.msra.mxu0 0.0
    %2204 = vmatprep.subr.mxu0 0.0
    %2205 = vmatpush1.msra.mxu0 0.0
    %2206 = vmatprep.subr.mxu0 0.0
    %2207 = vmatpush1.msra.mxu0 0.0
    %2208 = vmatprep.subr.mxu0 0.0
    %2209 = vmatpush1.msra.mxu0 0.0
    %2210 = vmatprep.subr.mxu0 0.0
    %2211 = vmatpush1.msra.mxu0 0.0
    %2212 = vmatprep.subr.mxu0 0.0
    %2213 = vmatpush1.msra.mxu0 0.0
    %2214 = vmatprep.subr.mxu0 0.0
    %2215 = vmatpush1.msra.mxu0 0.0
    %2216 = vmatprep.subr.mxu0 0.0
    %2217 = vmatpush1.msra.mxu0 0.0
    %2218 = vmatprep.subr.mxu0 0.0
    %2219 = vmatpush1.msra.mxu0 0.0
    %2220 = vmatprep.subr.mxu0 0.0
    %2221 = vmatpush1.msra.mxu0 0.0
    %2222 = vmatprep.subr.mxu0 0.0
    %2223 = vmatpush1.msra.mxu0 0.0
    %2224 = vmatprep.subr.mxu0 0.0
    %2225 = vmatpush1.msra.mxu0 0.0
    %2226 = vmatprep.subr.mxu0 0.0
    %2227 = vmatpush1.msra.mxu0 0.0
    %2228 = vmatprep.subr.mxu0 0.0
    %2229 = vmatpush1.msra.mxu0 0.0
    %2230 = vmatprep.subr.mxu0 0.0
    %2231 = vmatpush1.msra.mxu0 0.0
    %2232 = vmatprep.subr.mxu0 0.0
    %2233 = vmatpush1.msra.mxu0 0.0
    %2234 = vmatprep.subr.mxu0 0.0
    %2235 = vmatpush1.msra.mxu0 0.0
    %2236 = vmatprep.subr.mxu0 0.0
    %2237 = vmatpush1.msra.mxu0 0.0
    %2238 = vmatprep.subr.mxu0 0.0
    %2239 = vmatpush1.msra.mxu0 0.0
    %2240 = vmatprep.mubr.f32.mxu0 0.0
    %2241 = vmatmul.mubr.f32.gmra.mrb[0].mxu0 %v2174
    %v2242 = vpop.f32.mrb[0].mxu0
    %v2243 = vadd.f32 0.0, %v2242
    %v2244 = vpop.f32.mrb[0].mxu0
    %2245 = vdwg.mxu0
    %2246 = vmatprep.subr.mxu0 0.0
    %2247 = vmatpush1.msra.mxu0 %v76
    %2248 = vmatprep.subr.mxu0 0.0
    %2249 = vmatpush1.msra.mxu0 %v77
    %2250 = vmatprep.subr.mxu0 0.0
    %2251 = vmatpush1.msra.mxu0 %v78
    %2252 = vmatprep.subr.mxu0 0.0
    %2253 = vmatpush1.msra.mxu0 %v79
    %2254 = vmatprep.subr.mxu0 0.0
    %2255 = vmatpush1.msra.mxu0 0.0
    %2256 = vmatprep.subr.mxu0 0.0
    %2257 = vmatpush1.msra.mxu0 0.0
    %2258 = vmatprep.subr.mxu0 0.0
    %2259 = vmatpush1.msra.mxu0 0.0
    %2260 = vmatprep.subr.mxu0 0.0
    %2261 = vmatpush1.msra.mxu0 0.0
    %2262 = vmatprep.subr.mxu0 0.0
    %2263 = vmatpush1.msra.mxu0 0.0
    %2264 = vmatprep.subr.mxu0 0.0
    %2265 = vmatpush1.msra.mxu0 0.0
    %2266 = vmatprep.subr.mxu0 0.0
    %2267 = vmatpush1.msra.mxu0 0.0
    %2268 = vmatprep.subr.mxu0 0.0
    %2269 = vmatpush1.msra.mxu0 0.0
    %2270 = vmatprep.subr.mxu0 0.0
    %2271 = vmatpush1.msra.mxu0 0.0
    %2272 = vmatprep.subr.mxu0 0.0
    %2273 = vmatpush1.msra.mxu0 0.0
    %2274 = vmatprep.subr.mxu0 0.0
    %2275 = vmatpush1.msra.mxu0 0.0
    %2276 = vmatprep.subr.mxu0 0.0
    %2277 = vmatpush1.msra.mxu0 0.0
    %2278 = vmatprep.subr.mxu0 0.0
    %2279 = vmatpush1.msra.mxu0 0.0
    %2280 = vmatprep.subr.mxu0 0.0
    %2281 = vmatpush1.msra.mxu0 0.0
    %2282 = vmatprep.subr.mxu0 0.0
    %2283 = vmatpush1.msra.mxu0 0.0
    %2284 = vmatprep.subr.mxu0 0.0
    %2285 = vmatpush1.msra.mxu0 0.0
    %2286 = vmatprep.subr.mxu0 0.0
    %2287 = vmatpush1.msra.mxu0 0.0
    %2288 = vmatprep.subr.mxu0 0.0
    %2289 = vmatpush1.msra.mxu0 0.0
    %2290 = vmatprep.subr.mxu0 0.0
    %2291 = vmatpush1.msra.mxu0 0.0
    %2292 = vmatprep.subr.mxu0 0.0
    %2293 = vmatpush1.msra.mxu0 0.0
    %2294 = vmatprep.subr.mxu0 0.0
    %2295 = vmatpush1.msra.mxu0 0.0
    %2296 = vmatprep.subr.mxu0 0.0
    %2297 = vmatpush1.msra.mxu0 0.0
    %2298 = vmatprep.subr.mxu0 0.0
    %2299 = vmatpush1.msra.mxu0 0.0
    %2300 = vmatprep.subr.mxu0 0.0
    %2301 = vmatpush1.msra.mxu0 0.0
    %2302 = vmatprep.subr.mxu0 0.0
    %2303 = vmatpush1.msra.mxu0 0.0
    %2304 = vmatprep.subr.mxu0 0.0
    %2305 = vmatpush1.msra.mxu0 0.0
    %2306 = vmatprep.subr.mxu0 0.0
    %2307 = vmatpush1.msra.mxu0 0.0
    %2308 = vmatprep.subr.mxu0 0.0
    %2309 = vmatpush1.msra.mxu0 0.0
    %2310 = vmatprep.mubr.f32.mxu0 0.0
    %2311 = vmatmul.mubr.f32.gmra.mrb[0].mxu0 %v2066
    %v2312 = vpop.f32.mrb[0].mxu0
    %v2313 = vadd.f32 %v279, %v2312
    %v2314 = vpop.f32.mrb[0].mxu0
    %2315 = vdwg.mxu0
    %v2316 = vadd.f32 %v2243, %v2313
    %v2317 = vxor.u32 %v2316, 2147483648
    %v2318 = vmul.f32 %v2317, 1.442695
    %v2319 = vpow.pop %v2318
    %v2320 = vadd.f32 %v2319, 1.0
    %v2321 = vrcp.pop %v2320
    %v2322 = vmul.f32 1.0, %v2321
    %2324 = vrot.lane.b32.xlu0 %v2313, 64
    %v2325 = vpop.permute.xlu0 %2324
    %v2327 = vmul.f32 %v2322, %v2325
    %2329 = vrot.lane.b32.xlu0 %v2327, 64
    %v2330 = vpop.permute.xlu0 %2329
    %v2332 = vadd.f32 %v2243, %v2330
    %v2333 = vtanh.pop %v2332
    %v2334 = vsub.f32 1.0, %v2322
    %2336 = vrot.lane.b32.xlu0 %v2333, 96
    %v2337 = vpop.permute.xlu0 %2336
    %v2339 = vmul.f32 %v2334, %v2337
    %v2340 = vmul.f32 %v2322, %v2062
    %v2341 = vadd.f32 %v2339, %v2340
    %2343 = vrot.lane.b32.xlu0 %v2341, 96
    %v2344 = vpop.permute.xlu0 %2343
    %v2345 = vsel %vm201, %v2344, 0
    %2347 = vmatprep.subr.mxu0 0.0
    %2348 = vmatpush1.msra.mxu0 %v82
    %2349 = vmatprep.subr.mxu0 0.0
    %2350 = vmatpush1.msra.mxu0 %v83
    %2351 = vmatprep.subr.mxu0 0.0
    %2352 = vmatpush1.msra.mxu0 %v84
    %2353 = vmatprep.subr.mxu0 0.0
    %2354 = vmatpush1.msra.mxu0 %v85
    %2355 = vmatprep.subr.mxu0 0.0
    %2356 = vmatpush1.msra.mxu0 0.0
    %2357 = vmatprep.subr.mxu0 0.0
    %2358 = vmatpush1.msra.mxu0 0.0
    %2359 = vmatprep.subr.mxu0 0.0
    %2360 = vmatpush1.msra.mxu0 0.0
    %2361 = vmatprep.subr.mxu0 0.0
    %2362 = vmatpush1.msra.mxu0 0.0
    %2363 = vmatprep.subr.mxu0 0.0
    %2364 = vmatpush1.msra.mxu0 0.0
    %2365 = vmatprep.subr.mxu0 0.0
    %2366 = vmatpush1.msra.mxu0 0.0
    %2367 = vmatprep.subr.mxu0 0.0
    %2368 = vmatpush1.msra.mxu0 0.0
    %2369 = vmatprep.subr.mxu0 0.0
    %2370 = vmatpush1.msra.mxu0 0.0
    %2371 = vmatprep.subr.mxu0 0.0
    %2372 = vmatpush1.msra.mxu0 0.0
    %2373 = vmatprep.subr.mxu0 0.0
    %2374 = vmatpush1.msra.mxu0 0.0
    %2375 = vmatprep.subr.mxu0 0.0
    %2376 = vmatpush1.msra.mxu0 0.0
    %2377 = vmatprep.subr.mxu0 0.0
    %2378 = vmatpush1.msra.mxu0 0.0
    %2379 = vmatprep.subr.mxu0 0.0
    %2380 = vmatpush1.msra.mxu0 0.0
    %2381 = vmatprep.subr.mxu0 0.0
    %2382 = vmatpush1.msra.mxu0 0.0
    %2383 = vmatprep.subr.mxu0 0.0
    %2384 = vmatpush1.msra.mxu0 0.0
    %2385 = vmatprep.subr.mxu0 0.0
    %2386 = vmatpush1.msra.mxu0 0.0
    %2387 = vmatprep.subr.mxu0 0.0
    %2388 = vmatpush1.msra.mxu0 0.0
    %2389 = vmatprep.subr.mxu0 0.0
    %2390 = vmatpush1.msra.mxu0 0.0
    %2391 = vmatprep.subr.mxu0 0.0
    %2392 = vmatpush1.msra.mxu0 0.0
    %2393 = vmatprep.subr.mxu0 0.0
    %2394 = vmatpush1.msra.mxu0 0.0
    %2395 = vmatprep.subr.mxu0 0.0
    %2396 = vmatpush1.msra.mxu0 0.0
    %2397 = vmatprep.subr.mxu0 0.0
    %2398 = vmatpush1.msra.mxu0 0.0
    %2399 = vmatprep.subr.mxu0 0.0
    %2400 = vmatpush1.msra.mxu0 0.0
    %2401 = vmatprep.subr.mxu0 0.0
    %2402 = vmatpush1.msra.mxu0 0.0
    %2403 = vmatprep.subr.mxu0 0.0
    %2404 = vmatpush1.msra.mxu0 0.0
    %2405 = vmatprep.subr.mxu0 0.0
    %2406 = vmatpush1.msra.mxu0 0.0
    %2407 = vmatprep.subr.mxu0 0.0
    %2408 = vmatpush1.msra.mxu0 0.0
    %2409 = vmatprep.subr.mxu0 0.0
    %2410 = vmatpush1.msra.mxu0 0.0
    %2411 = vmatprep.mubr.f32.mxu0 0.0
    %2412 = vmatmul.mubr.f32.gmra.mrb[0].mxu0 %v2345
    %v2413 = vpop.f32.mrb[0].mxu0
    %v2414 = vadd.f32 %v387, %v2413
    %v2415 = vpop.f32.mrb[0].mxu0
    %2416 = vdwg.mxu0
    %v2417 = vsel %vm464, %v2414, -inf
    %2418 = vmax.xlane.f32.xlu0 %v2417
    %v2419 = vpop.xlane.xlu0 %2418
    %v2420 = vsub.f32 %v2414, %v2419
    %v2421 = vmul.f32 %v2420, 1.442695
    %v2422 = vpow.pop %v2421
    %v2423 = vsel %vm464, %v2422, 0.0
    %2424 = vadd.xlane.f32.xlu0 %v2423
    %v2425 = vpop.xlane.xlu0 %2424
    %v2426 = vlog2.pop %v2425
    %v2427 = vmul.f32 %v2426, 0.6931472
    %v2428 = vadd.f32 %v2419, %v2427
    %v2429 = vsub.f32 %v2414, %v2428
    %s2430 = scalar_lea.vmem [#allocation8], 14
    %2431 = vst.msk [vmem:[%s2430] sm:$0x3] %vm464, %v2429
    %2433 = vst.msk [vmem:[#allocation9] sm:$0x3] %vm464, %v2344
    // Predicated region
    $region46: #{tpu_custom_call.1} parent=1 // pred_check
      _
    $region47: #{tpu_custom_call.1} parent=1 // pred_check_branch
      %2435 = sbr.rel (0) target = $region49
    $region48: #{tpu_custom_call.1} parent=1 // pred_region
      %s2437 = ssub.s32 256, 256
      %2438 = vsyncadd [#allocation4], %s2437
      %s2439 = sshll.u32 [#allocation8], 4
      %s2440 = int_to_ptr.vmem [resolvable:$true] %s2439
      %2445 = dma.vmem_to_hbm [thread:$0]  %s2440, 256, %s8, [#allocation4], 32, 32, 2
    $region49: #{tpu_custom_call.1} parent=1 // pred_fallthru
      _
    // Predicated region
    $region50: #{tpu_custom_call.1} parent=1 // pred_check
      _
    $region51: #{tpu_custom_call.1} parent=1 // pred_check_branch
      %2447 = sbr.rel (0) target = $region53
    $region52: #{tpu_custom_call.1} parent=1 // pred_region
      %s2449 = ssub.s32 32, 32
      %2450 = vsyncadd [#allocation10], %s2449
      %s2452 = sshll.u32 [#allocation9], 4
      %s2453 = int_to_ptr.vmem [resolvable:$true] %s2452
      %2455 = dma.vmem_to_hbm [thread:$0]  %s2453, 32, %s9, [#allocation10]
    $region53: #{tpu_custom_call.1} parent=1 // pred_fallthru
      _
    // Predicated region
    $region54: #{tpu_custom_call.1} parent=1 // pred_check
      _
    $region55: #{tpu_custom_call.1} parent=1 // pred_check_branch
      %2457 = sbr.rel (0) target = $region57
    $region56: #{tpu_custom_call.1} parent=1 // pred_region
      %2458 = dma.done [#allocation4], 256
    $region57: #{tpu_custom_call.1} parent=1 // pred_fallthru
      _
    // Predicated region
    $region58: #{tpu_custom_call.1} parent=1 // pred_check
      _
    $region59: #{tpu_custom_call.1} parent=1 // pred_check_branch
      %2460 = sbr.rel (0) target = $region61
    $region60: #{tpu_custom_call.1} parent=1 // pred_region
      %2461 = dma.done [#allocation10], 32
    $region61: #{tpu_custom_call.1} parent=1 // pred_fallthru
      _
    %2462 = vsyncpa [#allocation3], 1
    %2463 = vsyncpa [#allocation6], 1
    %2464 = vsyncpa [#allocation4], 1
    %2465 = vsyncpa [#allocation10], 1

</llo_original>
